<compile_context>
chip_gen: v7x
topology: tpu7x:2x2x1
jax: 0.10.0
libtpu: 0.0.40
codegen_flags: <defaults>
</compile_context>

<pallas_src>
import functools

import jax
import jax.numpy as jnp
from jax.experimental import pallas as pl
from jax.experimental.pallas import tpu as pltpu

EPS = 1e-5
LANE = 128
# Safe on every generation (v7x has 64 MiB VMEM per TensorCore); could be
# raised toward 96 MiB on v5e/v6e if much bigger row tiles are used.
VMEM_LIMIT = 48 * 1024 * 1024


# ------------------------------ small helpers -------------------------------

def _ceil_to(x, m):
    return (x + m - 1) // m * m


def _pick_th(ho, wo, target_rows=512):
    """Largest divisor of `ho` whose row tile (th*wo rows of the GEMM) stays
    near target_rows.  Because th divides ho exactly there is no M padding."""
    th = max(1, min(ho, target_rows // max(wo, 1)))
    while ho % th:
        th -= 1
    return th


def _cparams(*sem):
    return pltpu.CompilerParams(dimension_semantics=sem,
                                vmem_limit_bytes=VMEM_LIMIT)


# ----------------------------- Pallas kernels --------------------------------

def _conv1_stats_kernel(x_ref, w_ref, y_ref, st_ref, *, s, th, wo):
    """3x3 conv (stride s) as 9 shifted matmuls over a phase-split,
    VMEM-resident padded image, fused with BN1 batch statistics.

    x_ref : (1, s*s, Hq, Wq, Cin)  bf16  whole image (resident across row tiles)
    w_ref : (3, 3, Cin, Cout)      bf16  full weight (resident across the grid)
    y_ref : (1, th, wo, Cout)      bf16  output row tile
    st_ref: (1, 1, 2, Cout)        f32   [sum; sum_sq] for this row tile
    """
    i = pl.program_id(1)
    cin = x_ref.shape[-1]
    cout = w_ref.shape[-1]
    row0 = i * th

    acc = jnp.zeros((th * wo, cout), jnp.float32)
    for dy in range(3):
        for dx in range(3):
            ph = (dy % s) * s + (dx % s)          # stride-phase plane (static)
            patch = x_ref[0, ph,
                          pl.ds(row0 + dy // s, th),
                          pl.ds(dx // s, wo), :]
            acc += jnp.dot(patch.reshape(th * wo, cin), w_ref[dy, dx],
                           preferred_element_type=jnp.float32)

    y_ref[0] = acc.reshape(th, wo, cout).astype(y_ref.dtype)
    # BN stats from the f32 accumulator; two direct row stores (no concat).
    st_ref[0, 0, pl.ds(0, 1), :] = jnp.sum(acc, axis=0, keepdims=True)
    st_ref[0, 0, pl.ds(1, 1), :] = jnp.sum(acc * acc, axis=0, keepdims=True)


def _conv2_bn1_kernel(y1_ref, sc_ref, sh_ref, w_ref, y2_ref, st_ref, h_ref,
                      *, th, ho, wo):
    """relu(bn1(.)) fused into conv2's prologue + 3x3 stride-1 conv + BN2 stats.

    y1_ref: (1, ho, wo, C)   bf16  raw conv1 output (resident per image)
    h_ref : (ho+2, wo+2, C)  bf16  scratch = zero-padded relu(bn1(y1)),
                                   built once per image (row tile 0), reused.
    """
    i = pl.program_id(1)
    c = w_ref.shape[-1]

    @pl.when(i == 0)
    def _():
        h_ref[...] = jnp.zeros_like(h_ref)
        a = y1_ref[0].astype(jnp.float32) * sc_ref[...] + sh_ref[...]
        h_ref[pl.ds(1, ho), pl.ds(1, wo), :] = (
            jnp.maximum(a, 0.0).astype(h_ref.dtype))

    row0 = i * th
    acc = jnp.zeros((th * wo, c), jnp.float32)
    for dy in range(3):
        for dx in range(3):
            patch = h_ref[pl.ds(row0 + dy, th), pl.ds(dx, wo), :]
            acc += jnp.dot(patch.reshape(th * wo, c), w_ref[dy, dx],
                           preferred_element_type=jnp.float32)

    y2_ref[0] = acc.reshape(th, wo, c).astype(y2_ref.dtype)
    st_ref[0, 0, pl.ds(0, 1), :] = jnp.sum(acc, axis=0, keepdims=True)
    st_ref[0, 0, pl.ds(1, 1), :] = jnp.sum(acc * acc, axis=0, keepdims=True)


def _epilogue_1x1_kernel(y2_ref, sc_ref, sh_ref, xs_ref, w3_ref, b3_ref, o_ref):
    """out = relu(bn2(y2) + conv3_1x1(x)); the 1x1-conv GEMM runs in-kernel."""
    _, th, wo, cin = xs_ref.shape
    cout = w3_ref.shape[1]
    y = y2_ref[0].astype(jnp.float32) * sc_ref[...] + sh_ref[...]
    res = jnp.dot(xs_ref[0].reshape(th * wo, cin), w3_ref[...],
                  preferred_element_type=jnp.float32) + b3_ref[...]
    o_ref[0] = jnp.maximum(y + res.reshape(th, wo, cout), 0.0).astype(o_ref.dtype)


def _epilogue_add_kernel(y2_ref, sc_ref, sh_ref, r_ref, o_ref):
    """out = relu(bn2(y2) + identity_residual)."""
    y = y2_ref[0].astype(jnp.float32) * sc_ref[...] + sh_ref[...]
    o_ref[0] = jnp.maximum(y + r_ref[0].astype(jnp.float32), 0.0).astype(o_ref.dtype)


# --------------------------- pallas_call wrappers ----------------------------

def conv1_stats(xph, w, *, s, ho, wo, th):
    n, s2, hq, wq, cin = xph.shape
    cout = w.shape[-1]
    nt = ho // th
    kernel = functools.partial(_conv1_stats_kernel, s=s, th=th, wo=wo)
    return pl.pallas_call(
        kernel,
        out_shape=(jax.ShapeDtypeStruct((n, ho, wo, cout), jnp.bfloat16),
                   jax.ShapeDtypeStruct((n, nt, 2, cout), jnp.float32)),
        grid_spec=pltpu.PrefetchScalarGridSpec(
            num_scalar_prefetch=0,
            grid=(n, nt),
            in_specs=[
                # whole phase-split image: resident across row tiles of one n
                pl.BlockSpec((1, s2, hq, wq, cin), lambda b, i: (b, 0, 0, 0, 0)),
                # full conv weight: VMEM-resident across the whole grid
                pl.BlockSpec((3, 3, cin, cout), lambda b, i: (0, 0, 0, 0)),
            ],
            out_specs=(
                pl.BlockSpec((1, th, wo, cout), lambda b, i: (b, i, 0, 0)),
                pl.BlockSpec((1, 1, 2, cout), lambda b, i: (b, i, 0, 0)),
            )),
        compiler_params=_cparams("parallel", "parallel"),
    )(xph, w)


def conv2_bn1_stats(y1, sc1, sh1, w2, *, ho, wo, th):
    n = y1.shape[0]
    c = y1.shape[-1]
    nt = ho // th
    kernel = functools.partial(_conv2_bn1_kernel, th=th, ho=ho, wo=wo)
    return pl.pallas_call(
        kernel,
        out_shape=(jax.ShapeDtypeStruct((n, ho, wo, c), jnp.bfloat16),
                   jax.ShapeDtypeStruct((n, nt, 2, c), jnp.float32)),
        grid_spec=pltpu.PrefetchScalarGridSpec(
            num_scalar_prefetch=0,
            grid=(n, nt),
            in_specs=[
                pl.BlockSpec((1, ho, wo, c), lambda b, i: (b, 0, 0, 0)),  # y1
                pl.BlockSpec((1, c), lambda b, i: (0, 0)),                # scale1
                pl.BlockSpec((1, c), lambda b, i: (0, 0)),                # shift1
                pl.BlockSpec((3, 3, c, c), lambda b, i: (0, 0, 0, 0)),    # w2
            ],
            out_specs=(
                pl.BlockSpec((1, th, wo, c), lambda b, i: (b, i, 0, 0)),
                pl.BlockSpec((1, 1, 2, c), lambda b, i: (b, i, 0, 0)),
            ),
            scratch_shapes=[pltpu.VMEM((ho + 2, wo + 2, c), jnp.bfloat16)]),
        # row-tile axis is "arbitrary": the per-image padded-relu(bn1) scratch
        # built at i==0 is reused by later row tiles of the same image.
        compiler_params=_cparams("parallel", "arbitrary"),
    )(y1, sc1, sh1, w2)


def bn2_res1x1_relu(y2, sc2, sh2, xs, w3, b3, *, ho, wo, th):
    n = y2.shape[0]
    c = y2.shape[-1]
    cin = xs.shape[-1]
    nt = ho // th
    return pl.pallas_call(
        _epilogue_1x1_kernel,
        out_shape=jax.ShapeDtypeStruct((n, ho, wo, c), jnp.float32),
        grid_spec=pltpu.PrefetchScalarGridSpec(
            num_scalar_prefetch=0,
            grid=(n, nt),
            in_specs=[
                pl.BlockSpec((1, th, wo, c), lambda b, i: (b, i, 0, 0)),    # y2
                pl.BlockSpec((1, c), lambda b, i: (0, 0)),                  # scale2
                pl.BlockSpec((1, c), lambda b, i: (0, 0)),                  # shift2
                pl.BlockSpec((1, th, wo, cin), lambda b, i: (b, i, 0, 0)),  # x strided
                pl.BlockSpec((cin, c), lambda b, i: (0, 0)),                # w3
                pl.BlockSpec((1, c), lambda b, i: (0, 0)),                  # b3
            ],
            out_specs=pl.BlockSpec((1, th, wo, c), lambda b, i: (b, i, 0, 0))),
        compiler_params=_cparams("parallel", "parallel"),
    )(y2, sc2, sh2, xs, w3, b3)


def bn2_add_relu(y2, sc2, sh2, res, *, ho, wo, th):
    n = y2.shape[0]
    c = y2.shape[-1]
    nt = ho // th
    return pl.pallas_call(
        _epilogue_add_kernel,
        out_shape=jax.ShapeDtypeStruct((n, ho, wo, c), jnp.float32),
        grid_spec=pltpu.PrefetchScalarGridSpec(
            num_scalar_prefetch=0,
            grid=(n, nt),
            in_specs=[
                pl.BlockSpec((1, th, wo, c), lambda b, i: (b, i, 0, 0)),
                pl.BlockSpec((1, c), lambda b, i: (0, 0)),
                pl.BlockSpec((1, c), lambda b, i: (0, 0)),
                pl.BlockSpec((1, th, wo, c), lambda b, i: (b, i, 0, 0)),
            ],
            out_specs=pl.BlockSpec((1, th, wo, c), lambda b, i: (b, i, 0, 0))),
        compiler_params=_cparams("parallel", "parallel"),
    )(y2, sc2, sh2, res)


# ------------------------------ JAX glue --------------------------------------

def _phase_split(x, s, pad, hq, wq, cin_p):
    """Zero-pad (spatial + channel) and split into s*s stride-phase planes so
    every in-kernel slice is unit-stride even for strided convs.  Total data
    stays 1x (no im2col inflation).  Returns (N, s*s, hq, wq, cin_p) bf16."""
    n, h, w, c = x.shape
    extra_h = max(0, s * hq - (h + 2 * pad))
    extra_w = max(0, s * wq - (w + 2 * pad))
    xp = jnp.pad(x, ((0, 0), (pad, pad + extra_h), (pad, pad + extra_w),
                     (0, cin_p - c)))
    planes = []
    for py in range(s):
        for px in range(s):
            planes.append(xp[:, py::s, px::s, :][:, :hq, :wq, :])
    return jnp.stack(planes, axis=1).astype(jnp.bfloat16)


def _prep_w3x3(w, cin_p, cout_p):
    """(Cout, Cin, 3, 3) -> (3, 3, Cin_p, Cout_p) bf16."""
    wt = jnp.transpose(w, (2, 3, 1, 0))
    wt = jnp.pad(wt, ((0, 0), (0, 0),
                      (0, cin_p - wt.shape[2]), (0, cout_p - wt.shape[3])))
    return wt.astype(jnp.bfloat16)


def _bn_scale_shift(stats, count, gamma, beta, cp):
    """Reduce per-tile partial sums -> fused BN affine (scale, shift), (1, cp)."""
    tot = jnp.sum(stats, axis=(0, 1))                       # (2, cp)
    mean = tot[0] / count
    var = jnp.maximum(tot[1] / count - mean * mean, 0.0)    # biased variance
    g = jnp.pad(gamma.astype(jnp.float32), (0, cp - gamma.shape[0]))
    b = jnp.pad(beta.astype(jnp.float32), (0, cp - beta.shape[0]))
    scale = g * jax.lax.rsqrt(var + EPS)
    shift = b - mean * scale
    return scale.reshape(1, cp), shift.reshape(1, cp)


@functools.partial(jax.jit, static_argnames=("use_1x1conv", "strides"))
def residual_forward(x_nchw, params, use_1x1conv=False, strides=1):
    x = jnp.transpose(x_nchw, (0, 2, 3, 1)).astype(jnp.float32)    # NCHW -> NHWC
    n, h, w, cin = x.shape
    cout = params["conv1_w"].shape[0]
    cp = _ceil_to(cout, LANE)
    cin_p = _ceil_to(cin, LANE)
    s = strides
    ho = (h + 2 - 3) // s + 1
    wo = (w + 2 - 3) // s + 1
    th = _pick_th(ho, wo)

    # ---------------- conv1 (3x3, pad 1, stride s) + BN1 stats ----------------
    # conv1/conv2 biases dropped: a per-channel bias added before a
    # batch-statistics BN cancels exactly (validated vs. reference below).
    hq = ho + (3 - 1) // s
    wq = wo + (3 - 1) // s
    xph = _phase_split(x, s, 1, hq, wq, cin_p)       # (n, s*s, hq, wq, cin_p) bf16
    w1 = _prep_w3x3(params["conv1_w"], cin_p, cp)
    y1, st1 = conv1_stats(xph, w1, s=s, ho=ho, wo=wo, th=th)
    sc1, sh1 = _bn_scale_shift(st1, n * ho * wo,
                               params["bn1_g"], params["bn1_b"], cp)

    # ------- conv2 (3x3, pad 1, stride 1) with fused BN1 affine + relu --------
    w2 = _prep_w3x3(params["conv2_w"], cp, cp)
    y2, st2 = conv2_bn1_stats(y1, sc1, sh1, w2, ho=ho, wo=wo, th=th)
    sc2, sh2 = _bn_scale_shift(st2, n * ho * wo,
                               params["bn2_g"], params["bn2_b"], cp)

    # ---------------- BN2 affine + residual branch + relu ---------------------
    if use_1x1conv:
        xs = x[:, ::s, ::s, :]                                      # (n, ho, wo, cin)
        xs = jnp.pad(xs, ((0, 0), (0, 0), (0, 0),
                          (0, cin_p - cin))).astype(jnp.bfloat16)
        w3 = jnp.pad(jnp.transpose(params["conv3_w"][:, :, 0, 0]),  # (cin, cout)
                     ((0, cin_p - cin), (0, cp - cout))).astype(jnp.bfloat16)
        b3 = jnp.pad(params["conv3_b"].astype(jnp.float32),
                     (0, cp - cout)).reshape(1, cp)
        out = bn2_res1x1_relu(y2, sc2, sh2, xs, w3, b3, ho=ho, wo=wo, th=th)
    else:
        assert s == 1 and cin == cout, \
            "identity residual path requires stride==1 and Cin==Cout"
        res = jnp.pad(x, ((0, 0), (0, 0), (0, 0),
                          (0, cp - cin))).astype(jnp.bfloat16)
        out = bn2_add_relu(y2, sc2, sh2, res, ho=ho, wo=wo, th=th)

    out = out[..., :cout]
    return jnp.transpose(out, (0, 3, 1, 2))                         # back to NCHW


# --------------------------- pure-JAX reference -------------------------------

def _conv_ref(x, w, b, stride, pad):
    w_hwio = jnp.transpose(w, (2, 3, 1, 0))
    y = jax.lax.conv_general_dilated(
        x, w_hwio, (stride, stride), ((pad, pad), (pad, pad)),
        dimension_numbers=("NHWC", "HWIO", "NHWC"))
    return y + b


def _bn_ref(y, g, b):
    m = jnp.mean(y, axis=(0, 1, 2))
    v = jnp.mean((y - m) ** 2, axis=(0, 1, 2))
    return (y - m) * jax.lax.rsqrt(v + EPS) * g + b


def residual_ref(x_nchw, params, use_1x1conv, strides):
    x = jnp.transpose(x_nchw, (0, 2, 3, 1))
    y = jax.nn.relu(_bn_ref(_conv_ref(x, params["conv1_w"], params["conv1_b"],
                                      strides, 1),
                            params["bn1_g"], params["bn1_b"]))
    y = _bn_ref(_conv_ref(y, params["conv2_w"], params["conv2_b"], 1, 1),
                params["bn2_g"], params["bn2_b"])
    if use_1x1conv:
        x = _conv_ref(x, params["conv3_w"], params["conv3_b"], strides, 0)
    return jnp.transpose(jax.nn.relu(y + x), (0, 3, 1, 2))


# ---------------------------------- main --------------------------------------

def _make_params(key, cin, cout):
    k = jax.random.split(key, 10)
    return {
        "conv1_w": 0.1 * jax.random.normal(k[0], (cout, cin, 3, 3), jnp.float32),
        "conv1_b": 0.1 * jax.random.normal(k[1], (cout,), jnp.float32),
        "conv2_w": 0.1 * jax.random.normal(k[2], (cout, cout, 3, 3), jnp.float32),
        "conv2_b": 0.1 * jax.random.normal(k[3], (cout,), jnp.float32),
        "conv3_w": 0.1 * jax.random.normal(k[4], (cout, cin, 1, 1), jnp.float32),
        "conv3_b": 0.1 * jax.random.normal(k[5], (cout,), jnp.float32),
        "bn1_g": 1.0 + 0.1 * jax.random.normal(k[6], (cout,), jnp.float32),
        "bn1_b": 0.1 * jax.random.normal(k[7], (cout,), jnp.float32),
        "bn2_g": 1.0 + 0.1 * jax.random.normal(k[8], (cout,), jnp.float32),
        "bn2_b": 0.1 * jax.random.normal(k[9], (cout,), jnp.float32),
    }


if __name__ == "__main__":
    key = jax.random.PRNGKey(0)
    k_a, k_b, k_x1, k_x2 = jax.random.split(key, 4)

    # Tolerance is bf16-level because GEMM operands and inter-pass activations
    # are bf16 (MXU native); accumulation and all BN math are f32.
    TOL = 5e-2

    # --- test 1: downsampling block with 1x1 projection (stride 2) ---
    N, Cin, H, W, Cout, strides = 2, 4, 16, 16, 8, 2
    params = _make_params(k_a, Cin, Cout)
    x = jax.random.normal(k_x1, (N, Cin, H, W), jnp.float32)
    out = jax.block_until_ready(
        residual_forward(x, params, use_1x1conv=True, strides=strides))
    assert out.shape == (N, Cout, H // strides, W // strides)
    ref = residual_ref(x, params, True, strides)
    err = float(jnp.max(jnp.abs(out - ref)))
    assert err < TOL, f"1x1-conv path mismatch vs reference: {err}"

    # --- test 2: identity-residual block (stride 1, Cin == Cout) ---
    N2, C2, H2, W2 = 2, 8, 16, 16
    params2 = _make_params(k_b, C2, C2)
    x2 = jax.random.normal(k_x2, (N2, C2, H2, W2), jnp.float32)
    out2 = jax.block_until_ready(
        residual_forward(x2, params2, use_1x1conv=False, strides=1))
    assert out2.shape == (N2, C2, H2, W2)
    ref2 = residual_ref(x2, params2, False, 1)
    err2 = float(jnp.max(jnp.abs(out2 - ref2)))
    assert err2 < TOL, f"identity path mismatch vs reference: {err2}"

    print("KERNEL_OK")
</pallas_src>

<mosaic_0001>
module attributes {stable_mosaic.version = 11 : i64} {
  func.func @_conv1_stats_kernel(%arg0: i32, %arg1: i32, %arg2: memref<1x4x9x9x128xbf16, #tpu.memory_space<vmem>>, %arg3: memref<3x3x128x128xbf16, #tpu.memory_space<vmem>>, %arg4: memref<1x8x8x128xbf16, #tpu.memory_space<vmem>>, %arg5: memref<1x1x2x128xf32, #tpu.memory_space<vmem>>) attributes {dimension_semantics = [#tpu.dimension_semantics<parallel>, #tpu.dimension_semantics<parallel>], iteration_bounds = array<i64: 2, 1>, scalar_prefetch = 0 : i64, scratch_operands = 0 : i64, tpu.core_type = #tpu.core_type<tc>, window_params = [{transform_indices = @transform_0, window_bounds = array<i64: 1, 4, 9, 9, 128>}, {pipeline_mode = #tpu.pipeline_mode<synchronous>, transform_indices = @transform_1, window_bounds = array<i64: 3, 3, 128, 128>}, {transform_indices = @transform_2, window_bounds = array<i64: 1, 8, 8, 128>}, {transform_indices = @transform_3, window_bounds = array<i64: 1, 1, 2, 128>}]} {
    %c8_i32 = arith.constant 8 : i32
    %0 = arith.muli %arg1, %c8_i32 : i32
    %cst = arith.constant 0.000000e+00 : f32
    %1 = vector.broadcast %cst : f32 to vector<64x128xf32>
    %c0_i32 = arith.constant 0 : i32
    %2 = arith.addi %0, %c0_i32 : i32
    %c0 = arith.constant 0 : index
    %c0_0 = arith.constant 0 : index
    %3 = arith.index_cast %2 : i32 to index
    %c0_1 = arith.constant 0 : index
    %c0_2 = arith.constant 0 : index
    %4 = vector.load %arg2[%c0, %c0_0, %3, %c0_1, %c0_2] : memref<1x4x9x9x128xbf16, #tpu.memory_space<vmem>>, vector<1x1x8x8x128xbf16>
    %5 = vector.shape_cast %4 : vector<1x1x8x8x128xbf16> to vector<8x8x128xbf16>
    %6 = vector.shape_cast %5 : vector<8x8x128xbf16> to vector<64x128xbf16>
    %c0_3 = arith.constant 0 : index
    %c0_4 = arith.constant 0 : index
    %c0_5 = arith.constant 0 : index
    %c0_6 = arith.constant 0 : index
    %7 = vector.load %arg3[%c0_3, %c0_4, %c0_5, %c0_6] : memref<3x3x128x128xbf16, #tpu.memory_space<vmem>>, vector<1x1x128x128xbf16>
    %8 = vector.shape_cast %7 : vector<1x1x128x128xbf16> to vector<128x128xbf16>
    %cst_7 = arith.constant dense<0.000000e+00> : vector<64x128xf32>
    %9 = tpu.matmul %6, %8, %cst_7 {dimension_numbers = #tpu.dot_dimension_numbers<[1], [0], [0], [1], [0, 0, 1, 1], [], []>} : vector<64x128xbf16>, vector<128x128xbf16>, vector<64x128xf32> -> vector<64x128xf32>
    %10 = arith.addf %1, %9 : vector<64x128xf32>
    %c0_i32_8 = arith.constant 0 : i32
    %11 = arith.addi %0, %c0_i32_8 : i32
    %c0_9 = arith.constant 0 : index
    %c1 = arith.constant 1 : index
    %12 = arith.index_cast %11 : i32 to index
    %c0_10 = arith.constant 0 : index
    %c0_11 = arith.constant 0 : index
    %13 = vector.load %arg2[%c0_9, %c1, %12, %c0_10, %c0_11] : memref<1x4x9x9x128xbf16, #tpu.memory_space<vmem>>, vector<1x1x8x8x128xbf16>
    %14 = vector.shape_cast %13 : vector<1x1x8x8x128xbf16> to vector<8x8x128xbf16>
    %15 = vector.shape_cast %14 : vector<8x8x128xbf16> to vector<64x128xbf16>
    %c0_12 = arith.constant 0 : index
    %c1_13 = arith.constant 1 : index
    %c0_14 = arith.constant 0 : index
    %c0_15 = arith.constant 0 : index
    %16 = vector.load %arg3[%c0_12, %c1_13, %c0_14, %c0_15] : memref<3x3x128x128xbf16, #tpu.memory_space<vmem>>, vector<1x1x128x128xbf16>
    %17 = vector.shape_cast %16 : vector<1x1x128x128xbf16> to vector<128x128xbf16>
    %cst_16 = arith.constant dense<0.000000e+00> : vector<64x128xf32>
    %18 = tpu.matmul %15, %17, %cst_16 {dimension_numbers = #tpu.dot_dimension_numbers<[1], [0], [0], [1], [0, 0, 1, 1], [], []>} : vector<64x128xbf16>, vector<128x128xbf16>, vector<64x128xf32> -> vector<64x128xf32>
    %19 = arith.addf %10, %18 : vector<64x128xf32>
    %c0_i32_17 = arith.constant 0 : i32
    %20 = arith.addi %0, %c0_i32_17 : i32
    %c0_18 = arith.constant 0 : index
    %c0_19 = arith.constant 0 : index
    %21 = arith.index_cast %20 : i32 to index
    %c1_20 = arith.constant 1 : index
    %c0_21 = arith.constant 0 : index
    %22 = vector.load %arg2[%c0_18, %c0_19, %21, %c1_20, %c0_21] : memref<1x4x9x9x128xbf16, #tpu.memory_space<vmem>>, vector<1x1x8x8x128xbf16>
    %23 = vector.shape_cast %22 : vector<1x1x8x8x128xbf16> to vector<8x8x128xbf16>
    %24 = vector.shape_cast %23 : vector<8x8x128xbf16> to vector<64x128xbf16>
    %c0_22 = arith.constant 0 : index
    %c2 = arith.constant 2 : index
    %c0_23 = arith.constant 0 : index
    %c0_24 = arith.constant 0 : index
    %25 = vector.load %arg3[%c0_22, %c2, %c0_23, %c0_24] : memref<3x3x128x128xbf16, #tpu.memory_space<vmem>>, vector<1x1x128x128xbf16>
    %26 = vector.shape_cast %25 : vector<1x1x128x128xbf16> to vector<128x128xbf16>
    %cst_25 = arith.constant dense<0.000000e+00> : vector<64x128xf32>
    %27 = tpu.matmul %24, %26, %cst_25 {dimension_numbers = #tpu.dot_dimension_numbers<[1], [0], [0], [1], [0, 0, 1, 1], [], []>} : vector<64x128xbf16>, vector<128x128xbf16>, vector<64x128xf32> -> vector<64x128xf32>
    %28 = arith.addf %19, %27 : vector<64x128xf32>
    %c0_i32_26 = arith.constant 0 : i32
    %29 = arith.addi %0, %c0_i32_26 : i32
    %c0_27 = arith.constant 0 : index
    %c2_28 = arith.constant 2 : index
    %30 = arith.index_cast %29 : i32 to index
    %c0_29 = arith.constant 0 : index
    %c0_30 = arith.constant 0 : index
    %31 = vector.load %arg2[%c0_27, %c2_28, %30, %c0_29, %c0_30] : memref<1x4x9x9x128xbf16, #tpu.memory_space<vmem>>, vector<1x1x8x8x128xbf16>
    %32 = vector.shape_cast %31 : vector<1x1x8x8x128xbf16> to vector<8x8x128xbf16>
    %33 = vector.shape_cast %32 : vector<8x8x128xbf16> to vector<64x128xbf16>
    %c1_31 = arith.constant 1 : index
    %c0_32 = arith.constant 0 : index
    %c0_33 = arith.constant 0 : index
    %c0_34 = arith.constant 0 : index
    %34 = vector.load %arg3[%c1_31, %c0_32, %c0_33, %c0_34] : memref<3x3x128x128xbf16, #tpu.memory_space<vmem>>, vector<1x1x128x128xbf16>
    %35 = vector.shape_cast %34 : vector<1x1x128x128xbf16> to vector<128x128xbf16>
    %cst_35 = arith.constant dense<0.000000e+00> : vector<64x128xf32>
    %36 = tpu.matmul %33, %35, %cst_35 {dimension_numbers = #tpu.dot_dimension_numbers<[1], [0], [0], [1], [0, 0, 1, 1], [], []>} : vector<64x128xbf16>, vector<128x128xbf16>, vector<64x128xf32> -> vector<64x128xf32>
    %37 = arith.addf %28, %36 : vector<64x128xf32>
    %c0_i32_36 = arith.constant 0 : i32
    %38 = arith.addi %0, %c0_i32_36 : i32
    %c0_37 = arith.constant 0 : index
    %c3 = arith.constant 3 : index
    %39 = arith.index_cast %38 : i32 to index
    %c0_38 = arith.constant 0 : index
    %c0_39 = arith.constant 0 : index
    %40 = vector.load %arg2[%c0_37, %c3, %39, %c0_38, %c0_39] : memref<1x4x9x9x128xbf16, #tpu.memory_space<vmem>>, vector<1x1x8x8x128xbf16>
    %41 = vector.shape_cast %40 : vector<1x1x8x8x128xbf16> to vector<8x8x128xbf16>
    %42 = vector.shape_cast %41 : vector<8x8x128xbf16> to vector<64x128xbf16>
    %c1_40 = arith.constant 1 : index
    %c1_41 = arith.constant 1 : index
    %c0_42 = arith.constant 0 : index
    %c0_43 = arith.constant 0 : index
    %43 = vector.load %arg3[%c1_40, %c1_41, %c0_42, %c0_43] : memref<3x3x128x128xbf16, #tpu.memory_space<vmem>>, vector<1x1x128x128xbf16>
    %44 = vector.shape_cast %43 : vector<1x1x128x128xbf16> to vector<128x128xbf16>
    %cst_44 = arith.constant dense<0.000000e+00> : vector<64x128xf32>
    %45 = tpu.matmul %42, %44, %cst_44 {dimension_numbers = #tpu.dot_dimension_numbers<[1], [0], [0], [1], [0, 0, 1, 1], [], []>} : vector<64x128xbf16>, vector<128x128xbf16>, vector<64x128xf32> -> vector<64x128xf32>
    %46 = arith.addf %37, %45 : vector<64x128xf32>
    %c0_i32_45 = arith.constant 0 : i32
    %47 = arith.addi %0, %c0_i32_45 : i32
    %c0_46 = arith.constant 0 : index
    %c2_47 = arith.constant 2 : index
    %48 = arith.index_cast %47 : i32 to index
    %c1_48 = arith.constant 1 : index
    %c0_49 = arith.constant 0 : index
    %49 = vector.load %arg2[%c0_46, %c2_47, %48, %c1_48, %c0_49] : memref<1x4x9x9x128xbf16, #tpu.memory_space<vmem>>, vector<1x1x8x8x128xbf16>
    %50 = vector.shape_cast %49 : vector<1x1x8x8x128xbf16> to vector<8x8x128xbf16>
    %51 = vector.shape_cast %50 : vector<8x8x128xbf16> to vector<64x128xbf16>
    %c1_50 = arith.constant 1 : index
    %c2_51 = arith.constant 2 : index
    %c0_52 = arith.constant 0 : index
    %c0_53 = arith.constant 0 : index
    %52 = vector.load %arg3[%c1_50, %c2_51, %c0_52, %c0_53] : memref<3x3x128x128xbf16, #tpu.memory_space<vmem>>, vector<1x1x128x128xbf16>
    %53 = vector.shape_cast %52 : vector<1x1x128x128xbf16> to vector<128x128xbf16>
    %cst_54 = arith.constant dense<0.000000e+00> : vector<64x128xf32>
    %54 = tpu.matmul %51, %53, %cst_54 {dimension_numbers = #tpu.dot_dimension_numbers<[1], [0], [0], [1], [0, 0, 1, 1], [], []>} : vector<64x128xbf16>, vector<128x128xbf16>, vector<64x128xf32> -> vector<64x128xf32>
    %55 = arith.addf %46, %54 : vector<64x128xf32>
    %c1_i32 = arith.constant 1 : i32
    %56 = arith.addi %0, %c1_i32 : i32
    %c0_55 = arith.constant 0 : index
    %c0_56 = arith.constant 0 : index
    %57 = arith.index_cast %56 : i32 to index
    %c0_57 = arith.constant 0 : index
    %c0_58 = arith.constant 0 : index
    %58 = vector.load %arg2[%c0_55, %c0_56, %57, %c0_57, %c0_58] : memref<1x4x9x9x128xbf16, #tpu.memory_space<vmem>>, vector<1x1x8x8x128xbf16>
    %59 = vector.shape_cast %58 : vector<1x1x8x8x128xbf16> to vector<8x8x128xbf16>
    %60 = vector.shape_cast %59 : vector<8x8x128xbf16> to vector<64x128xbf16>
    %c2_59 = arith.constant 2 : index
    %c0_60 = arith.constant 0 : index
    %c0_61 = arith.constant 0 : index
    %c0_62 = arith.constant 0 : index
    %61 = vector.load %arg3[%c2_59, %c0_60, %c0_61, %c0_62] : memref<3x3x128x128xbf16, #tpu.memory_space<vmem>>, vector<1x1x128x128xbf16>
    %62 = vector.shape_cast %61 : vector<1x1x128x128xbf16> to vector<128x128xbf16>
    %cst_63 = arith.constant dense<0.000000e+00> : vector<64x128xf32>
    %63 = tpu.matmul %60, %62, %cst_63 {dimension_numbers = #tpu.dot_dimension_numbers<[1], [0], [0], [1], [0, 0, 1, 1], [], []>} : vector<64x128xbf16>, vector<128x128xbf16>, vector<64x128xf32> -> vector<64x128xf32>
    %64 = arith.addf %55, %63 : vector<64x128xf32>
    %c1_i32_64 = arith.constant 1 : i32
    %65 = arith.addi %0, %c1_i32_64 : i32
    %c0_65 = arith.constant 0 : index
    %c1_66 = arith.constant 1 : index
    %66 = arith.index_cast %65 : i32 to index
    %c0_67 = arith.constant 0 : index
    %c0_68 = arith.constant 0 : index
    %67 = vector.load %arg2[%c0_65, %c1_66, %66, %c0_67, %c0_68] : memref<1x4x9x9x128xbf16, #tpu.memory_space<vmem>>, vector<1x1x8x8x128xbf16>
    %68 = vector.shape_cast %67 : vector<1x1x8x8x128xbf16> to vector<8x8x128xbf16>
    %69 = vector.shape_cast %68 : vector<8x8x128xbf16> to vector<64x128xbf16>
    %c2_69 = arith.constant 2 : index
    %c1_70 = arith.constant 1 : index
    %c0_71 = arith.constant 0 : index
    %c0_72 = arith.constant 0 : index
    %70 = vector.load %arg3[%c2_69, %c1_70, %c0_71, %c0_72] : memref<3x3x128x128xbf16, #tpu.memory_space<vmem>>, vector<1x1x128x128xbf16>
    %71 = vector.shape_cast %70 : vector<1x1x128x128xbf16> to vector<128x128xbf16>
    %cst_73 = arith.constant dense<0.000000e+00> : vector<64x128xf32>
    %72 = tpu.matmul %69, %71, %cst_73 {dimension_numbers = #tpu.dot_dimension_numbers<[1], [0], [0], [1], [0, 0, 1, 1], [], []>} : vector<64x128xbf16>, vector<128x128xbf16>, vector<64x128xf32> -> vector<64x128xf32>
    %73 = arith.addf %64, %72 : vector<64x128xf32>
    %c1_i32_74 = arith.constant 1 : i32
    %74 = arith.addi %0, %c1_i32_74 : i32
    %c0_75 = arith.constant 0 : index
    %c0_76 = arith.constant 0 : index
    %75 = arith.index_cast %74 : i32 to index
    %c1_77 = arith.constant 1 : index
    %c0_78 = arith.constant 0 : index
    %76 = vector.load %arg2[%c0_75, %c0_76, %75, %c1_77, %c0_78] : memref<1x4x9x9x128xbf16, #tpu.memory_space<vmem>>, vector<1x1x8x8x128xbf16>
    %77 = vector.shape_cast %76 : vector<1x1x8x8x128xbf16> to vector<8x8x128xbf16>
    %78 = vector.shape_cast %77 : vector<8x8x128xbf16> to vector<64x128xbf16>
    %c2_79 = arith.constant 2 : index
    %c2_80 = arith.constant 2 : index
    %c0_81 = arith.constant 0 : index
    %c0_82 = arith.constant 0 : index
    %79 = vector.load %arg3[%c2_79, %c2_80, %c0_81, %c0_82] : memref<3x3x128x128xbf16, #tpu.memory_space<vmem>>, vector<1x1x128x128xbf16>
    %80 = vector.shape_cast %79 : vector<1x1x128x128xbf16> to vector<128x128xbf16>
    %cst_83 = arith.constant dense<0.000000e+00> : vector<64x128xf32>
    %81 = tpu.matmul %78, %80, %cst_83 {dimension_numbers = #tpu.dot_dimension_numbers<[1], [0], [0], [1], [0, 0, 1, 1], [], []>} : vector<64x128xbf16>, vector<128x128xbf16>, vector<64x128xf32> -> vector<64x128xf32>
    %82 = arith.addf %73, %81 : vector<64x128xf32>
    %83 = vector.shape_cast %82 : vector<64x128xf32> to vector<8x8x128xf32>
    %84 = arith.truncf %83 : vector<8x8x128xf32> to vector<8x8x128xbf16>
    %c0_84 = arith.constant 0 : index
    %c0_85 = arith.constant 0 : index
    %c0_86 = arith.constant 0 : index
    %c0_87 = arith.constant 0 : index
    %85 = vector.load %arg4[%c0_84, %c0_85, %c0_86, %c0_87] : memref<1x8x8x128xbf16, #tpu.memory_space<vmem>>, vector<1x8x8x128xbf16>
    %86 = vector.shape_cast %85 : vector<1x8x8x128xbf16> to vector<8x8x128xbf16>
    %87 = vector.shape_cast %84 : vector<8x8x128xbf16> to vector<1x8x8x128xbf16>
    tpu.vector_store %arg4[%c0_84, %c0_85, %c0_86, %c0_87], %87 {strides = array<i32>} : memref<1x8x8x128xbf16, #tpu.memory_space<vmem>>, vector<1x8x8x128xbf16>,
    %cst_88 = arith.constant dense<0.000000e+00> : vector<128xf32>
    %88 = vector.multi_reduction <add>, %82, %cst_88 [0] : vector<64x128xf32> to vector<128xf32>
    %89 = vector.shape_cast %88 : vector<128xf32> to vector<1x128xf32>
    %c0_89 = arith.constant 0 : index
    %c0_90 = arith.constant 0 : index
    %c0_91 = arith.constant 0 : index
    %c0_92 = arith.constant 0 : index
    %90 = vector.load %arg5[%c0_89, %c0_90, %c0_91, %c0_92] : memref<1x1x2x128xf32, #tpu.memory_space<vmem>>, vector<1x1x1x128xf32>
    %91 = vector.shape_cast %90 : vector<1x1x1x128xf32> to vector<1x128xf32>
    %92 = vector.shape_cast %89 : vector<1x128xf32> to vector<1x1x1x128xf32>
    tpu.vector_store %arg5[%c0_89, %c0_90, %c0_91, %c0_92], %92 {strides = array<i32>} : memref<1x1x2x128xf32, #tpu.memory_space<vmem>>, vector<1x1x1x128xf32>,
    %93 = arith.mulf %82, %82 : vector<64x128xf32>
    %cst_93 = arith.constant dense<0.000000e+00> : vector<128xf32>
    %94 = vector.multi_reduction <add>, %93, %cst_93 [0] : vector<64x128xf32> to vector<128xf32>
    %95 = vector.shape_cast %94 : vector<128xf32> to vector<1x128xf32>
    %c0_94 = arith.constant 0 : index
    %c0_95 = arith.constant 0 : index
    %c1_96 = arith.constant 1 : index
    %c0_97 = arith.constant 0 : index
    %96 = vector.load %arg5[%c0_94, %c0_95, %c1_96, %c0_97] : memref<1x1x2x128xf32, #tpu.memory_space<vmem>>, vector<1x1x1x128xf32>
    %97 = vector.shape_cast %96 : vector<1x1x1x128xf32> to vector<1x128xf32>
    %98 = vector.shape_cast %95 : vector<1x128xf32> to vector<1x1x1x128xf32>
    tpu.vector_store %arg5[%c0_94, %c0_95, %c1_96, %c0_97], %98 {strides = array<i32>} : memref<1x1x2x128xf32, #tpu.memory_space<vmem>>, vector<1x1x1x128xf32>,
    return
  }
  func.func @transform_0(%arg0: i32, %arg1: i32) -> (i32, i32, i32, i32, i32) {
    %c0_i32 = arith.constant 0 : i32
    %c0_i32_0 = arith.constant 0 : i32
    %c0_i32_1 = arith.constant 0 : i32
    %c0_i32_2 = arith.constant 0 : i32
    %c0_i32_3 = arith.constant 0 : i32
    return %arg0, %c0_i32, %c0_i32_0, %c0_i32_1, %c0_i32_2 : i32, i32, i32, i32, i32
  }
  func.func @transform_1(%arg0: i32, %arg1: i32) -> (i32, i32, i32, i32) {
    %c0_i32 = arith.constant 0 : i32
    %c0_i32_0 = arith.constant 0 : i32
    %c0_i32_1 = arith.constant 0 : i32
    %c0_i32_2 = arith.constant 0 : i32
    %c0_i32_3 = arith.constant 0 : i32
    return %c0_i32, %c0_i32_0, %c0_i32_1, %c0_i32_2 : i32, i32, i32, i32
  }
  func.func @transform_2(%arg0: i32, %arg1: i32) -> (i32, i32, i32, i32) {
    %c0_i32 = arith.constant 0 : i32
    %c0_i32_0 = arith.constant 0 : i32
    %c0_i32_1 = arith.constant 0 : i32
    return %arg0, %arg1, %c0_i32, %c0_i32_0 : i32, i32, i32, i32
  }
  func.func @transform_3(%arg0: i32, %arg1: i32) -> (i32, i32, i32, i32) {
    %c0_i32 = arith.constant 0 : i32
    %c0_i32_0 = arith.constant 0 : i32
    %c0_i32_1 = arith.constant 0 : i32
    return %arg0, %arg1, %c0_i32, %c0_i32_0 : i32, i32, i32, i32
  }
}

module attributes {stable_mosaic.version = 11 : i64} {
  func.func @_conv2_bn1_kernel(%arg0: i32, %arg1: i32, %arg2: memref<1x8x8x128xbf16, #tpu.memory_space<vmem>>, %arg3: memref<1x128xf32, #tpu.memory_space<vmem>>, %arg4: memref<1x128xf32, #tpu.memory_space<vmem>>, %arg5: memref<3x3x128x128xbf16, #tpu.memory_space<vmem>>, %arg6: memref<1x8x8x128xbf16, #tpu.memory_space<vmem>>, %arg7: memref<1x1x2x128xf32, #tpu.memory_space<vmem>>, %arg8: memref<10x10x128xbf16, #tpu.memory_space<vmem>>) attributes {dimension_semantics = [#tpu.dimension_semantics<parallel>, #tpu.dimension_semantics<arbitrary>], iteration_bounds = array<i64: 2, 1>, scalar_prefetch = 0 : i64, scratch_operands = 1 : i64, tpu.core_type = #tpu.core_type<tc>, window_params = [{transform_indices = @transform_0, window_bounds = array<i64: 1, 8, 8, 128>}, {pipeline_mode = #tpu.pipeline_mode<synchronous>, transform_indices = @transform_1, window_bounds = array<i64: 1, 128>}, {pipeline_mode = #tpu.pipeline_mode<synchronous>, transform_indices = @transform_2, window_bounds = array<i64: 1, 128>}, {pipeline_mode = #tpu.pipeline_mode<synchronous>, transform_indices = @transform_3, window_bounds = array<i64: 3, 3, 128, 128>}, {transform_indices = @transform_4, window_bounds = array<i64: 1, 8, 8, 128>}, {transform_indices = @transform_5, window_bounds = array<i64: 1, 1, 2, 128>}]} {
    %c0_i32 = arith.constant 0 : i32
    %0 = arith.cmpi eq, %arg1, %c0_i32 : i32
    %1 = arith.extui %0 : i1 to i32
    %c0_i32_0 = arith.constant 0 : i32
    %2 = arith.cmpi ne, %1, %c0_i32_0 : i32
    scf.if %2 {
      %cst_82 = arith.constant 0.000000e+00 : bf16
      %93 = vector.broadcast %cst_82 : bf16 to vector<10x10x128xbf16>
      %c0_83 = arith.constant 0 : index
      %c0_84 = arith.constant 0 : index
      %c0_85 = arith.constant 0 : index
      %94 = vector.load %arg8[%c0_83, %c0_84, %c0_85] : memref<10x10x128xbf16, #tpu.memory_space<vmem>>, vector<10x10x128xbf16>
      tpu.vector_store %arg8[%c0_83, %c0_84, %c0_85], %93 {strides = array<i32>} : memref<10x10x128xbf16, #tpu.memory_space<vmem>>, vector<10x10x128xbf16>,
      %c0_86 = arith.constant 0 : index
      %c0_87 = arith.constant 0 : index
      %c0_88 = arith.constant 0 : index
      %c0_89 = arith.constant 0 : index
      %95 = vector.load %arg2[%c0_86, %c0_87, %c0_88, %c0_89] : memref<1x8x8x128xbf16, #tpu.memory_space<vmem>>, vector<1x8x8x128xbf16>
      %96 = vector.shape_cast %95 : vector<1x8x8x128xbf16> to vector<8x8x128xbf16>
      %97 = arith.extf %96 : vector<8x8x128xbf16> to vector<8x8x128xf32>
      %c0_90 = arith.constant 0 : index
      %c0_91 = arith.constant 0 : index
      %98 = vector.load %arg3[%c0_90, %c0_91] : memref<1x128xf32, #tpu.memory_space<vmem>>, vector<1x128xf32>
      %99 = vector.shape_cast %98 : vector<1x128xf32> to vector<1x1x128xf32>
      %100 = vector.broadcast %99 : vector<1x1x128xf32> to vector<8x8x128xf32>
      %101 = arith.mulf %97, %100 : vector<8x8x128xf32>
      %c0_92 = arith.constant 0 : index
      %c0_93 = arith.constant 0 : index
      %102 = vector.load %arg4[%c0_92, %c0_93] : memref<1x128xf32, #tpu.memory_space<vmem>>, vector<1x128xf32>
      %103 = vector.shape_cast %102 : vector<1x128xf32> to vector<1x1x128xf32>
      %104 = vector.broadcast %103 : vector<1x1x128xf32> to vector<8x8x128xf32>
      %105 = arith.addf %101, %104 : vector<8x8x128xf32>
      %cst_94 = arith.constant 0.000000e+00 : f32
      %106 = vector.broadcast %cst_94 : f32 to vector<8x8x128xf32>
      %107 = arith.maximumf %105, %106 : vector<8x8x128xf32>
      %108 = arith.truncf %107 : vector<8x8x128xf32> to vector<8x8x128xbf16>
      %c1_95 = arith.constant 1 : index
      %c1_96 = arith.constant 1 : index
      %c0_97 = arith.constant 0 : index
      %109 = vector.load %arg8[%c1_95, %c1_96, %c0_97] : memref<10x10x128xbf16, #tpu.memory_space<vmem>>, vector<8x8x128xbf16>
      tpu.vector_store %arg8[%c1_95, %c1_96, %c0_97], %108 {strides = array<i32>} : memref<10x10x128xbf16, #tpu.memory_space<vmem>>, vector<8x8x128xbf16>,
    } else {
    }
    %c8_i32 = arith.constant 8 : i32
    %3 = arith.muli %arg1, %c8_i32 : i32
    %cst = arith.constant 0.000000e+00 : f32
    %4 = vector.broadcast %cst : f32 to vector<64x128xf32>
    %c0_i32_1 = arith.constant 0 : i32
    %5 = arith.addi %3, %c0_i32_1 : i32
    %6 = arith.index_cast %5 : i32 to index
    %c0 = arith.constant 0 : index
    %c0_2 = arith.constant 0 : index
    %7 = vector.load %arg8[%6, %c0, %c0_2] : memref<10x10x128xbf16, #tpu.memory_space<vmem>>, vector<8x8x128xbf16>
    %8 = vector.shape_cast %7 : vector<8x8x128xbf16> to vector<64x128xbf16>
    %c0_3 = arith.constant 0 : index
    %c0_4 = arith.constant 0 : index
    %c0_5 = arith.constant 0 : index
    %c0_6 = arith.constant 0 : index
    %9 = vector.load %arg5[%c0_3, %c0_4, %c0_5, %c0_6] : memref<3x3x128x128xbf16, #tpu.memory_space<vmem>>, vector<1x1x128x128xbf16>
    %10 = vector.shape_cast %9 : vector<1x1x128x128xbf16> to vector<128x128xbf16>
    %cst_7 = arith.constant dense<0.000000e+00> : vector<64x128xf32>
    %11 = tpu.matmul %8, %10, %cst_7 {dimension_numbers = #tpu.dot_dimension_numbers<[1], [0], [0], [1], [0, 0, 1, 1], [], []>} : vector<64x128xbf16>, vector<128x128xbf16>, vector<64x128xf32> -> vector<64x128xf32>
    %12 = arith.addf %4, %11 : vector<64x128xf32>
    %c0_i32_8 = arith.constant 0 : i32
    %13 = arith.addi %3, %c0_i32_8 : i32
    %14 = arith.index_cast %13 : i32 to index
    %c1 = arith.constant 1 : index
    %c0_9 = arith.constant 0 : index
    %15 = vector.load %arg8[%14, %c1, %c0_9] : memref<10x10x128xbf16, #tpu.memory_space<vmem>>, vector<8x8x128xbf16>
    %16 = vector.shape_cast %15 : vector<8x8x128xbf16> to vector<64x128xbf16>
    %c0_10 = arith.constant 0 : index
    %c1_11 = arith.constant 1 : index
    %c0_12 = arith.constant 0 : index
    %c0_13 = arith.constant 0 : index
    %17 = vector.load %arg5[%c0_10, %c1_11, %c0_12, %c0_13] : memref<3x3x128x128xbf16, #tpu.memory_space<vmem>>, vector<1x1x128x128xbf16>
    %18 = vector.shape_cast %17 : vector<1x1x128x128xbf16> to vector<128x128xbf16>
    %cst_14 = arith.constant dense<0.000000e+00> : vector<64x128xf32>
    %19 = tpu.matmul %16, %18, %cst_14 {dimension_numbers = #tpu.dot_dimension_numbers<[1], [0], [0], [1], [0, 0, 1, 1], [], []>} : vector<64x128xbf16>, vector<128x128xbf16>, vector<64x128xf32> -> vector<64x128xf32>
    %20 = arith.addf %12, %19 : vector<64x128xf32>
    %c0_i32_15 = arith.constant 0 : i32
    %21 = arith.addi %3, %c0_i32_15 : i32
    %22 = arith.index_cast %21 : i32 to index
    %c2 = arith.constant 2 : index
    %c0_16 = arith.constant 0 : index
    %23 = vector.load %arg8[%22, %c2, %c0_16] : memref<10x10x128xbf16, #tpu.memory_space<vmem>>, vector<8x8x128xbf16>
    %24 = vector.shape_cast %23 : vector<8x8x128xbf16> to vector<64x128xbf16>
    %c0_17 = arith.constant 0 : index
    %c2_18 = arith.constant 2 : index
    %c0_19 = arith.constant 0 : index
    %c0_20 = arith.constant 0 : index
    %25 = vector.load %arg5[%c0_17, %c2_18, %c0_19, %c0_20] : memref<3x3x128x128xbf16, #tpu.memory_space<vmem>>, vector<1x1x128x128xbf16>
    %26 = vector.shape_cast %25 : vector<1x1x128x128xbf16> to vector<128x128xbf16>
    %cst_21 = arith.constant dense<0.000000e+00> : vector<64x128xf32>
    %27 = tpu.matmul %24, %26, %cst_21 {dimension_numbers = #tpu.dot_dimension_numbers<[1], [0], [0], [1], [0, 0, 1, 1], [], []>} : vector<64x128xbf16>, vector<128x128xbf16>, vector<64x128xf32> -> vector<64x128xf32>
    %28 = arith.addf %20, %27 : vector<64x128xf32>
    %c1_i32 = arith.constant 1 : i32
    %29 = arith.addi %3, %c1_i32 : i32
    %30 = arith.index_cast %29 : i32 to index
    %c0_22 = arith.constant 0 : index
    %c0_23 = arith.constant 0 : index
    %31 = vector.load %arg8[%30, %c0_22, %c0_23] : memref<10x10x128xbf16, #tpu.memory_space<vmem>>, vector<8x8x128xbf16>
    %32 = vector.shape_cast %31 : vector<8x8x128xbf16> to vector<64x128xbf16>
    %c1_24 = arith.constant 1 : index
    %c0_25 = arith.constant 0 : index
    %c0_26 = arith.constant 0 : index
    %c0_27 = arith.constant 0 : index
    %33 = vector.load %arg5[%c1_24, %c0_25, %c0_26, %c0_27] : memref<3x3x128x128xbf16, #tpu.memory_space<vmem>>, vector<1x1x128x128xbf16>
    %34 = vector.shape_cast %33 : vector<1x1x128x128xbf16> to vector<128x128xbf16>
    %cst_28 = arith.constant dense<0.000000e+00> : vector<64x128xf32>
    %35 = tpu.matmul %32, %34, %cst_28 {dimension_numbers = #tpu.dot_dimension_numbers<[1], [0], [0], [1], [0, 0, 1, 1], [], []>} : vector<64x128xbf16>, vector<128x128xbf16>, vector<64x128xf32> -> vector<64x128xf32>
    %36 = arith.addf %28, %35 : vector<64x128xf32>
    %c1_i32_29 = arith.constant 1 : i32
    %37 = arith.addi %3, %c1_i32_29 : i32
    %38 = arith.index_cast %37 : i32 to index
    %c1_30 = arith.constant 1 : index
    %c0_31 = arith.constant 0 : index
    %39 = vector.load %arg8[%38, %c1_30, %c0_31] : memref<10x10x128xbf16, #tpu.memory_space<vmem>>, vector<8x8x128xbf16>
    %40 = vector.shape_cast %39 : vector<8x8x128xbf16> to vector<64x128xbf16>
    %c1_32 = arith.constant 1 : index
    %c1_33 = arith.constant 1 : index
    %c0_34 = arith.constant 0 : index
    %c0_35 = arith.constant 0 : index
    %41 = vector.load %arg5[%c1_32, %c1_33, %c0_34, %c0_35] : memref<3x3x128x128xbf16, #tpu.memory_space<vmem>>, vector<1x1x128x128xbf16>
    %42 = vector.shape_cast %41 : vector<1x1x128x128xbf16> to vector<128x128xbf16>
    %cst_36 = arith.constant dense<0.000000e+00> : vector<64x128xf32>
    %43 = tpu.matmul %40, %42, %cst_36 {dimension_numbers = #tpu.dot_dimension_numbers<[1], [0], [0], [1], [0, 0, 1, 1], [], []>} : vector<64x128xbf16>, vector<128x128xbf16>, vector<64x128xf32> -> vector<64x128xf32>
    %44 = arith.addf %36, %43 : vector<64x128xf32>
    %c1_i32_37 = arith.constant 1 : i32
    %45 = arith.addi %3, %c1_i32_37 : i32
    %46 = arith.index_cast %45 : i32 to index
    %c2_38 = arith.constant 2 : index
    %c0_39 = arith.constant 0 : index
    %47 = vector.load %arg8[%46, %c2_38, %c0_39] : memref<10x10x128xbf16, #tpu.memory_space<vmem>>, vector<8x8x128xbf16>
    %48 = vector.shape_cast %47 : vector<8x8x128xbf16> to vector<64x128xbf16>
    %c1_40 = arith.constant 1 : index
    %c2_41 = arith.constant 2 : index
    %c0_42 = arith.constant 0 : index
    %c0_43 = arith.constant 0 : index
    %49 = vector.load %arg5[%c1_40, %c2_41, %c0_42, %c0_43] : memref<3x3x128x128xbf16, #tpu.memory_space<vmem>>, vector<1x1x128x128xbf16>
    %50 = vector.shape_cast %49 : vector<1x1x128x128xbf16> to vector<128x128xbf16>
    %cst_44 = arith.constant dense<0.000000e+00> : vector<64x128xf32>
    %51 = tpu.matmul %48, %50, %cst_44 {dimension_numbers = #tpu.dot_dimension_numbers<[1], [0], [0], [1], [0, 0, 1, 1], [], []>} : vector<64x128xbf16>, vector<128x128xbf16>, vector<64x128xf32> -> vector<64x128xf32>
    %52 = arith.addf %44, %51 : vector<64x128xf32>
    %c2_i32 = arith.constant 2 : i32
    %53 = arith.addi %3, %c2_i32 : i32
    %54 = arith.index_cast %53 : i32 to index
    %c0_45 = arith.constant 0 : index
    %c0_46 = arith.constant 0 : index
    %55 = vector.load %arg8[%54, %c0_45, %c0_46] : memref<10x10x128xbf16, #tpu.memory_space<vmem>>, vector<8x8x128xbf16>
    %56 = vector.shape_cast %55 : vector<8x8x128xbf16> to vector<64x128xbf16>
    %c2_47 = arith.constant 2 : index
    %c0_48 = arith.constant 0 : index
    %c0_49 = arith.constant 0 : index
    %c0_50 = arith.constant 0 : index
    %57 = vector.load %arg5[%c2_47, %c0_48, %c0_49, %c0_50] : memref<3x3x128x128xbf16, #tpu.memory_space<vmem>>, vector<1x1x128x128xbf16>
    %58 = vector.shape_cast %57 : vector<1x1x128x128xbf16> to vector<128x128xbf16>
    %cst_51 = arith.constant dense<0.000000e+00> : vector<64x128xf32>
    %59 = tpu.matmul %56, %58, %cst_51 {dimension_numbers = #tpu.dot_dimension_numbers<[1], [0], [0], [1], [0, 0, 1, 1], [], []>} : vector<64x128xbf16>, vector<128x128xbf16>, vector<64x128xf32> -> vector<64x128xf32>
    %60 = arith.addf %52, %59 : vector<64x128xf32>
    %c2_i32_52 = arith.constant 2 : i32
    %61 = arith.addi %3, %c2_i32_52 : i32
    %62 = arith.index_cast %61 : i32 to index
    %c1_53 = arith.constant 1 : index
    %c0_54 = arith.constant 0 : index
    %63 = vector.load %arg8[%62, %c1_53, %c0_54] : memref<10x10x128xbf16, #tpu.memory_space<vmem>>, vector<8x8x128xbf16>
    %64 = vector.shape_cast %63 : vector<8x8x128xbf16> to vector<64x128xbf16>
    %c2_55 = arith.constant 2 : index
    %c1_56 = arith.constant 1 : index
    %c0_57 = arith.constant 0 : index
    %c0_58 = arith.constant 0 : index
    %65 = vector.load %arg5[%c2_55, %c1_56, %c0_57, %c0_58] : memref<3x3x128x128xbf16, #tpu.memory_space<vmem>>, vector<1x1x128x128xbf16>
    %66 = vector.shape_cast %65 : vector<1x1x128x128xbf16> to vector<128x128xbf16>
    %cst_59 = arith.constant dense<0.000000e+00> : vector<64x128xf32>
    %67 = tpu.matmul %64, %66, %cst_59 {dimension_numbers = #tpu.dot_dimension_numbers<[1], [0], [0], [1], [0, 0, 1, 1], [], []>} : vector<64x128xbf16>, vector<128x128xbf16>, vector<64x128xf32> -> vector<64x128xf32>
    %68 = arith.addf %60, %67 : vector<64x128xf32>
    %c2_i32_60 = arith.constant 2 : i32
    %69 = arith.addi %3, %c2_i32_60 : i32
    %70 = arith.index_cast %69 : i32 to index
    %c2_61 = arith.constant 2 : index
    %c0_62 = arith.constant 0 : index
    %71 = vector.load %arg8[%70, %c2_61, %c0_62] : memref<10x10x128xbf16, #tpu.memory_space<vmem>>, vector<8x8x128xbf16>
    %72 = vector.shape_cast %71 : vector<8x8x128xbf16> to vector<64x128xbf16>
    %c2_63 = arith.constant 2 : index
    %c2_64 = arith.constant 2 : index
    %c0_65 = arith.constant 0 : index
    %c0_66 = arith.constant 0 : index
    %73 = vector.load %arg5[%c2_63, %c2_64, %c0_65, %c0_66] : memref<3x3x128x128xbf16, #tpu.memory_space<vmem>>, vector<1x1x128x128xbf16>
    %74 = vector.shape_cast %73 : vector<1x1x128x128xbf16> to vector<128x128xbf16>
    %cst_67 = arith.constant dense<0.000000e+00> : vector<64x128xf32>
    %75 = tpu.matmul %72, %74, %cst_67 {dimension_numbers = #tpu.dot_dimension_numbers<[1], [0], [0], [1], [0, 0, 1, 1], [], []>} : vector<64x128xbf16>, vector<128x128xbf16>, vector<64x128xf32> -> vector<64x128xf32>
    %76 = arith.addf %68, %75 : vector<64x128xf32>
    %77 = vector.shape_cast %76 : vector<64x128xf32> to vector<8x8x128xf32>
    %78 = arith.truncf %77 : vector<8x8x128xf32> to vector<8x8x128xbf16>
    %c0_68 = arith.constant 0 : index
    %c0_69 = arith.constant 0 : index
    %c0_70 = arith.constant 0 : index
    %c0_71 = arith.constant 0 : index
    %79 = vector.load %arg6[%c0_68, %c0_69, %c0_70, %c0_71] : memref<1x8x8x128xbf16, #tpu.memory_space<vmem>>, vector<1x8x8x128xbf16>
    %80 = vector.shape_cast %79 : vector<1x8x8x128xbf16> to vector<8x8x128xbf16>
    %81 = vector.shape_cast %78 : vector<8x8x128xbf16> to vector<1x8x8x128xbf16>
    tpu.vector_store %arg6[%c0_68, %c0_69, %c0_70, %c0_71], %81 {strides = array<i32>} : memref<1x8x8x128xbf16, #tpu.memory_space<vmem>>, vector<1x8x8x128xbf16>,
    %cst_72 = arith.constant dense<0.000000e+00> : vector<128xf32>
    %82 = vector.multi_reduction <add>, %76, %cst_72 [0] : vector<64x128xf32> to vector<128xf32>
    %83 = vector.shape_cast %82 : vector<128xf32> to vector<1x128xf32>
    %c0_73 = arith.constant 0 : index
    %c0_74 = arith.constant 0 : index
    %c0_75 = arith.constant 0 : index
    %c0_76 = arith.constant 0 : index
    %84 = vector.load %arg7[%c0_73, %c0_74, %c0_75, %c0_76] : memref<1x1x2x128xf32, #tpu.memory_space<vmem>>, vector<1x1x1x128xf32>
    %85 = vector.shape_cast %84 : vector<1x1x1x128xf32> to vector<1x128xf32>
    %86 = vector.shape_cast %83 : vector<1x128xf32> to vector<1x1x1x128xf32>
    tpu.vector_store %arg7[%c0_73, %c0_74, %c0_75, %c0_76], %86 {strides = array<i32>} : memref<1x1x2x128xf32, #tpu.memory_space<vmem>>, vector<1x1x1x128xf32>,
    %87 = arith.mulf %76, %76 : vector<64x128xf32>
    %cst_77 = arith.constant dense<0.000000e+00> : vector<128xf32>
    %88 = vector.multi_reduction <add>, %87, %cst_77 [0] : vector<64x128xf32> to vector<128xf32>
    %89 = vector.shape_cast %88 : vector<128xf32> to vector<1x128xf32>
    %c0_78 = arith.constant 0 : index
    %c0_79 = arith.constant 0 : index
    %c1_80 = arith.constant 1 : index
    %c0_81 = arith.constant 0 : index
    %90 = vector.load %arg7[%c0_78, %c0_79, %c1_80, %c0_81] : memref<1x1x2x128xf32, #tpu.memory_space<vmem>>, vector<1x1x1x128xf32>
    %91 = vector.shape_cast %90 : vector<1x1x1x128xf32> to vector<1x128xf32>
    %92 = vector.shape_cast %89 : vector<1x128xf32> to vector<1x1x1x128xf32>
    tpu.vector_store %arg7[%c0_78, %c0_79, %c1_80, %c0_81], %92 {strides = array<i32>} : memref<1x1x2x128xf32, #tpu.memory_space<vmem>>, vector<1x1x1x128xf32>,
    return
  }
  func.func @transform_0(%arg0: i32, %arg1: i32) -> (i32, i32, i32, i32) {
    %c0_i32 = arith.constant 0 : i32
    %c0_i32_0 = arith.constant 0 : i32
    %c0_i32_1 = arith.constant 0 : i32
    %c0_i32_2 = arith.constant 0 : i32
    return %arg0, %c0_i32, %c0_i32_0, %c0_i32_1 : i32, i32, i32, i32
  }
  func.func @transform_1(%arg0: i32, %arg1: i32) -> (i32, i32) {
    %c0_i32 = arith.constant 0 : i32
    %c0_i32_0 = arith.constant 0 : i32
    %c0_i32_1 = arith.constant 0 : i32
    return %c0_i32, %c0_i32_0 : i32, i32
  }
  func.func @transform_2(%arg0: i32, %arg1: i32) -> (i32, i32) {
    %c0_i32 = arith.constant 0 : i32
    %c0_i32_0 = arith.constant 0 : i32
    %c0_i32_1 = arith.constant 0 : i32
    return %c0_i32, %c0_i32_0 : i32, i32
  }
  func.func @transform_3(%arg0: i32, %arg1: i32) -> (i32, i32, i32, i32) {
    %c0_i32 = arith.constant 0 : i32
    %c0_i32_0 = arith.constant 0 : i32
    %c0_i32_1 = arith.constant 0 : i32
    %c0_i32_2 = arith.constant 0 : i32
    %c0_i32_3 = arith.constant 0 : i32
    return %c0_i32, %c0_i32_0, %c0_i32_1, %c0_i32_2 : i32, i32, i32, i32
  }
  func.func @transform_4(%arg0: i32, %arg1: i32) -> (i32, i32, i32, i32) {
    %c0_i32 = arith.constant 0 : i32
    %c0_i32_0 = arith.constant 0 : i32
    %c0_i32_1 = arith.constant 0 : i32
    return %arg0, %arg1, %c0_i32, %c0_i32_0 : i32, i32, i32, i32
  }
  func.func @transform_5(%arg0: i32, %arg1: i32) -> (i32, i32, i32, i32) {
    %c0_i32 = arith.constant 0 : i32
    %c0_i32_0 = arith.constant 0 : i32
    %c0_i32_1 = arith.constant 0 : i32
    return %arg0, %arg1, %c0_i32, %c0_i32_0 : i32, i32, i32, i32
  }
}

module attributes {stable_mosaic.version = 11 : i64} {
  func.func @_epilogue_1x1_kernel(%arg0: i32, %arg1: i32, %arg2: memref<1x8x8x128xbf16, #tpu.memory_space<vmem>>, %arg3: memref<1x128xf32, #tpu.memory_space<vmem>>, %arg4: memref<1x128xf32, #tpu.memory_space<vmem>>, %arg5: memref<1x8x8x128xbf16, #tpu.memory_space<vmem>>, %arg6: memref<128x128xbf16, #tpu.memory_space<vmem>>, %arg7: memref<1x128xf32, #tpu.memory_space<vmem>>, %arg8: memref<1x8x8x128xf32, #tpu.memory_space<vmem>>) attributes {dimension_semantics = [#tpu.dimension_semantics<parallel>, #tpu.dimension_semantics<parallel>], iteration_bounds = array<i64: 2, 1>, scalar_prefetch = 0 : i64, scratch_operands = 0 : i64, tpu.core_type = #tpu.core_type<tc>, window_params = [{transform_indices = @transform_0, window_bounds = array<i64: 1, 8, 8, 128>}, {pipeline_mode = #tpu.pipeline_mode<synchronous>, transform_indices = @transform_1, window_bounds = array<i64: 1, 128>}, {pipeline_mode = #tpu.pipeline_mode<synchronous>, transform_indices = @transform_2, window_bounds = array<i64: 1, 128>}, {transform_indices = @transform_3, window_bounds = array<i64: 1, 8, 8, 128>}, {pipeline_mode = #tpu.pipeline_mode<synchronous>, transform_indices = @transform_4, window_bounds = array<i64: 128, 128>}, {pipeline_mode = #tpu.pipeline_mode<synchronous>, transform_indices = @transform_5, window_bounds = array<i64: 1, 128>}, {transform_indices = @transform_6, window_bounds = array<i64: 1, 8, 8, 128>}]} {
    %c0 = arith.constant 0 : index
    %c0_0 = arith.constant 0 : index
    %c0_1 = arith.constant 0 : index
    %c0_2 = arith.constant 0 : index
    %0 = vector.load %arg2[%c0, %c0_0, %c0_1, %c0_2] : memref<1x8x8x128xbf16, #tpu.memory_space<vmem>>, vector<1x8x8x128xbf16>
    %1 = vector.shape_cast %0 : vector<1x8x8x128xbf16> to vector<8x8x128xbf16>
    %2 = arith.extf %1 : vector<8x8x128xbf16> to vector<8x8x128xf32>
    %c0_3 = arith.constant 0 : index
    %c0_4 = arith.constant 0 : index
    %3 = vector.load %arg3[%c0_3, %c0_4] : memref<1x128xf32, #tpu.memory_space<vmem>>, vector<1x128xf32>
    %4 = vector.shape_cast %3 : vector<1x128xf32> to vector<1x1x128xf32>
    %5 = vector.broadcast %4 : vector<1x1x128xf32> to vector<8x8x128xf32>
    %6 = arith.mulf %2, %5 : vector<8x8x128xf32>
    %c0_5 = arith.constant 0 : index
    %c0_6 = arith.constant 0 : index
    %7 = vector.load %arg4[%c0_5, %c0_6] : memref<1x128xf32, #tpu.memory_space<vmem>>, vector<1x128xf32>
    %8 = vector.shape_cast %7 : vector<1x128xf32> to vector<1x1x128xf32>
    %9 = vector.broadcast %8 : vector<1x1x128xf32> to vector<8x8x128xf32>
    %10 = arith.addf %6, %9 : vector<8x8x128xf32>
    %c0_7 = arith.constant 0 : index
    %c0_8 = arith.constant 0 : index
    %c0_9 = arith.constant 0 : index
    %c0_10 = arith.constant 0 : index
    %11 = vector.load %arg5[%c0_7, %c0_8, %c0_9, %c0_10] : memref<1x8x8x128xbf16, #tpu.memory_space<vmem>>, vector<1x8x8x128xbf16>
    %12 = vector.shape_cast %11 : vector<1x8x8x128xbf16> to vector<8x8x128xbf16>
    %13 = vector.shape_cast %12 : vector<8x8x128xbf16> to vector<64x128xbf16>
    %c0_11 = arith.constant 0 : index
    %c0_12 = arith.constant 0 : index
    %14 = vector.load %arg6[%c0_11, %c0_12] : memref<128x128xbf16, #tpu.memory_space<vmem>>, vector<128x128xbf16>
    %cst = arith.constant dense<0.000000e+00> : vector<64x128xf32>
    %15 = tpu.matmul %13, %14, %cst {dimension_numbers = #tpu.dot_dimension_numbers<[1], [0], [0], [1], [0, 0, 1, 1], [], []>} : vector<64x128xbf16>, vector<128x128xbf16>, vector<64x128xf32> -> vector<64x128xf32>
    %c0_13 = arith.constant 0 : index
    %c0_14 = arith.constant 0 : index
    %16 = vector.load %arg7[%c0_13, %c0_14] : memref<1x128xf32, #tpu.memory_space<vmem>>, vector<1x128xf32>
    %17 = vector.broadcast %16 : vector<1x128xf32> to vector<64x128xf32>
    %18 = arith.addf %15, %17 : vector<64x128xf32>
    %19 = vector.shape_cast %18 : vector<64x128xf32> to vector<8x8x128xf32>
    %20 = arith.addf %10, %19 : vector<8x8x128xf32>
    %cst_15 = arith.constant 0.000000e+00 : f32
    %21 = vector.broadcast %cst_15 : f32 to vector<8x8x128xf32>
    %22 = arith.maximumf %20, %21 : vector<8x8x128xf32>
    %c0_16 = arith.constant 0 : index
    %c0_17 = arith.constant 0 : index
    %c0_18 = arith.constant 0 : index
    %c0_19 = arith.constant 0 : index
    %23 = vector.load %arg8[%c0_16, %c0_17, %c0_18, %c0_19] : memref<1x8x8x128xf32, #tpu.memory_space<vmem>>, vector<1x8x8x128xf32>
    %24 = vector.shape_cast %23 : vector<1x8x8x128xf32> to vector<8x8x128xf32>
    %25 = vector.shape_cast %22 : vector<8x8x128xf32> to vector<1x8x8x128xf32>
    tpu.vector_store %arg8[%c0_16, %c0_17, %c0_18, %c0_19], %25 {strides = array<i32>} : memref<1x8x8x128xf32, #tpu.memory_space<vmem>>, vector<1x8x8x128xf32>,
    return
  }
  func.func @transform_0(%arg0: i32, %arg1: i32) -> (i32, i32, i32, i32) {
    %c0_i32 = arith.constant 0 : i32
    %c0_i32_0 = arith.constant 0 : i32
    %c0_i32_1 = arith.constant 0 : i32
    return %arg0, %arg1, %c0_i32, %c0_i32_0 : i32, i32, i32, i32
  }
  func.func @transform_1(%arg0: i32, %arg1: i32) -> (i32, i32) {
    %c0_i32 = arith.constant 0 : i32
    %c0_i32_0 = arith.constant 0 : i32
    %c0_i32_1 = arith.constant 0 : i32
    return %c0_i32, %c0_i32_0 : i32, i32
  }
  func.func @transform_2(%arg0: i32, %arg1: i32) -> (i32, i32) {
    %c0_i32 = arith.constant 0 : i32
    %c0_i32_0 = arith.constant 0 : i32
    %c0_i32_1 = arith.constant 0 : i32
    return %c0_i32, %c0_i32_0 : i32, i32
  }
  func.func @transform_3(%arg0: i32, %arg1: i32) -> (i32, i32, i32, i32) {
    %c0_i32 = arith.constant 0 : i32
    %c0_i32_0 = arith.constant 0 : i32
    %c0_i32_1 = arith.constant 0 : i32
    return %arg0, %arg1, %c0_i32, %c0_i32_0 : i32, i32, i32, i32
  }
  func.func @transform_4(%arg0: i32, %arg1: i32) -> (i32, i32) {
    %c0_i32 = arith.constant 0 : i32
    %c0_i32_0 = arith.constant 0 : i32
    %c0_i32_1 = arith.constant 0 : i32
    return %c0_i32, %c0_i32_0 : i32, i32
  }
  func.func @transform_5(%arg0: i32, %arg1: i32) -> (i32, i32) {
    %c0_i32 = arith.constant 0 : i32
    %c0_i32_0 = arith.constant 0 : i32
    %c0_i32_1 = arith.constant 0 : i32
    return %c0_i32, %c0_i32_0 : i32, i32
  }
  func.func @transform_6(%arg0: i32, %arg1: i32) -> (i32, i32, i32, i32) {
    %c0_i32 = arith.constant 0 : i32
    %c0_i32_0 = arith.constant 0 : i32
    %c0_i32_1 = arith.constant 0 : i32
    return %arg0, %arg1, %c0_i32, %c0_i32_0 : i32, i32, i32, i32
  }
}

</mosaic_0001>

<llo_original>
// kernel: residual_forward.5
$region0: #{residual_forward.5}
  #allocation0 [shape = 'u32[]', space=smem, size = 0x4, offset = 0x4, fixed_abs, tag = 'smem constant byte address 0x4 - core index']
  #allocation1 [shape = 'u32[144,128]{1,0:T(1,128)}', space=vmem, size = 0x12000, scoped, tag = 'internal scratch']
  %s0 = inlined_call_operand.vmem [shape: bf16[2,8,8,128], index: 0, kind: input, shape index: {}]
  %s1 = inlined_call_operand.vmem [shape: f32[1,128], index: 1, kind: input, shape index: {}]
  %s2 = inlined_call_operand.vmem [shape: f32[1,128], index: 2, kind: input, shape index: {}]
  %s3 = inlined_call_operand.vmem [shape: bf16[2,8,8,128], index: 3, kind: input, shape index: {}]
  %s4 = inlined_call_operand.vmem [shape: bf16[128,128], index: 4, kind: input, shape index: {}]
  %s5 = inlined_call_operand.vmem [shape: f32[1,128], index: 5, kind: input, shape index: {}]
  %s6 = inlined_call_operand.vmem [shape: f32[2,8,8,128], index: 6, kind: output, shape index: {}]
  %s7 = sld [smem:[#allocation0]]
  $region57: #{residual_forward.5} parent=0
    _
  %s9 = ssub.s32 1, %s7
  %s10 = scalar_select 0, %s9, %s7
  loop: start=0, step=1, limit=4
  $region2: #{residual_forward.5} parent=0 // loop_pre_header
    _
  $region3: #{residual_forward.5} parent=0 // loop_header
    %s12 = sphi 0, %s16
    %p13 = scmp.ge.s32.totalorder %s12, 4
    %s19 = sphi 0, %s31
    %s20 = sphi 0, %s27
    %s21 = sphi 0, %s19
    %s22 = sphi 0, %s20
    %s23 = sphi 0, %s21
    %s24 = sphi 0, %s22
    %s36 = sphi 0, %s38
    %s39 = sphi 0, %s36
    %s40 = sphi 0, %s39
    %s56 = sphi 0, %s40
    %s60 = sphi 0, %s60
    %s62 = sphi 0, %s60
    %s63 = sphi 0, %s62
    %s77 = sphi 0, %s63
    %s81 = sphi 0, %s81
    %s83 = sphi 0, %s81
    %s84 = sphi 0, %s83
    %s98 = sphi 0, %s84
    %s106 = sphi 0, %s108
    %s109 = sphi 0, %s106
    %s110 = sphi 0, %s109
    %s126 = sphi 0, %s110
    %s130 = sphi 0, %s130
    %s132 = sphi 0, %s130
    %s133 = sphi 0, %s132
    %s147 = sphi 0, %s133
    %s151 = sphi 0, %s151
    %s153 = sphi 0, %s151
    %s154 = sphi 0, %s153
    %s168 = sphi 0, %s154
    %s176 = sphi 0, %s178
    %s179 = sphi 0, %s176
    %s180 = sphi 0, %s179
    %s196 = sphi 0, %s180
  $region4: #{residual_forward.5} parent=0 // loop_header_branch
    %15 = sbr.rel (%p13) target = $region8
  $region5: #{residual_forward.5} parent=0 // loop_body
    %s17 = ssub.s32 %s12, 1
    %s18 = ssub.s32 %s12, 2
    %s25 = sadd.s32 1, %s20
    %p26 = scmp.ge.s32.totalorder %s25, 1
    %s27 = scalar_select %p26, 0, %s25
    %s28 = sadd.s32 1, %s19
    %s29 = scalar_select %p26, %s28, %s19
    %p30 = scmp.ge.s32.totalorder %s29, 2
    %s31 = scalar_select %p30, 0, %s29
    %s32 = ssub.s32 %s19, %s31
    %s33 = ssub.s32 %s20, %s27
    %s34 = sor.u32 %s32, %s33
    %p35 = scmp.eq.s32.totalorder %s34, 0
    %s37 = sadd.s32 %s36, 1
    %s38 = scalar_select %p35, %s36, %s37
    %p41 = pneg %p35
    %p42 = scmp.eq.s32.totalorder %s12, 1
    %p43 = por %p41, %p42
    %p44 = scmp.ne.s32.totalorder %s36, %s39
    %p45 = scmp.eq.s32.totalorder %s12, 0
    %p46 = por %p44, %p45
    %p47 = scmp.ne.s32.totalorder %s36, %s39
    %p48 = scmp.eq.s32.totalorder %s17, 1
    %p49 = por %p47, %p48
    %p50 = scmp.ne.s32.totalorder %s39, %s40
    %p51 = scmp.eq.s32.totalorder %s17, 0
    %p52 = por %p50, %p51
    %p53 = scmp.ne.s32.totalorder %s39, %s40
    %p54 = scmp.eq.s32.totalorder %s18, 1
    %p55 = por %p53, %p54
    %p57 = scmp.ne.s32.totalorder %s40, %s56
    %p58 = scmp.eq.s32.totalorder %s18, 0
    %p59 = por %p57, %p58
    %s61 = sadd.s32 %s60, 1
    %p64 = scmp.eq.s32.totalorder %s12, 1
    %p65 = scmp.ne.s32.totalorder %s60, %s62
    %p66 = scmp.eq.s32.totalorder %s12, 0
    %p67 = por %p65, %p66
    %p68 = scmp.ne.s32.totalorder %s60, %s62
    %p69 = scmp.eq.s32.totalorder %s17, 1
    %p70 = por %p68, %p69
    %p71 = scmp.ne.s32.totalorder %s62, %s63
    %p72 = scmp.eq.s32.totalorder %s17, 0
    %p73 = por %p71, %p72
    %p74 = scmp.ne.s32.totalorder %s62, %s63
    %p75 = scmp.eq.s32.totalorder %s18, 1
    %p76 = por %p74, %p75
    %p78 = scmp.ne.s32.totalorder %s63, %s77
    %p79 = scmp.eq.s32.totalorder %s18, 0
    %p80 = por %p78, %p79
    %s82 = sadd.s32 %s81, 1
    %p85 = scmp.eq.s32.totalorder %s12, 1
    %p86 = scmp.ne.s32.totalorder %s81, %s83
    %p87 = scmp.eq.s32.totalorder %s12, 0
    %p88 = por %p86, %p87
    %p89 = scmp.ne.s32.totalorder %s81, %s83
    %p90 = scmp.eq.s32.totalorder %s17, 1
    %p91 = por %p89, %p90
    %p92 = scmp.ne.s32.totalorder %s83, %s84
    %p93 = scmp.eq.s32.totalorder %s17, 0
    %p94 = por %p92, %p93
    %p95 = scmp.ne.s32.totalorder %s83, %s84
    %p96 = scmp.eq.s32.totalorder %s18, 1
    %p97 = por %p95, %p96
    %p99 = scmp.ne.s32.totalorder %s84, %s98
    %p100 = scmp.eq.s32.totalorder %s18, 0
    %p101 = por %p99, %p100
    %s102 = ssub.s32 %s19, %s31
    %s103 = ssub.s32 %s20, %s27
    %s104 = sor.u32 %s102, %s103
    %p105 = scmp.eq.s32.totalorder %s104, 0
    %s107 = sadd.s32 %s106, 1
    %s108 = scalar_select %p105, %s106, %s107
    %p111 = pneg %p105
    %p112 = scmp.eq.s32.totalorder %s12, 1
    %p113 = por %p111, %p112
    %p114 = scmp.ne.s32.totalorder %s106, %s109
    %p115 = scmp.eq.s32.totalorder %s12, 0
    %p116 = por %p114, %p115
    %p117 = scmp.ne.s32.totalorder %s106, %s109
    %p118 = scmp.eq.s32.totalorder %s17, 1
    %p119 = por %p117, %p118
    %p120 = scmp.ne.s32.totalorder %s109, %s110
    %p121 = scmp.eq.s32.totalorder %s17, 0
    %p122 = por %p120, %p121
    %p123 = scmp.ne.s32.totalorder %s109, %s110
    %p124 = scmp.eq.s32.totalorder %s18, 1
    %p125 = por %p123, %p124
    %p127 = scmp.ne.s32.totalorder %s110, %s126
    %p128 = scmp.eq.s32.totalorder %s18, 0
    %p129 = por %p127, %p128
    %s131 = sadd.s32 %s130, 1
    %p134 = scmp.eq.s32.totalorder %s12, 1
    %p135 = scmp.ne.s32.totalorder %s130, %s132
    %p136 = scmp.eq.s32.totalorder %s12, 0
    %p137 = por %p135, %p136
    %p138 = scmp.ne.s32.totalorder %s130, %s132
    %p139 = scmp.eq.s32.totalorder %s17, 1
    %p140 = por %p138, %p139
    %p141 = scmp.ne.s32.totalorder %s132, %s133
    %p142 = scmp.eq.s32.totalorder %s17, 0
    %p143 = por %p141, %p142
    %p144 = scmp.ne.s32.totalorder %s132, %s133
    %p145 = scmp.eq.s32.totalorder %s18, 1
    %p146 = por %p144, %p145
    %p148 = scmp.ne.s32.totalorder %s133, %s147
    %p149 = scmp.eq.s32.totalorder %s18, 0
    %p150 = por %p148, %p149
    %s152 = sadd.s32 %s151, 1
    %p155 = scmp.eq.s32.totalorder %s12, 1
    %p156 = scmp.ne.s32.totalorder %s151, %s153
    %p157 = scmp.eq.s32.totalorder %s12, 0
    %p158 = por %p156, %p157
    %p159 = scmp.ne.s32.totalorder %s151, %s153
    %p160 = scmp.eq.s32.totalorder %s17, 1
    %p161 = por %p159, %p160
    %p162 = scmp.ne.s32.totalorder %s153, %s154
    %p163 = scmp.eq.s32.totalorder %s17, 0
    %p164 = por %p162, %p163
    %p165 = scmp.ne.s32.totalorder %s153, %s154
    %p166 = scmp.eq.s32.totalorder %s18, 1
    %p167 = por %p165, %p166
    %p169 = scmp.ne.s32.totalorder %s154, %s168
    %p170 = scmp.eq.s32.totalorder %s18, 0
    %p171 = por %p169, %p170
    %s172 = ssub.s32 %s19, %s31
    %s173 = ssub.s32 %s20, %s27
    %s174 = sor.u32 %s172, %s173
    %p175 = scmp.eq.s32.totalorder %s174, 0
    %s177 = sadd.s32 %s176, 1
    %s178 = scalar_select %p175, %s176, %s177
    %p181 = pneg %p175
    %p182 = scmp.eq.s32.totalorder %s12, 1
    %p183 = por %p181, %p182
    %p184 = scmp.ne.s32.totalorder %s176, %s179
    %p185 = scmp.eq.s32.totalorder %s12, 0
    %p186 = por %p184, %p185
    %p187 = scmp.ne.s32.totalorder %s176, %s179
    %p188 = scmp.eq.s32.totalorder %s17, 1
    %p189 = por %p187, %p188
    %p190 = scmp.ne.s32.totalorder %s179, %s180
    %p191 = scmp.eq.s32.totalorder %s17, 0
    %p192 = por %p190, %p191
    %p193 = scmp.ne.s32.totalorder %s179, %s180
    %p194 = scmp.eq.s32.totalorder %s18, 1
    %p195 = por %p193, %p194
    %p197 = scmp.ne.s32.totalorder %s180, %s196
    %p198 = scmp.eq.s32.totalorder %s18, 0
    %p199 = por %p197, %p198
    %p200 = scmp.le.s32.totalorder 1, %s12
    %p201 = scmp.lt.s32.totalorder %s12, 3
    %p202 = pnand %p200, %p201
    %p203 = pneg %p202
    // Predicated region
    $region9: #{residual_forward.5} parent=5 // pred_check
      _
    $region10: #{residual_forward.5} parent=5 // pred_check_branch
      %205 = sbr.rel (%p202) target = $region12
    $region11: #{residual_forward.5} parent=5 // pred_region
      %s206 = ssub.s32 %s12, 1
      // Predicated region
      $region13: #{residual_forward.5} parent=11 // pred_check
        %p207 = pneg %p73
      $region14: #{residual_forward.5} parent=11 // pred_check_branch
        %209 = sbr.rel (%p207) target = $region16
      $region15: #{residual_forward.5} parent=11 // pred_region
        _
      $region16: #{residual_forward.5} parent=11 // pred_fallthru
        _
      // Predicated region
      $region17: #{residual_forward.5} parent=11 // pred_check
        %p210 = pneg %p94
      $region18: #{residual_forward.5} parent=11 // pred_check_branch
        %212 = sbr.rel (%p210) target = $region20
      $region19: #{residual_forward.5} parent=11 // pred_region
        _
      $region20: #{residual_forward.5} parent=11 // pred_fallthru
        _
      // Predicated region
      $region21: #{residual_forward.5} parent=11 // pred_check
        %p213 = pneg %p143
      $region22: #{residual_forward.5} parent=11 // pred_check_branch
        %215 = sbr.rel (%p213) target = $region24
      $region23: #{residual_forward.5} parent=11 // pred_region
        _
      $region24: #{residual_forward.5} parent=11 // pred_fallthru
        _
      // Predicated region
      $region25: #{residual_forward.5} parent=11 // pred_check
        %p216 = pneg %p164
      $region26: #{residual_forward.5} parent=11 // pred_check_branch
        %218 = sbr.rel (%p216) target = $region28
      $region27: #{residual_forward.5} parent=11 // pred_region
        _
      $region28: #{residual_forward.5} parent=11 // pred_fallthru
        _
    $region12: #{residual_forward.5} parent=5 // pred_fallthru
      _
    %p219 = scmp.lt.s32.totalorder %s12, 2
    // Predicated region
    $region29: #{residual_forward.5} parent=5 // pred_check
      %p220 = pneg %p219
    $region30: #{residual_forward.5} parent=5 // pred_check_branch
      %222 = sbr.rel (%p220) target = $region32
    $region31: #{residual_forward.5} parent=5 // pred_region
      // Predicated region
      $region33: #{residual_forward.5} parent=31 // pred_check
        %p223 = pneg %p46
      $region34: #{residual_forward.5} parent=31 // pred_check_branch
        %225 = sbr.rel (%p223) target = $region36
      $region35: #{residual_forward.5} parent=31 // pred_region
        %s226 = smul.u32 8, %s20
        %p227 = scmp.lt.s32.totalorder %s19, 1
        %s228 = scalar_select %p227, %s19, 1
        %p229 = scmp.lt.s32.totalorder %s226, 7
        %s230 = scalar_select %p229, %s226, 7
        %s231 = smul.addr %s228, 8
        %s232 = sadd.s32 %s230, %s231
        %s233 = smul.addr %s232, 4
        %s234 = scalar_lea.vmem %s0, %s233
        %s235 = smul.u32 8, %s20
      $region36: #{residual_forward.5} parent=31 // pred_fallthru
        _
      // Predicated region
      $region37: #{residual_forward.5} parent=31 // pred_check
        %p236 = pneg %p116
      $region38: #{residual_forward.5} parent=31 // pred_check_branch
        %238 = sbr.rel (%p236) target = $region40
      $region39: #{residual_forward.5} parent=31 // pred_region
        %s239 = smul.u32 8, %s20
        %p240 = scmp.lt.s32.totalorder %s19, 1
        %s241 = scalar_select %p240, %s19, 1
        %p242 = scmp.lt.s32.totalorder %s239, 7
        %s243 = scalar_select %p242, %s239, 7
        %s244 = smul.addr %s241, 8
        %s245 = sadd.s32 %s243, %s244
        %s246 = smul.addr %s245, 4
        %s247 = scalar_lea.vmem %s3, %s246
        %s248 = smul.u32 8, %s20
      $region40: #{residual_forward.5} parent=31 // pred_fallthru
        _
    $region32: #{residual_forward.5} parent=5 // pred_fallthru
      _
    %p249 = scmp.le.s32.totalorder 1, %s12
    %p250 = scmp.lt.s32.totalorder %s12, 3
    %p251 = pnand %p249, %p250
    %p252 = pneg %p251
    // Predicated region
    $region41: #{residual_forward.5} parent=5 // pred_check
      _
    $region42: #{residual_forward.5} parent=5 // pred_check_branch
      %254 = sbr.rel (%p251) target = $region44
    $region43: #{residual_forward.5} parent=5 // pred_region
      %s255 = ssub.s32 %s12, 1
      %s256 = smul.u32 8, %s22
      %p257 = scmp.lt.s32.totalorder %s21, 1
      %s258 = scalar_select %p257, %s21, 1
      %p259 = scmp.lt.s32.totalorder %s256, 7
      %s260 = scalar_select %p259, %s256, 7
      %s261 = smul.addr %s258, 8
      %s262 = sadd.s32 %s260, %s261
      %s263 = smul.addr %s262, 4
      %s264 = scalar_lea.vmem %s0, %s263
      %p265 = pneg %p52
      %p266 = pneg %p49
      %p267 = pneg %p73
      %p268 = pneg %p70
      %p269 = pneg %p94
      %p270 = pneg %p91
      %s271 = smul.u32 8, %s22
      %p272 = scmp.lt.s32.totalorder %s21, 1
      %s273 = scalar_select %p272, %s21, 1
      %p274 = scmp.lt.s32.totalorder %s271, 7
      %s275 = scalar_select %p274, %s271, 7
      %s276 = smul.addr %s273, 8
      %s277 = sadd.s32 %s275, %s276
      %s278 = smul.addr %s277, 4
      %s279 = scalar_lea.vmem %s3, %s278
      %p280 = pneg %p122
      %p281 = pneg %p119
      %p282 = pneg %p143
      %p283 = pneg %p140
      %p284 = pneg %p164
      %p285 = pneg %p161
      %p286 = pneg %p192
      %p287 = pneg %p189
      %s288 = smul.u32 8, %s22
      %p289 = scmp.lt.s32.totalorder %s21, 1
      %s290 = scalar_select %p289, %s21, 1
      %p291 = scmp.lt.s32.totalorder %s288, 7
      %s292 = scalar_select %p291, %s288, 7
      %s293 = smul.addr %s290, 8
      %s294 = sadd.s32 %s292, %s293
      %s295 = smul.addr %s294, 8
      %s296 = scalar_lea.vmem %s6, %s295
      %s297 = smul.u32 8, %s22
      %p298 = scmp.lt.s32.totalorder %s21, 1
      %s299 = scalar_select %p298, %s21, 1
      %p300 = scmp.lt.s32.totalorder %s297, 7
      %s301 = scalar_select %p300, %s297, 7
      %s302 = smul.addr %s299, 8
      %s303 = sadd.s32 %s301, %s302
      %s304 = smul.addr %s303, 4
      %s305 = scalar_lea.vmem %s0, %s304
      %s306 = smul.u32 8, %s22
      %s307 = smul.u32 8, %s22
      %p308 = scmp.lt.s32.totalorder %s21, 1
      %s309 = scalar_select %p308, %s21, 1
      %p310 = scmp.lt.s32.totalorder %s307, 7
      %s311 = scalar_select %p310, %s307, 7
      %s312 = smul.addr %s309, 8
      %s313 = sadd.s32 %s311, %s312
      %s314 = smul.addr %s313, 4
      %s315 = scalar_lea.vmem %s3, %s314
      %s316 = smul.u32 8, %s22
      %s317 = smul.u32 8, %s22
      %p318 = scmp.lt.s32.totalorder %s21, 1
      %s319 = scalar_select %p318, %s21, 1
      %p320 = scmp.lt.s32.totalorder %s317, 7
      %s321 = scalar_select %p320, %s317, 7
      %s322 = smul.addr %s319, 8
      %s323 = sadd.s32 %s321, %s322
      %s324 = smul.addr %s323, 8
      %s325 = scalar_lea.vmem %s6, %s324
      %s326 = smul.u32 8, %s22
      %v328 = vld [vmem:[%s305] sm:$0xf]
      %v329 = vld [vmem:[%s305 + $0x4] sm:$0xf]
      %v330 = vld [vmem:[%s305 + $0x8] sm:$0xf]
      %v331 = vld [vmem:[%s305 + $0xc] sm:$0xf]
      %v332 = vld [vmem:[%s305 + $0x10] sm:$0xf]
      %v333 = vld [vmem:[%s305 + $0x14] sm:$0xf]
      %v334 = vld [vmem:[%s305 + $0x18] sm:$0xf]
      %v335 = vld [vmem:[%s305 + $0x1c] sm:$0xf]
      %v336 = vunpack.c.l.bf16 %v328
      %v337 = vunpack.c.l.bf16 %v329
      %v338 = vunpack.c.l.bf16 %v330
      %v339 = vunpack.c.l.bf16 %v331
      %v340 = vunpack.c.l.bf16 %v332
      %v341 = vunpack.c.l.bf16 %v333
      %v342 = vunpack.c.l.bf16 %v334
      %v343 = vunpack.c.l.bf16 %v335
      %v344 = vld [vmem:[%s1] sm:$0x1]
      %v346 = vlaneseq
      %v347 = vshrl.u32 %v346, 7
      %v348 = vsub.s32 0, %v347
      %v349 = vrot.slane %v344, %v348
      %v351 = vmul.f32 %v336, %v349
      %v352 = vmul.f32 %v337, %v349
      %v353 = vmul.f32 %v338, %v349
      %v354 = vmul.f32 %v339, %v349
      %v355 = vmul.f32 %v340, %v349
      %v356 = vmul.f32 %v341, %v349
      %v357 = vmul.f32 %v342, %v349
      %v358 = vmul.f32 %v343, %v349
      %v359 = vld [vmem:[%s2] sm:$0x1]
      %v361 = vlaneseq
      %v362 = vshrl.u32 %v361, 7
      %v363 = vsub.s32 0, %v362
      %v364 = vrot.slane %v359, %v363
      %v366 = vadd.f32 %v351, %v364
      %v367 = vadd.f32 %v352, %v364
      %v368 = vadd.f32 %v353, %v364
      %v369 = vadd.f32 %v354, %v364
      %v370 = vadd.f32 %v355, %v364
      %v371 = vadd.f32 %v356, %v364
      %v372 = vadd.f32 %v357, %v364
      %v373 = vadd.f32 %v358, %v364
      %v374 = vld [vmem:[%s315] sm:$0xf]
      %v375 = vld [vmem:[%s315 + $0x4] sm:$0xf]
      %v376 = vld [vmem:[%s315 + $0x8] sm:$0xf]
      %v377 = vld [vmem:[%s315 + $0xc] sm:$0xf]
      %v378 = vld [vmem:[%s315 + $0x10] sm:$0xf]
      %v379 = vld [vmem:[%s315 + $0x14] sm:$0xf]
      %v380 = vld [vmem:[%s315 + $0x18] sm:$0xf]
      %v381 = vld [vmem:[%s315 + $0x1c] sm:$0xf]
      %v382 = vld [vmem:[%s4] sm:$0xf]
      %v383 = vld [vmem:[%s4 + $0x4] sm:$0xf]
      %v384 = vld [vmem:[%s4 + $0x8] sm:$0xf]
      %v385 = vld [vmem:[%s4 + $0xc] sm:$0xf]
      %v386 = vld [vmem:[%s4 + $0x10] sm:$0xf]
      %v387 = vld [vmem:[%s4 + $0x14] sm:$0xf]
      %v388 = vld [vmem:[%s4 + $0x18] sm:$0xf]
      %v389 = vld [vmem:[%s4 + $0x1c] sm:$0xf]
      %v390 = vld [vmem:[%s4 + $0x20] sm:$0xf]
      %v391 = vld [vmem:[%s4 + $0x24] sm:$0xf]
      %v392 = vld [vmem:[%s4 + $0x28] sm:$0xf]
      %v393 = vld [vmem:[%s4 + $0x2c] sm:$0xf]
      %v394 = vld [vmem:[%s4 + $0x30] sm:$0xf]
      %v395 = vld [vmem:[%s4 + $0x34] sm:$0xf]
      %v396 = vld [vmem:[%s4 + $0x38] sm:$0xf]
      %v397 = vld [vmem:[%s4 + $0x3c] sm:$0xf]
      %v398 = vld [vmem:[%s5] sm:$0x1]
      %v400 = vlaneseq
      %v401 = vshrl.u32 %v400, 7
      %v402 = vsub.s32 0, %v401
      %v403 = vrot.slane %v398, %v402
      %v413 = vunpack.c.l.b16 %v374
      %v414 = vunpack.c.l.b16 %v375
      %v415 = vunpack.c.l.b16 %v376
      %v416 = vunpack.c.l.b16 %v377
      %v417 = vunpack.c.l.b16 %v378
      %v418 = vunpack.c.l.b16 %v379
      %v419 = vunpack.c.l.b16 %v380
      %v420 = vunpack.c.l.b16 %v381
      %v421 = vpack.c.b16 %v414, %v413
      %v422 = vpack.c.b16 %v416, %v415
      %v423 = vpack.c.b16 %v418, %v417
      %v424 = vpack.c.b16 %v420, %v419
      %v445 = vunpack.c.l.b16 %v382
      %v446 = vunpack.c.l.b16 %v383
      %v447 = vunpack.c.l.b16 %v384
      %v448 = vunpack.c.l.b16 %v385
      %v449 = vunpack.c.l.b16 %v386
      %v450 = vunpack.c.l.b16 %v387
      %v451 = vunpack.c.l.b16 %v388
      %v452 = vunpack.c.l.b16 %v389
      %v453 = vunpack.c.l.b16 %v390
      %v454 = vunpack.c.l.b16 %v391
      %v455 = vunpack.c.l.b16 %v392
      %v456 = vunpack.c.l.b16 %v393
      %v457 = vunpack.c.l.b16 %v394
      %v458 = vunpack.c.l.b16 %v395
      %v459 = vunpack.c.l.b16 %v396
      %v460 = vunpack.c.l.b16 %v397
      %v461 = vpack.c.b16 %v446, %v445
      %v462 = vpack.c.b16 %v448, %v447
      %v463 = vpack.c.b16 %v450, %v449
      %v464 = vpack.c.b16 %v452, %v451
      %v465 = vpack.c.b16 %v454, %v453
      %v466 = vpack.c.b16 %v456, %v455
      %v467 = vpack.c.b16 %v458, %v457
      %v468 = vpack.c.b16 %v460, %v459
      %477 = vmatprep.subr.bf16.mxu0 0
      %478 = vmatpush1.bf16.msra.mxu0 %v461
      %479 = vmatprep.subr.bf16.mxu0 0
      %480 = vmatpush1.bf16.msra.mxu0 %v462
      %481 = vmatprep.subr.bf16.mxu0 0
      %482 = vmatpush1.bf16.msra.mxu0 %v463
      %483 = vmatprep.subr.bf16.mxu0 0
      %484 = vmatpush1.bf16.msra.mxu0 %v464
      %485 = vmatprep.subr.bf16.mxu0 0
      %486 = vmatpush1.bf16.msra.mxu0 %v465
      %487 = vmatprep.subr.bf16.mxu0 0
      %488 = vmatpush1.bf16.msra.mxu0 %v466
      %489 = vmatprep.subr.bf16.mxu0 0
      %490 = vmatpush1.bf16.msra.mxu0 %v467
      %491 = vmatprep.subr.bf16.mxu0 0
      %492 = vmatpush1.bf16.msra.mxu0 %v468
      %493 = vmatprep.subr.bf16.mxu0 0
      %494 = vmatpush1.bf16.msra.mxu0 0
      %495 = vmatprep.subr.bf16.mxu0 0
      %496 = vmatpush1.bf16.msra.mxu0 0
      %497 = vmatprep.subr.bf16.mxu0 0
      %498 = vmatpush1.bf16.msra.mxu0 0
      %499 = vmatprep.subr.bf16.mxu0 0
      %500 = vmatpush1.bf16.msra.mxu0 0
      %501 = vmatprep.subr.bf16.mxu0 0
      %502 = vmatpush1.bf16.msra.mxu0 0
      %503 = vmatprep.subr.bf16.mxu0 0
      %504 = vmatpush1.bf16.msra.mxu0 0
      %505 = vmatprep.subr.bf16.mxu0 0
      %506 = vmatpush1.bf16.msra.mxu0 0
      %507 = vmatprep.subr.bf16.mxu0 0
      %508 = vmatpush1.bf16.msra.mxu0 0
      %509 = vmatprep.mubr.bf16.mxu0 0
      %510 = vmatmul.mubr.bf16.gmra.mrb[0].mxu0 %v421
      %v511 = vpop.f32.mrb[0].mxu0
      %v512 = vadd.f32 %v403, %v511
      %v513 = vpop.f32.mrb[0].mxu0
      %v514 = vpop.f32.mrb[0].mxu0
      %v515 = vadd.f32 %v403, %v514
      %v516 = vpop.f32.mrb[0].mxu0
      %517 = vmatprep.mubr.bf16.mxu0 0
      %518 = vmatmul.mubr.bf16.gmra.mrb[0].mxu0 %v422
      %v519 = vpop.f32.mrb[0].mxu0
      %v520 = vadd.f32 %v403, %v519
      %v521 = vpop.f32.mrb[0].mxu0
      %v522 = vpop.f32.mrb[0].mxu0
      %v523 = vadd.f32 %v403, %v522
      %v524 = vpop.f32.mrb[0].mxu0
      %525 = vmatprep.mubr.bf16.mxu0 0
      %526 = vmatmul.mubr.bf16.gmra.mrb[0].mxu0 %v423
      %v527 = vpop.f32.mrb[0].mxu0
      %v528 = vadd.f32 %v403, %v527
      %v529 = vpop.f32.mrb[0].mxu0
      %v530 = vpop.f32.mrb[0].mxu0
      %v531 = vadd.f32 %v403, %v530
      %v532 = vpop.f32.mrb[0].mxu0
      %533 = vmatprep.mubr.bf16.mxu0 0
      %534 = vmatmul.mubr.bf16.gmra.mrb[0].mxu0 %v424
      %v535 = vpop.f32.mrb[0].mxu0
      %v536 = vadd.f32 %v403, %v535
      %v537 = vpop.f32.mrb[0].mxu0
      %v538 = vpop.f32.mrb[0].mxu0
      %v539 = vadd.f32 %v403, %v538
      %v540 = vpop.f32.mrb[0].mxu0
      %541 = vdwg.mxu0
      %v542 = vadd.f32 %v366, %v512
      %v543 = vadd.f32 %v367, %v515
      %v544 = vadd.f32 %v368, %v520
      %v545 = vadd.f32 %v369, %v523
      %v546 = vadd.f32 %v370, %v528
      %v547 = vadd.f32 %v371, %v531
      %v548 = vadd.f32 %v372, %v536
      %v549 = vadd.f32 %v373, %v539
      %v550 = vmax.f32 %v542, 0.0
      %v551 = vmax.f32 %v543, 0.0
      %v552 = vmax.f32 %v544, 0.0
      %v553 = vmax.f32 %v545, 0.0
      %v554 = vmax.f32 %v546, 0.0
      %v555 = vmax.f32 %v547, 0.0
      %v556 = vmax.f32 %v548, 0.0
      %v557 = vmax.f32 %v549, 0.0
      %558 = vst [vmem:[%s325] sm:$0xff] %v550
      %559 = vst [vmem:[%s325 + $0x8] sm:$0xff] %v551
      %560 = vst [vmem:[%s325 + $0x10] sm:$0xff] %v552
      %561 = vst [vmem:[%s325 + $0x18] sm:$0xff] %v553
      %562 = vst [vmem:[%s325 + $0x20] sm:$0xff] %v554
      %563 = vst [vmem:[%s325 + $0x28] sm:$0xff] %v555
      %564 = vst [vmem:[%s325 + $0x30] sm:$0xff] %v556
      %565 = vst [vmem:[%s325 + $0x38] sm:$0xff] %v557
      %s566 = smul.u32 8, %s22
      %p567 = scmp.lt.s32.totalorder %s21, 1
      %s568 = scalar_select %p567, %s21, 1
      %p569 = scmp.lt.s32.totalorder %s566, 7
      %s570 = scalar_select %p569, %s566, 7
      %s571 = smul.addr %s568, 8
      %s572 = sadd.s32 %s570, %s571
      %s573 = smul.addr %s572, 8
      %s574 = scalar_lea.vmem %s6, %s573
      // Predicated region
      $region45: #{residual_forward.5} parent=43 // pred_check
        %p575 = pneg %p189
      $region46: #{residual_forward.5} parent=43 // pred_check_branch
        %577 = sbr.rel (%p575) target = $region48
      $region47: #{residual_forward.5} parent=43 // pred_region
        %s578 = smul.u32 8, %s22
      $region48: #{residual_forward.5} parent=43 // pred_fallthru
        _
    $region44: #{residual_forward.5} parent=5 // pred_fallthru
      _
    %p579 = scmp.le.s32.totalorder 2, %s12
    // Predicated region
    $region49: #{residual_forward.5} parent=5 // pred_check
      %p580 = pneg %p579
    $region50: #{residual_forward.5} parent=5 // pred_check_branch
      %582 = sbr.rel (%p580) target = $region52
    $region51: #{residual_forward.5} parent=5 // pred_region
      %s583 = ssub.s32 %s12, 2
      // Predicated region
      $region53: #{residual_forward.5} parent=51 // pred_check
        %p584 = pneg %p195
      $region54: #{residual_forward.5} parent=51 // pred_check_branch
        %586 = sbr.rel (%p584) target = $region56
      $region55: #{residual_forward.5} parent=51 // pred_region
        %s587 = smul.u32 8, %s24
        %p588 = scmp.lt.s32.totalorder %s23, 1
        %s589 = scalar_select %p588, %s23, 1
        %p590 = scmp.lt.s32.totalorder %s587, 7
        %s591 = scalar_select %p590, %s587, 7
        %s592 = smul.addr %s589, 8
        %s593 = sadd.s32 %s591, %s592
        %s594 = smul.addr %s593, 8
        %s595 = scalar_lea.vmem %s6, %s594
      $region56: #{residual_forward.5} parent=51 // pred_fallthru
        _
    $region52: #{residual_forward.5} parent=5 // pred_fallthru
      _
  $region6: #{residual_forward.5} parent=0 // loop_footer
    %s16 = sadd.s32 1, %s12
  $region7: #{residual_forward.5} parent=0 // loop_footer_branch
    %11 = sbr.rel target = $region3
  $region8: #{residual_forward.5} parent=0 // loop_exit
    _

// kernel: residual_forward.3
$region0: #{residual_forward.3}
  #allocation0 [shape = 'u32[]', space=smem, size = 0x4, offset = 0x4, fixed_abs, tag = 'smem constant byte address 0x4 - core index']
  #allocation1 [shape = 'u32[144,128]{1,0:T(1,128)}', space=vmem, size = 0x12000, scoped, tag = 'internal scratch']
  %s0 = inlined_call_operand.vmem [shape: bf16[2,4,9,9,128], index: 0, kind: input, shape index: {}]
  %s1 = inlined_call_operand.vmem [shape: bf16[3,3,128,128], index: 1, kind: input, shape index: {}]
  %s2 = inlined_call_operand.vmem [shape: bf16[2,8,8,128], index: 2, kind: output, shape index: {0}]
  %s3 = inlined_call_operand.vmem [shape: f32[2,1,2,128], index: 3, kind: output, shape index: {1}]
  %4 = xla_tuple %s2, %s3
  %s5 = sld [smem:[#allocation0]]
  $region49: #{residual_forward.3} parent=0
    _
  %s7 = ssub.s32 1, %s5
  %s8 = scalar_select 0, %s7, %s5
  loop: start=0, step=1, limit=4
  $region2: #{residual_forward.3} parent=0 // loop_pre_header
    _
  $region3: #{residual_forward.3} parent=0 // loop_header
    %s10 = sphi 0, %s14
    %p11 = scmp.ge.s32.totalorder %s10, 4
    %s17 = sphi 0, %s29
    %s18 = sphi 0, %s25
    %s19 = sphi 0, %s17
    %s20 = sphi 0, %s18
    %s21 = sphi 0, %s19
    %s22 = sphi 0, %s20
    %s32 = sphi 0, %s34
    %s35 = sphi 0, %s32
    %s36 = sphi 0, %s35
    %s52 = sphi 0, %s36
    %s56 = sphi 0, %s56
    %s58 = sphi 0, %s56
    %s59 = sphi 0, %s58
    %s73 = sphi 0, %s59
    %s81 = sphi 0, %s83
    %s84 = sphi 0, %s81
    %s85 = sphi 0, %s84
    %s101 = sphi 0, %s85
    %s109 = sphi 0, %s111
    %s112 = sphi 0, %s109
    %s113 = sphi 0, %s112
    %s129 = sphi 0, %s113
  $region4: #{residual_forward.3} parent=0 // loop_header_branch
    %13 = sbr.rel (%p11) target = $region8
  $region5: #{residual_forward.3} parent=0 // loop_body
    %s15 = ssub.s32 %s10, 1
    %s16 = ssub.s32 %s10, 2
    %s23 = sadd.s32 1, %s18
    %p24 = scmp.ge.s32.totalorder %s23, 1
    %s25 = scalar_select %p24, 0, %s23
    %s26 = sadd.s32 1, %s17
    %s27 = scalar_select %p24, %s26, %s17
    %p28 = scmp.ge.s32.totalorder %s27, 2
    %s29 = scalar_select %p28, 0, %s27
    %s30 = ssub.s32 %s17, %s29
    %p31 = scmp.eq.s32.totalorder %s30, 0
    %s33 = sadd.s32 %s32, 1
    %s34 = scalar_select %p31, %s32, %s33
    %p37 = pneg %p31
    %p38 = scmp.eq.s32.totalorder %s10, 1
    %p39 = por %p37, %p38
    %p40 = scmp.ne.s32.totalorder %s32, %s35
    %p41 = scmp.eq.s32.totalorder %s10, 0
    %p42 = por %p40, %p41
    %p43 = scmp.ne.s32.totalorder %s32, %s35
    %p44 = scmp.eq.s32.totalorder %s15, 1
    %p45 = por %p43, %p44
    %p46 = scmp.ne.s32.totalorder %s35, %s36
    %p47 = scmp.eq.s32.totalorder %s15, 0
    %p48 = por %p46, %p47
    %p49 = scmp.ne.s32.totalorder %s35, %s36
    %p50 = scmp.eq.s32.totalorder %s16, 1
    %p51 = por %p49, %p50
    %p53 = scmp.ne.s32.totalorder %s36, %s52
    %p54 = scmp.eq.s32.totalorder %s16, 0
    %p55 = por %p53, %p54
    %s57 = sadd.s32 %s56, 1
    %p60 = scmp.eq.s32.totalorder %s10, 1
    %p61 = scmp.ne.s32.totalorder %s56, %s58
    %p62 = scmp.eq.s32.totalorder %s10, 0
    %p63 = por %p61, %p62
    %p64 = scmp.ne.s32.totalorder %s56, %s58
    %p65 = scmp.eq.s32.totalorder %s15, 1
    %p66 = por %p64, %p65
    %p67 = scmp.ne.s32.totalorder %s58, %s59
    %p68 = scmp.eq.s32.totalorder %s15, 0
    %p69 = por %p67, %p68
    %p70 = scmp.ne.s32.totalorder %s58, %s59
    %p71 = scmp.eq.s32.totalorder %s16, 1
    %p72 = por %p70, %p71
    %p74 = scmp.ne.s32.totalorder %s59, %s73
    %p75 = scmp.eq.s32.totalorder %s16, 0
    %p76 = por %p74, %p75
    %s77 = ssub.s32 %s17, %s29
    %s78 = ssub.s32 %s18, %s25
    %s79 = sor.u32 %s77, %s78
    %p80 = scmp.eq.s32.totalorder %s79, 0
    %s82 = sadd.s32 %s81, 1
    %s83 = scalar_select %p80, %s81, %s82
    %p86 = pneg %p80
    %p87 = scmp.eq.s32.totalorder %s10, 1
    %p88 = por %p86, %p87
    %p89 = scmp.ne.s32.totalorder %s81, %s84
    %p90 = scmp.eq.s32.totalorder %s10, 0
    %p91 = por %p89, %p90
    %p92 = scmp.ne.s32.totalorder %s81, %s84
    %p93 = scmp.eq.s32.totalorder %s15, 1
    %p94 = por %p92, %p93
    %p95 = scmp.ne.s32.totalorder %s84, %s85
    %p96 = scmp.eq.s32.totalorder %s15, 0
    %p97 = por %p95, %p96
    %p98 = scmp.ne.s32.totalorder %s84, %s85
    %p99 = scmp.eq.s32.totalorder %s16, 1
    %p100 = por %p98, %p99
    %p102 = scmp.ne.s32.totalorder %s85, %s101
    %p103 = scmp.eq.s32.totalorder %s16, 0
    %p104 = por %p102, %p103
    %s105 = ssub.s32 %s17, %s29
    %s106 = ssub.s32 %s18, %s25
    %s107 = sor.u32 %s105, %s106
    %p108 = scmp.eq.s32.totalorder %s107, 0
    %s110 = sadd.s32 %s109, 1
    %s111 = scalar_select %p108, %s109, %s110
    %p114 = pneg %p108
    %p115 = scmp.eq.s32.totalorder %s10, 1
    %p116 = por %p114, %p115
    %p117 = scmp.ne.s32.totalorder %s109, %s112
    %p118 = scmp.eq.s32.totalorder %s10, 0
    %p119 = por %p117, %p118
    %p120 = scmp.ne.s32.totalorder %s109, %s112
    %p121 = scmp.eq.s32.totalorder %s15, 1
    %p122 = por %p120, %p121
    %p123 = scmp.ne.s32.totalorder %s112, %s113
    %p124 = scmp.eq.s32.totalorder %s15, 0
    %p125 = por %p123, %p124
    %p126 = scmp.ne.s32.totalorder %s112, %s113
    %p127 = scmp.eq.s32.totalorder %s16, 1
    %p128 = por %p126, %p127
    %p130 = scmp.ne.s32.totalorder %s113, %s129
    %p131 = scmp.eq.s32.totalorder %s16, 0
    %p132 = por %p130, %p131
    %p133 = scmp.le.s32.totalorder 1, %s10
    %p134 = scmp.lt.s32.totalorder %s10, 3
    %p135 = pnand %p133, %p134
    %p136 = pneg %p135
    // Predicated region
    $region9: #{residual_forward.3} parent=5 // pred_check
      _
    $region10: #{residual_forward.3} parent=5 // pred_check_branch
      %138 = sbr.rel (%p135) target = $region12
    $region11: #{residual_forward.3} parent=5 // pred_region
      %s139 = ssub.s32 %s10, 1
      // Predicated region
      $region13: #{residual_forward.3} parent=11 // pred_check
        %p140 = pneg %p69
      $region14: #{residual_forward.3} parent=11 // pred_check_branch
        %142 = sbr.rel (%p140) target = $region16
      $region15: #{residual_forward.3} parent=11 // pred_region
        _
      $region16: #{residual_forward.3} parent=11 // pred_fallthru
        _
    $region12: #{residual_forward.3} parent=5 // pred_fallthru
      _
    %p143 = scmp.lt.s32.totalorder %s10, 2
    // Predicated region
    $region17: #{residual_forward.3} parent=5 // pred_check
      %p144 = pneg %p143
    $region18: #{residual_forward.3} parent=5 // pred_check_branch
      %146 = sbr.rel (%p144) target = $region20
    $region19: #{residual_forward.3} parent=5 // pred_region
      // Predicated region
      $region21: #{residual_forward.3} parent=19 // pred_check
        %p147 = pneg %p42
      $region22: #{residual_forward.3} parent=19 // pred_check_branch
        %149 = sbr.rel (%p147) target = $region24
      $region23: #{residual_forward.3} parent=19 // pred_region
        %p150 = scmp.lt.s32.totalorder %s17, 1
        %s151 = scalar_select %p150, %s17, 1
        %s152 = smul.addr %s151, 72
        %s153 = smul.addr %s152, 4
        %s154 = scalar_lea.vmem %s0, %s153
      $region24: #{residual_forward.3} parent=19 // pred_fallthru
        _
    $region20: #{residual_forward.3} parent=5 // pred_fallthru
      _
    %p155 = scmp.le.s32.totalorder 1, %s10
    %p156 = scmp.lt.s32.totalorder %s10, 3
    %p157 = pnand %p155, %p156
    %p158 = pneg %p157
    // Predicated region
    $region25: #{residual_forward.3} parent=5 // pred_check
      _
    $region26: #{residual_forward.3} parent=5 // pred_check_branch
      %160 = sbr.rel (%p157) target = $region28
    $region27: #{residual_forward.3} parent=5 // pred_region
      %s161 = ssub.s32 %s10, 1
      %p162 = scmp.lt.s32.totalorder %s19, 1
      %s163 = scalar_select %p162, %s19, 1
      %s164 = smul.addr %s163, 72
      %s165 = smul.addr %s164, 4
      %s166 = scalar_lea.vmem %s0, %s165
      %p167 = pneg %p48
      %p168 = pneg %p45
      %p169 = pneg %p69
      %p170 = pneg %p66
      %p171 = pneg %p97
      %p172 = pneg %p94
      %s173 = smul.u32 8, %s20
      %p174 = scmp.lt.s32.totalorder %s19, 1
      %s175 = scalar_select %p174, %s19, 1
      %p176 = scmp.lt.s32.totalorder %s173, 7
      %s177 = scalar_select %p176, %s173, 7
      %s178 = smul.addr %s175, 8
      %s179 = sadd.s32 %s177, %s178
      %s180 = smul.addr %s179, 4
      %s181 = scalar_lea.vmem %s2, %s180
      %p182 = pneg %p125
      %p183 = pneg %p122
      %p184 = scmp.lt.s32.totalorder %s19, 1
      %s185 = scalar_select %p184, %s19, 1
      %p186 = scmp.lt.s32.totalorder %s20, 0
      %s187 = scalar_select %p186, %s20, 0
      %s188 = sadd.s32 %s187, %s185
      %s189 = smul.addr %s188, 2
      %s190 = scalar_lea.vmem %s3, %s189
      %p191 = scmp.lt.s32.totalorder %s19, 1
      %s192 = scalar_select %p191, %s19, 1
      %s193 = smul.addr %s192, 72
      %s194 = smul.addr %s193, 4
      %s195 = scalar_lea.vmem %s0, %s194
      %s196 = smul.u32 8, %s20
      %p197 = scmp.lt.s32.totalorder %s19, 1
      %s198 = scalar_select %p197, %s19, 1
      %p199 = scmp.lt.s32.totalorder %s196, 7
      %s200 = scalar_select %p199, %s196, 7
      %s201 = smul.addr %s198, 8
      %s202 = sadd.s32 %s200, %s201
      %s203 = smul.addr %s202, 4
      %s204 = scalar_lea.vmem %s2, %s203
      %s205 = smul.u32 8, %s20
      %p206 = scmp.lt.s32.totalorder %s19, 1
      %s207 = scalar_select %p206, %s19, 1
      %p208 = scmp.lt.s32.totalorder %s20, 0
      %s209 = scalar_select %p208, %s20, 0
      %s210 = sadd.s32 %s209, %s207
      %s211 = smul.addr %s210, 2
      %s212 = scalar_lea.vmem %s3, %s211
      %s214 = smul.u32 %s20, 8
      %s215 = smul.u32 %s214, 2
      %s216 = smul.addr %s215, 4
      %s217 = scalar_lea.vmem %s195, %s216
      %v218 = vld [vmem:[%s217] sm:$0xf]
      %v219 = vld [vmem:[%s217 + $0x8] sm:$0xf]
      %v220 = vld [vmem:[%s217 + $0x10] sm:$0xf]
      %v221 = vld [vmem:[%s217 + $0x18] sm:$0xf]
      %v222 = vld [vmem:[%s217 + $0x20] sm:$0xf]
      %v223 = vld [vmem:[%s217 + $0x28] sm:$0xf]
      %v224 = vld [vmem:[%s217 + $0x30] sm:$0xf]
      %v225 = vld [vmem:[%s217 + $0x38] sm:$0xf]
      %v226 = vld [vmem:[%s1] sm:$0xf]
      %v227 = vld [vmem:[%s1 + $0x4] sm:$0xf]
      %v228 = vld [vmem:[%s1 + $0x8] sm:$0xf]
      %v229 = vld [vmem:[%s1 + $0xc] sm:$0xf]
      %v230 = vld [vmem:[%s1 + $0x10] sm:$0xf]
      %v231 = vld [vmem:[%s1 + $0x14] sm:$0xf]
      %v232 = vld [vmem:[%s1 + $0x18] sm:$0xf]
      %v233 = vld [vmem:[%s1 + $0x1c] sm:$0xf]
      %v234 = vld [vmem:[%s1 + $0x20] sm:$0xf]
      %v235 = vld [vmem:[%s1 + $0x24] sm:$0xf]
      %v236 = vld [vmem:[%s1 + $0x28] sm:$0xf]
      %v237 = vld [vmem:[%s1 + $0x2c] sm:$0xf]
      %v238 = vld [vmem:[%s1 + $0x30] sm:$0xf]
      %v239 = vld [vmem:[%s1 + $0x34] sm:$0xf]
      %v240 = vld [vmem:[%s1 + $0x38] sm:$0xf]
      %v241 = vld [vmem:[%s1 + $0x3c] sm:$0xf]
      %s242 = sadd.s32 %s215, 18
      %s243 = smul.addr %s242, 4
      %s244 = scalar_lea.vmem %s195, %s243
      %v245 = vld [vmem:[%s244] sm:$0xf]
      %v246 = vld [vmem:[%s244 + $0x8] sm:$0xf]
      %v247 = vld [vmem:[%s244 + $0x10] sm:$0xf]
      %v248 = vld [vmem:[%s244 + $0x18] sm:$0xf]
      %v249 = vld [vmem:[%s244 + $0x20] sm:$0xf]
      %v250 = vld [vmem:[%s244 + $0x28] sm:$0xf]
      %v251 = vld [vmem:[%s244 + $0x30] sm:$0xf]
      %v252 = vld [vmem:[%s244 + $0x38] sm:$0xf]
      %s253 = scalar_lea.vmem %s1, 64
      %v254 = vld [vmem:[%s253] sm:$0xf]
      %v255 = vld [vmem:[%s253 + $0x4] sm:$0xf]
      %v256 = vld [vmem:[%s253 + $0x8] sm:$0xf]
      %v257 = vld [vmem:[%s253 + $0xc] sm:$0xf]
      %v258 = vld [vmem:[%s253 + $0x10] sm:$0xf]
      %v259 = vld [vmem:[%s253 + $0x14] sm:$0xf]
      %v260 = vld [vmem:[%s253 + $0x18] sm:$0xf]
      %v261 = vld [vmem:[%s253 + $0x1c] sm:$0xf]
      %v262 = vld [vmem:[%s253 + $0x20] sm:$0xf]
      %v263 = vld [vmem:[%s253 + $0x24] sm:$0xf]
      %v264 = vld [vmem:[%s253 + $0x28] sm:$0xf]
      %v265 = vld [vmem:[%s253 + $0x2c] sm:$0xf]
      %v266 = vld [vmem:[%s253 + $0x30] sm:$0xf]
      %v267 = vld [vmem:[%s253 + $0x34] sm:$0xf]
      %v268 = vld [vmem:[%s253 + $0x38] sm:$0xf]
      %v269 = vld [vmem:[%s253 + $0x3c] sm:$0xf]
      %v278 = vunpack.c.l.b16 %v245
      %v279 = vunpack.c.l.b16 %v246
      %v280 = vunpack.c.l.b16 %v247
      %v281 = vunpack.c.l.b16 %v248
      %v282 = vunpack.c.l.b16 %v249
      %v283 = vunpack.c.l.b16 %v250
      %v284 = vunpack.c.l.b16 %v251
      %v285 = vunpack.c.l.b16 %v252
      %v286 = vpack.c.b16 %v279, %v278
      %v287 = vpack.c.b16 %v281, %v280
      %v288 = vpack.c.b16 %v283, %v282
      %v289 = vpack.c.b16 %v285, %v284
      %v310 = vunpack.c.l.b16 %v254
      %v311 = vunpack.c.l.b16 %v255
      %v312 = vunpack.c.l.b16 %v256
      %v313 = vunpack.c.l.b16 %v257
      %v314 = vunpack.c.l.b16 %v258
      %v315 = vunpack.c.l.b16 %v259
      %v316 = vunpack.c.l.b16 %v260
      %v317 = vunpack.c.l.b16 %v261
      %v318 = vunpack.c.l.b16 %v262
      %v319 = vunpack.c.l.b16 %v263
      %v320 = vunpack.c.l.b16 %v264
      %v321 = vunpack.c.l.b16 %v265
      %v322 = vunpack.c.l.b16 %v266
      %v323 = vunpack.c.l.b16 %v267
      %v324 = vunpack.c.l.b16 %v268
      %v325 = vunpack.c.l.b16 %v269
      %v326 = vpack.c.b16 %v311, %v310
      %v327 = vpack.c.b16 %v313, %v312
      %v328 = vpack.c.b16 %v315, %v314
      %v329 = vpack.c.b16 %v317, %v316
      %v330 = vpack.c.b16 %v319, %v318
      %v331 = vpack.c.b16 %v321, %v320
      %v332 = vpack.c.b16 %v323, %v322
      %v333 = vpack.c.b16 %v325, %v324
      %342 = vmatprep.subr.bf16.mxu0 0
      %343 = vmatpush1.bf16.msra.mxu0 %v326
      %344 = vmatprep.subr.bf16.mxu0 0
      %345 = vmatpush1.bf16.msra.mxu0 %v327
      %346 = vmatprep.subr.bf16.mxu0 0
      %347 = vmatpush1.bf16.msra.mxu0 %v328
      %348 = vmatprep.subr.bf16.mxu0 0
      %349 = vmatpush1.bf16.msra.mxu0 %v329
      %350 = vmatprep.subr.bf16.mxu0 0
      %351 = vmatpush1.bf16.msra.mxu0 %v330
      %352 = vmatprep.subr.bf16.mxu0 0
      %353 = vmatpush1.bf16.msra.mxu0 %v331
      %354 = vmatprep.subr.bf16.mxu0 0
      %355 = vmatpush1.bf16.msra.mxu0 %v332
      %356 = vmatprep.subr.bf16.mxu0 0
      %357 = vmatpush1.bf16.msra.mxu0 %v333
      %358 = vmatprep.subr.bf16.mxu0 0
      %359 = vmatpush1.bf16.msra.mxu0 0
      %360 = vmatprep.subr.bf16.mxu0 0
      %361 = vmatpush1.bf16.msra.mxu0 0
      %362 = vmatprep.subr.bf16.mxu0 0
      %363 = vmatpush1.bf16.msra.mxu0 0
      %364 = vmatprep.subr.bf16.mxu0 0
      %365 = vmatpush1.bf16.msra.mxu0 0
      %366 = vmatprep.subr.bf16.mxu0 0
      %367 = vmatpush1.bf16.msra.mxu0 0
      %368 = vmatprep.subr.bf16.mxu0 0
      %369 = vmatpush1.bf16.msra.mxu0 0
      %370 = vmatprep.subr.bf16.mxu0 0
      %371 = vmatpush1.bf16.msra.mxu0 0
      %372 = vmatprep.subr.bf16.mxu0 0
      %373 = vmatpush1.bf16.msra.mxu0 0
      %374 = vmatprep.mubr.bf16.mxu0 0
      %375 = vmatmul.mubr.bf16.gmra.mrb[0].mxu0 %v286
      %v376 = vpop.f32.mrb[0].mxu0
      %v377 = vadd.f32 0.0, %v376
      %v378 = vpop.f32.mrb[0].mxu0
      %v379 = vpop.f32.mrb[0].mxu0
      %v380 = vadd.f32 0.0, %v379
      %v381 = vpop.f32.mrb[0].mxu0
      %382 = vmatprep.mubr.bf16.mxu0 0
      %383 = vmatmul.mubr.bf16.gmra.mrb[0].mxu0 %v287
      %v384 = vpop.f32.mrb[0].mxu0
      %v385 = vadd.f32 0.0, %v384
      %v386 = vpop.f32.mrb[0].mxu0
      %v387 = vpop.f32.mrb[0].mxu0
      %v388 = vadd.f32 0.0, %v387
      %v389 = vpop.f32.mrb[0].mxu0
      %390 = vmatprep.mubr.bf16.mxu0 0
      %391 = vmatmul.mubr.bf16.gmra.mrb[0].mxu0 %v288
      %v392 = vpop.f32.mrb[0].mxu0
      %v393 = vadd.f32 0.0, %v392
      %v394 = vpop.f32.mrb[0].mxu0
      %v395 = vpop.f32.mrb[0].mxu0
      %v396 = vadd.f32 0.0, %v395
      %v397 = vpop.f32.mrb[0].mxu0
      %398 = vmatprep.mubr.bf16.mxu0 0
      %399 = vmatmul.mubr.bf16.gmra.mrb[0].mxu0 %v289
      %v400 = vpop.f32.mrb[0].mxu0
      %v401 = vadd.f32 0.0, %v400
      %v402 = vpop.f32.mrb[0].mxu0
      %v403 = vpop.f32.mrb[0].mxu0
      %v404 = vadd.f32 0.0, %v403
      %v405 = vpop.f32.mrb[0].mxu0
      %406 = vdwg.mxu0
      %v415 = vunpack.c.l.b16 %v218
      %v416 = vunpack.c.l.b16 %v219
      %v417 = vunpack.c.l.b16 %v220
      %v418 = vunpack.c.l.b16 %v221
      %v419 = vunpack.c.l.b16 %v222
      %v420 = vunpack.c.l.b16 %v223
      %v421 = vunpack.c.l.b16 %v224
      %v422 = vunpack.c.l.b16 %v225
      %v423 = vpack.c.b16 %v416, %v415
      %v424 = vpack.c.b16 %v418, %v417
      %v425 = vpack.c.b16 %v420, %v419
      %v426 = vpack.c.b16 %v422, %v421
      %v447 = vunpack.c.l.b16 %v226
      %v448 = vunpack.c.l.b16 %v227
      %v449 = vunpack.c.l.b16 %v228
      %v450 = vunpack.c.l.b16 %v229
      %v451 = vunpack.c.l.b16 %v230
      %v452 = vunpack.c.l.b16 %v231
      %v453 = vunpack.c.l.b16 %v232
      %v454 = vunpack.c.l.b16 %v233
      %v455 = vunpack.c.l.b16 %v234
      %v456 = vunpack.c.l.b16 %v235
      %v457 = vunpack.c.l.b16 %v236
      %v458 = vunpack.c.l.b16 %v237
      %v459 = vunpack.c.l.b16 %v238
      %v460 = vunpack.c.l.b16 %v239
      %v461 = vunpack.c.l.b16 %v240
      %v462 = vunpack.c.l.b16 %v241
      %v463 = vpack.c.b16 %v448, %v447
      %v464 = vpack.c.b16 %v450, %v449
      %v465 = vpack.c.b16 %v452, %v451
      %v466 = vpack.c.b16 %v454, %v453
      %v467 = vpack.c.b16 %v456, %v455
      %v468 = vpack.c.b16 %v458, %v457
      %v469 = vpack.c.b16 %v460, %v459
      %v470 = vpack.c.b16 %v462, %v461
      %479 = vmatprep.subr.bf16.mxu0 0
      %480 = vmatpush1.bf16.msra.mxu0 %v463
      %481 = vmatprep.subr.bf16.mxu0 0
      %482 = vmatpush1.bf16.msra.mxu0 %v464
      %483 = vmatprep.subr.bf16.mxu0 0
      %484 = vmatpush1.bf16.msra.mxu0 %v465
      %485 = vmatprep.subr.bf16.mxu0 0
      %486 = vmatpush1.bf16.msra.mxu0 %v466
      %487 = vmatprep.subr.bf16.mxu0 0
      %488 = vmatpush1.bf16.msra.mxu0 %v467
      %489 = vmatprep.subr.bf16.mxu0 0
      %490 = vmatpush1.bf16.msra.mxu0 %v468
      %491 = vmatprep.subr.bf16.mxu0 0
      %492 = vmatpush1.bf16.msra.mxu0 %v469
      %493 = vmatprep.subr.bf16.mxu0 0
      %494 = vmatpush1.bf16.msra.mxu0 %v470
      %495 = vmatprep.subr.bf16.mxu0 0
      %496 = vmatpush1.bf16.msra.mxu0 0
      %497 = vmatprep.subr.bf16.mxu0 0
      %498 = vmatpush1.bf16.msra.mxu0 0
      %499 = vmatprep.subr.bf16.mxu0 0
      %500 = vmatpush1.bf16.msra.mxu0 0
      %501 = vmatprep.subr.bf16.mxu0 0
      %502 = vmatpush1.bf16.msra.mxu0 0
      %503 = vmatprep.subr.bf16.mxu0 0
      %504 = vmatpush1.bf16.msra.mxu0 0
      %505 = vmatprep.subr.bf16.mxu0 0
      %506 = vmatpush1.bf16.msra.mxu0 0
      %507 = vmatprep.subr.bf16.mxu0 0
      %508 = vmatpush1.bf16.msra.mxu0 0
      %509 = vmatprep.subr.bf16.mxu0 0
      %510 = vmatpush1.bf16.msra.mxu0 0
      %511 = vmatprep.mubr.bf16.mxu0 0
      %512 = vmatmul.mubr.bf16.gmra.mrb[0].mxu0 %v423
      %v513 = vpop.f32.mrb[0].mxu0
      %v514 = vadd.f32 %v377, %v513
      %v515 = vpop.f32.mrb[0].mxu0
      %v516 = vpop.f32.mrb[0].mxu0
      %v517 = vadd.f32 %v380, %v516
      %v518 = vpop.f32.mrb[0].mxu0
      %519 = vmatprep.mubr.bf16.mxu0 0
      %520 = vmatmul.mubr.bf16.gmra.mrb[0].mxu0 %v424
      %v521 = vpop.f32.mrb[0].mxu0
      %v522 = vadd.f32 %v385, %v521
      %v523 = vpop.f32.mrb[0].mxu0
      %v524 = vpop.f32.mrb[0].mxu0
      %v525 = vadd.f32 %v388, %v524
      %v526 = vpop.f32.mrb[0].mxu0
      %527 = vmatprep.mubr.bf16.mxu0 0
      %528 = vmatmul.mubr.bf16.gmra.mrb[0].mxu0 %v425
      %v529 = vpop.f32.mrb[0].mxu0
      %v530 = vadd.f32 %v393, %v529
      %v531 = vpop.f32.mrb[0].mxu0
      %v532 = vpop.f32.mrb[0].mxu0
      %v533 = vadd.f32 %v396, %v532
      %v534 = vpop.f32.mrb[0].mxu0
      %535 = vmatprep.mubr.bf16.mxu0 0
      %536 = vmatmul.mubr.bf16.gmra.mrb[0].mxu0 %v426
      %v537 = vpop.f32.mrb[0].mxu0
      %v538 = vadd.f32 %v401, %v537
      %v539 = vpop.f32.mrb[0].mxu0
      %v540 = vpop.f32.mrb[0].mxu0
      %v541 = vadd.f32 %v404, %v540
      %v542 = vpop.f32.mrb[0].mxu0
      %543 = vdwg.mxu0
      %v544 = vld [vmem:[%s217] sm:$0xf]
      %v545 = vld [vmem:[%s217 + $0x4] sm:$0x1]
      %v546 = vld [vmem:[%s217 + $0x8] sm:$0xf]
      %v547 = vld [vmem:[%s217 + $0xc] sm:$0x1]
      %v548 = vld [vmem:[%s217 + $0x10] sm:$0xf]
      %v549 = vld [vmem:[%s217 + $0x14] sm:$0x1]
      %v550 = vld [vmem:[%s217 + $0x18] sm:$0xf]
      %v551 = vld [vmem:[%s217 + $0x1c] sm:$0x1]
      %v552 = vld [vmem:[%s217 + $0x20] sm:$0xf]
      %v553 = vld [vmem:[%s217 + $0x24] sm:$0x1]
      %v554 = vld [vmem:[%s217 + $0x28] sm:$0xf]
      %v555 = vld [vmem:[%s217 + $0x2c] sm:$0x1]
      %v556 = vld [vmem:[%s217 + $0x30] sm:$0xf]
      %v557 = vld [vmem:[%s217 + $0x34] sm:$0x1]
      %v558 = vld [vmem:[%s217 + $0x38] sm:$0xf]
      %v559 = vld [vmem:[%s217 + $0x3c] sm:$0x1]
      %vm560 = vsmask.f32 3328
      %vm561 = vsmask.f32 7440
      %vm562 = vmor %vm560, %vm561
      %v564 = vshrl.u32 %v544, 16
      %v566 = vrot.slane %v564, 4
      %v567 = vshll.u32 %v544, 16
      %v569 = vrot.slane %v567, 5
      %v570 = vor.u32 %v566, %v569
      %v571 = vrot.slane %v570, 4
      %v573 = vshll.u32 %v545, 16
      %v575 = vrot.slane %v573, 5
      %v576 = vsel %vm562, %v571, %v575
      %v578 = vshrl.u32 %v546, 16
      %v580 = vrot.slane %v578, 4
      %v581 = vshll.u32 %v546, 16
      %v583 = vrot.slane %v581, 5
      %v584 = vor.u32 %v580, %v583
      %v585 = vrot.slane %v584, 4
      %v587 = vshll.u32 %v547, 16
      %v589 = vrot.slane %v587, 5
      %v590 = vsel %vm562, %v585, %v589
      %v592 = vshrl.u32 %v548, 16
      %v594 = vrot.slane %v592, 4
      %v595 = vshll.u32 %v548, 16
      %v597 = vrot.slane %v595, 5
      %v598 = vor.u32 %v594, %v597
      %v599 = vrot.slane %v598, 4
      %v601 = vshll.u32 %v549, 16
      %v603 = vrot.slane %v601, 5
      %v604 = vsel %vm562, %v599, %v603
      %v606 = vshrl.u32 %v550, 16
      %v608 = vrot.slane %v606, 4
      %v609 = vshll.u32 %v550, 16
      %v611 = vrot.slane %v609, 5
      %v612 = vor.u32 %v608, %v611
      %v613 = vrot.slane %v612, 4
      %v615 = vshll.u32 %v551, 16
      %v617 = vrot.slane %v615, 5
      %v618 = vsel %vm562, %v613, %v617
      %v620 = vshrl.u32 %v552, 16
      %v622 = vrot.slane %v620, 4
      %v623 = vshll.u32 %v552, 16
      %v625 = vrot.slane %v623, 5
      %v626 = vor.u32 %v622, %v625
      %v627 = vrot.slane %v626, 4
      %v629 = vshll.u32 %v553, 16
      %v631 = vrot.slane %v629, 5
      %v632 = vsel %vm562, %v627, %v631
      %v634 = vshrl.u32 %v554, 16
      %v636 = vrot.slane %v634, 4
      %v637 = vshll.u32 %v554, 16
      %v639 = vrot.slane %v637, 5
      %v640 = vor.u32 %v636, %v639
      %v641 = vrot.slane %v640, 4
      %v643 = vshll.u32 %v555, 16
      %v645 = vrot.slane %v643, 5
      %v646 = vsel %vm562, %v641, %v645
      %v648 = vshrl.u32 %v556, 16
      %v650 = vrot.slane %v648, 4
      %v651 = vshll.u32 %v556, 16
      %v653 = vrot.slane %v651, 5
      %v654 = vor.u32 %v650, %v653
      %v655 = vrot.slane %v654, 4
      %v657 = vshll.u32 %v557, 16
      %v659 = vrot.slane %v657, 5
      %v660 = vsel %vm562, %v655, %v659
      %v662 = vshrl.u32 %v558, 16
      %v664 = vrot.slane %v662, 4
      %v665 = vshll.u32 %v558, 16
      %v667 = vrot.slane %v665, 5
      %v668 = vor.u32 %v664, %v667
      %v669 = vrot.slane %v668, 4
      %v671 = vshll.u32 %v559, 16
      %v673 = vrot.slane %v671, 5
      %v674 = vsel %vm562, %v669, %v673
      %s675 = scalar_lea.vmem %s1, 128
      %v676 = vld [vmem:[%s675] sm:$0xf]
      %v677 = vld [vmem:[%s675 + $0x4] sm:$0xf]
      %v678 = vld [vmem:[%s675 + $0x8] sm:$0xf]
      %v679 = vld [vmem:[%s675 + $0xc] sm:$0xf]
      %v680 = vld [vmem:[%s675 + $0x10] sm:$0xf]
      %v681 = vld [vmem:[%s675 + $0x14] sm:$0xf]
      %v682 = vld [vmem:[%s675 + $0x18] sm:$0xf]
      %v683 = vld [vmem:[%s675 + $0x1c] sm:$0xf]
      %v684 = vld [vmem:[%s675 + $0x20] sm:$0xf]
      %v685 = vld [vmem:[%s675 + $0x24] sm:$0xf]
      %v686 = vld [vmem:[%s675 + $0x28] sm:$0xf]
      %v687 = vld [vmem:[%s675 + $0x2c] sm:$0xf]
      %v688 = vld [vmem:[%s675 + $0x30] sm:$0xf]
      %v689 = vld [vmem:[%s675 + $0x34] sm:$0xf]
      %v690 = vld [vmem:[%s675 + $0x38] sm:$0xf]
      %v691 = vld [vmem:[%s675 + $0x3c] sm:$0xf]
      %v692 = vunpack.c.l.b16 %v576
      %v693 = vunpack.c.l.b16 %v590
      %v694 = vunpack.c.l.b16 %v604
      %v695 = vunpack.c.l.b16 %v618
      %v696 = vunpack.c.l.b16 %v632
      %v697 = vunpack.c.l.b16 %v646
      %v698 = vunpack.c.l.b16 %v660
      %v699 = vunpack.c.l.b16 %v674
      %v700 = vpack.c.b16 %v693, %v692
      %v701 = vpack.c.b16 %v695, %v694
      %v702 = vpack.c.b16 %v697, %v696
      %v703 = vpack.c.b16 %v699, %v698
      %v724 = vunpack.c.l.b16 %v676
      %v725 = vunpack.c.l.b16 %v677
      %v726 = vunpack.c.l.b16 %v678
      %v727 = vunpack.c.l.b16 %v679
      %v728 = vunpack.c.l.b16 %v680
      %v729 = vunpack.c.l.b16 %v681
      %v730 = vunpack.c.l.b16 %v682
      %v731 = vunpack.c.l.b16 %v683
      %v732 = vunpack.c.l.b16 %v684
      %v733 = vunpack.c.l.b16 %v685
      %v734 = vunpack.c.l.b16 %v686
      %v735 = vunpack.c.l.b16 %v687
      %v736 = vunpack.c.l.b16 %v688
      %v737 = vunpack.c.l.b16 %v689
      %v738 = vunpack.c.l.b16 %v690
      %v739 = vunpack.c.l.b16 %v691
      %v740 = vpack.c.b16 %v725, %v724
      %v741 = vpack.c.b16 %v727, %v726
      %v742 = vpack.c.b16 %v729, %v728
      %v743 = vpack.c.b16 %v731, %v730
      %v744 = vpack.c.b16 %v733, %v732
      %v745 = vpack.c.b16 %v735, %v734
      %v746 = vpack.c.b16 %v737, %v736
      %v747 = vpack.c.b16 %v739, %v738
      %756 = vmatprep.subr.bf16.mxu0 0
      %757 = vmatpush1.bf16.msra.mxu0 %v740
      %758 = vmatprep.subr.bf16.mxu0 0
      %759 = vmatpush1.bf16.msra.mxu0 %v741
      %760 = vmatprep.subr.bf16.mxu0 0
      %761 = vmatpush1.bf16.msra.mxu0 %v742
      %762 = vmatprep.subr.bf16.mxu0 0
      %763 = vmatpush1.bf16.msra.mxu0 %v743
      %764 = vmatprep.subr.bf16.mxu0 0
      %765 = vmatpush1.bf16.msra.mxu0 %v744
      %766 = vmatprep.subr.bf16.mxu0 0
      %767 = vmatpush1.bf16.msra.mxu0 %v745
      %768 = vmatprep.subr.bf16.mxu0 0
      %769 = vmatpush1.bf16.msra.mxu0 %v746
      %770 = vmatprep.subr.bf16.mxu0 0
      %771 = vmatpush1.bf16.msra.mxu0 %v747
      %772 = vmatprep.subr.bf16.mxu0 0
      %773 = vmatpush1.bf16.msra.mxu0 0
      %774 = vmatprep.subr.bf16.mxu0 0
      %775 = vmatpush1.bf16.msra.mxu0 0
      %776 = vmatprep.subr.bf16.mxu0 0
      %777 = vmatpush1.bf16.msra.mxu0 0
      %778 = vmatprep.subr.bf16.mxu0 0
      %779 = vmatpush1.bf16.msra.mxu0 0
      %780 = vmatprep.subr.bf16.mxu0 0
      %781 = vmatpush1.bf16.msra.mxu0 0
      %782 = vmatprep.subr.bf16.mxu0 0
      %783 = vmatpush1.bf16.msra.mxu0 0
      %784 = vmatprep.subr.bf16.mxu0 0
      %785 = vmatpush1.bf16.msra.mxu0 0
      %786 = vmatprep.subr.bf16.mxu0 0
      %787 = vmatpush1.bf16.msra.mxu0 0
      %788 = vmatprep.mubr.bf16.mxu0 0
      %789 = vmatmul.mubr.bf16.gmra.mrb[0].mxu0 %v700
      %v790 = vpop.f32.mrb[0].mxu0
      %v791 = vadd.f32 0.0, %v790
      %v792 = vpop.f32.mrb[0].mxu0
      %v793 = vpop.f32.mrb[0].mxu0
      %v794 = vadd.f32 0.0, %v793
      %v795 = vpop.f32.mrb[0].mxu0
      %796 = vmatprep.mubr.bf16.mxu0 0
      %797 = vmatmul.mubr.bf16.gmra.mrb[0].mxu0 %v701
      %v798 = vpop.f32.mrb[0].mxu0
      %v799 = vadd.f32 0.0, %v798
      %v800 = vpop.f32.mrb[0].mxu0
      %v801 = vpop.f32.mrb[0].mxu0
      %v802 = vadd.f32 0.0, %v801
      %v803 = vpop.f32.mrb[0].mxu0
      %804 = vmatprep.mubr.bf16.mxu0 0
      %805 = vmatmul.mubr.bf16.gmra.mrb[0].mxu0 %v702
      %v806 = vpop.f32.mrb[0].mxu0
      %v807 = vadd.f32 0.0, %v806
      %v808 = vpop.f32.mrb[0].mxu0
      %v809 = vpop.f32.mrb[0].mxu0
      %v810 = vadd.f32 0.0, %v809
      %v811 = vpop.f32.mrb[0].mxu0
      %812 = vmatprep.mubr.bf16.mxu0 0
      %813 = vmatmul.mubr.bf16.gmra.mrb[0].mxu0 %v703
      %v814 = vpop.f32.mrb[0].mxu0
      %v815 = vadd.f32 0.0, %v814
      %v816 = vpop.f32.mrb[0].mxu0
      %v817 = vpop.f32.mrb[0].mxu0
      %v818 = vadd.f32 0.0, %v817
      %v819 = vpop.f32.mrb[0].mxu0
      %820 = vdwg.mxu0
      %v821 = vadd.f32 %v514, %v791
      %v822 = vadd.f32 %v517, %v794
      %v823 = vadd.f32 %v522, %v799
      %v824 = vadd.f32 %v525, %v802
      %v825 = vadd.f32 %v530, %v807
      %v826 = vadd.f32 %v533, %v810
      %v827 = vadd.f32 %v538, %v815
      %v828 = vadd.f32 %v541, %v818
      %s829 = sadd.s32 %s215, 36
      %s830 = smul.addr %s829, 4
      %s831 = scalar_lea.vmem %s195, %s830
      %v832 = vld [vmem:[%s831] sm:$0xf]
      %v833 = vld [vmem:[%s831 + $0x8] sm:$0xf]
      %v834 = vld [vmem:[%s831 + $0x10] sm:$0xf]
      %v835 = vld [vmem:[%s831 + $0x18] sm:$0xf]
      %v836 = vld [vmem:[%s831 + $0x20] sm:$0xf]
      %v837 = vld [vmem:[%s831 + $0x28] sm:$0xf]
      %v838 = vld [vmem:[%s831 + $0x30] sm:$0xf]
      %v839 = vld [vmem:[%s831 + $0x38] sm:$0xf]
      %s840 = scalar_lea.vmem %s1, 192
      %v841 = vld [vmem:[%s840] sm:$0xf]
      %v842 = vld [vmem:[%s840 + $0x4] sm:$0xf]
      %v843 = vld [vmem:[%s840 + $0x8] sm:$0xf]
      %v844 = vld [vmem:[%s840 + $0xc] sm:$0xf]
      %v845 = vld [vmem:[%s840 + $0x10] sm:$0xf]
      %v846 = vld [vmem:[%s840 + $0x14] sm:$0xf]
      %v847 = vld [vmem:[%s840 + $0x18] sm:$0xf]
      %v848 = vld [vmem:[%s840 + $0x1c] sm:$0xf]
      %v849 = vld [vmem:[%s840 + $0x20] sm:$0xf]
      %v850 = vld [vmem:[%s840 + $0x24] sm:$0xf]
      %v851 = vld [vmem:[%s840 + $0x28] sm:$0xf]
      %v852 = vld [vmem:[%s840 + $0x2c] sm:$0xf]
      %v853 = vld [vmem:[%s840 + $0x30] sm:$0xf]
      %v854 = vld [vmem:[%s840 + $0x34] sm:$0xf]
      %v855 = vld [vmem:[%s840 + $0x38] sm:$0xf]
      %v856 = vld [vmem:[%s840 + $0x3c] sm:$0xf]
      %v865 = vunpack.c.l.b16 %v832
      %v866 = vunpack.c.l.b16 %v833
      %v867 = vunpack.c.l.b16 %v834
      %v868 = vunpack.c.l.b16 %v835
      %v869 = vunpack.c.l.b16 %v836
      %v870 = vunpack.c.l.b16 %v837
      %v871 = vunpack.c.l.b16 %v838
      %v872 = vunpack.c.l.b16 %v839
      %v873 = vpack.c.b16 %v866, %v865
      %v874 = vpack.c.b16 %v868, %v867
      %v875 = vpack.c.b16 %v870, %v869
      %v876 = vpack.c.b16 %v872, %v871
      %v897 = vunpack.c.l.b16 %v841
      %v898 = vunpack.c.l.b16 %v842
      %v899 = vunpack.c.l.b16 %v843
      %v900 = vunpack.c.l.b16 %v844
      %v901 = vunpack.c.l.b16 %v845
      %v902 = vunpack.c.l.b16 %v846
      %v903 = vunpack.c.l.b16 %v847
      %v904 = vunpack.c.l.b16 %v848
      %v905 = vunpack.c.l.b16 %v849
      %v906 = vunpack.c.l.b16 %v850
      %v907 = vunpack.c.l.b16 %v851
      %v908 = vunpack.c.l.b16 %v852
      %v909 = vunpack.c.l.b16 %v853
      %v910 = vunpack.c.l.b16 %v854
      %v911 = vunpack.c.l.b16 %v855
      %v912 = vunpack.c.l.b16 %v856
      %v913 = vpack.c.b16 %v898, %v897
      %v914 = vpack.c.b16 %v900, %v899
      %v915 = vpack.c.b16 %v902, %v901
      %v916 = vpack.c.b16 %v904, %v903
      %v917 = vpack.c.b16 %v906, %v905
      %v918 = vpack.c.b16 %v908, %v907
      %v919 = vpack.c.b16 %v910, %v909
      %v920 = vpack.c.b16 %v912, %v911
      %929 = vmatprep.subr.bf16.mxu0 0
      %930 = vmatpush1.bf16.msra.mxu0 %v913
      %931 = vmatprep.subr.bf16.mxu0 0
      %932 = vmatpush1.bf16.msra.mxu0 %v914
      %933 = vmatprep.subr.bf16.mxu0 0
      %934 = vmatpush1.bf16.msra.mxu0 %v915
      %935 = vmatprep.subr.bf16.mxu0 0
      %936 = vmatpush1.bf16.msra.mxu0 %v916
      %937 = vmatprep.subr.bf16.mxu0 0
      %938 = vmatpush1.bf16.msra.mxu0 %v917
      %939 = vmatprep.subr.bf16.mxu0 0
      %940 = vmatpush1.bf16.msra.mxu0 %v918
      %941 = vmatprep.subr.bf16.mxu0 0
      %942 = vmatpush1.bf16.msra.mxu0 %v919
      %943 = vmatprep.subr.bf16.mxu0 0
      %944 = vmatpush1.bf16.msra.mxu0 %v920
      %945 = vmatprep.subr.bf16.mxu0 0
      %946 = vmatpush1.bf16.msra.mxu0 0
      %947 = vmatprep.subr.bf16.mxu0 0
      %948 = vmatpush1.bf16.msra.mxu0 0
      %949 = vmatprep.subr.bf16.mxu0 0
      %950 = vmatpush1.bf16.msra.mxu0 0
      %951 = vmatprep.subr.bf16.mxu0 0
      %952 = vmatpush1.bf16.msra.mxu0 0
      %953 = vmatprep.subr.bf16.mxu0 0
      %954 = vmatpush1.bf16.msra.mxu0 0
      %955 = vmatprep.subr.bf16.mxu0 0
      %956 = vmatpush1.bf16.msra.mxu0 0
      %957 = vmatprep.subr.bf16.mxu0 0
      %958 = vmatpush1.bf16.msra.mxu0 0
      %959 = vmatprep.subr.bf16.mxu0 0
      %960 = vmatpush1.bf16.msra.mxu0 0
      %961 = vmatprep.mubr.bf16.mxu0 0
      %962 = vmatmul.mubr.bf16.gmra.mrb[0].mxu0 %v873
      %v963 = vpop.f32.mrb[0].mxu0
      %v964 = vadd.f32 0.0, %v963
      %v965 = vpop.f32.mrb[0].mxu0
      %v966 = vpop.f32.mrb[0].mxu0
      %v967 = vadd.f32 0.0, %v966
      %v968 = vpop.f32.mrb[0].mxu0
      %969 = vmatprep.mubr.bf16.mxu0 0
      %970 = vmatmul.mubr.bf16.gmra.mrb[0].mxu0 %v874
      %v971 = vpop.f32.mrb[0].mxu0
      %v972 = vadd.f32 0.0, %v971
      %v973 = vpop.f32.mrb[0].mxu0
      %v974 = vpop.f32.mrb[0].mxu0
      %v975 = vadd.f32 0.0, %v974
      %v976 = vpop.f32.mrb[0].mxu0
      %977 = vmatprep.mubr.bf16.mxu0 0
      %978 = vmatmul.mubr.bf16.gmra.mrb[0].mxu0 %v875
      %v979 = vpop.f32.mrb[0].mxu0
      %v980 = vadd.f32 0.0, %v979
      %v981 = vpop.f32.mrb[0].mxu0
      %v982 = vpop.f32.mrb[0].mxu0
      %v983 = vadd.f32 0.0, %v982
      %v984 = vpop.f32.mrb[0].mxu0
      %985 = vmatprep.mubr.bf16.mxu0 0
      %986 = vmatmul.mubr.bf16.gmra.mrb[0].mxu0 %v876
      %v987 = vpop.f32.mrb[0].mxu0
      %v988 = vadd.f32 0.0, %v987
      %v989 = vpop.f32.mrb[0].mxu0
      %v990 = vpop.f32.mrb[0].mxu0
      %v991 = vadd.f32 0.0, %v990
      %v992 = vpop.f32.mrb[0].mxu0
      %993 = vdwg.mxu0
      %v994 = vadd.f32 %v821, %v964
      %v995 = vadd.f32 %v822, %v967
      %v996 = vadd.f32 %v823, %v972
      %v997 = vadd.f32 %v824, %v975
      %v998 = vadd.f32 %v825, %v980
      %v999 = vadd.f32 %v826, %v983
      %v1000 = vadd.f32 %v827, %v988
      %v1001 = vadd.f32 %v828, %v991
      %s1002 = sadd.s32 %s215, 54
      %s1003 = smul.addr %s1002, 4
      %s1004 = scalar_lea.vmem %s195, %s1003
      %v1005 = vld [vmem:[%s1004] sm:$0xf]
      %v1006 = vld [vmem:[%s1004 + $0x8] sm:$0xf]
      %v1007 = vld [vmem:[%s1004 + $0x10] sm:$0xf]
      %v1008 = vld [vmem:[%s1004 + $0x18] sm:$0xf]
      %v1009 = vld [vmem:[%s1004 + $0x20] sm:$0xf]
      %v1010 = vld [vmem:[%s1004 + $0x28] sm:$0xf]
      %v1011 = vld [vmem:[%s1004 + $0x30] sm:$0xf]
      %v1012 = vld [vmem:[%s1004 + $0x38] sm:$0xf]
      %s1013 = scalar_lea.vmem %s1, 256
      %v1014 = vld [vmem:[%s1013] sm:$0xf]
      %v1015 = vld [vmem:[%s1013 + $0x4] sm:$0xf]
      %v1016 = vld [vmem:[%s1013 + $0x8] sm:$0xf]
      %v1017 = vld [vmem:[%s1013 + $0xc] sm:$0xf]
      %v1018 = vld [vmem:[%s1013 + $0x10] sm:$0xf]
      %v1019 = vld [vmem:[%s1013 + $0x14] sm:$0xf]
      %v1020 = vld [vmem:[%s1013 + $0x18] sm:$0xf]
      %v1021 = vld [vmem:[%s1013 + $0x1c] sm:$0xf]
      %v1022 = vld [vmem:[%s1013 + $0x20] sm:$0xf]
      %v1023 = vld [vmem:[%s1013 + $0x24] sm:$0xf]
      %v1024 = vld [vmem:[%s1013 + $0x28] sm:$0xf]
      %v1025 = vld [vmem:[%s1013 + $0x2c] sm:$0xf]
      %v1026 = vld [vmem:[%s1013 + $0x30] sm:$0xf]
      %v1027 = vld [vmem:[%s1013 + $0x34] sm:$0xf]
      %v1028 = vld [vmem:[%s1013 + $0x38] sm:$0xf]
      %v1029 = vld [vmem:[%s1013 + $0x3c] sm:$0xf]
      %v1038 = vunpack.c.l.b16 %v1005
      %v1039 = vunpack.c.l.b16 %v1006
      %v1040 = vunpack.c.l.b16 %v1007
      %v1041 = vunpack.c.l.b16 %v1008
      %v1042 = vunpack.c.l.b16 %v1009
      %v1043 = vunpack.c.l.b16 %v1010
      %v1044 = vunpack.c.l.b16 %v1011
      %v1045 = vunpack.c.l.b16 %v1012
      %v1046 = vpack.c.b16 %v1039, %v1038
      %v1047 = vpack.c.b16 %v1041, %v1040
      %v1048 = vpack.c.b16 %v1043, %v1042
      %v1049 = vpack.c.b16 %v1045, %v1044
      %v1070 = vunpack.c.l.b16 %v1014
      %v1071 = vunpack.c.l.b16 %v1015
      %v1072 = vunpack.c.l.b16 %v1016
      %v1073 = vunpack.c.l.b16 %v1017
      %v1074 = vunpack.c.l.b16 %v1018
      %v1075 = vunpack.c.l.b16 %v1019
      %v1076 = vunpack.c.l.b16 %v1020
      %v1077 = vunpack.c.l.b16 %v1021
      %v1078 = vunpack.c.l.b16 %v1022
      %v1079 = vunpack.c.l.b16 %v1023
      %v1080 = vunpack.c.l.b16 %v1024
      %v1081 = vunpack.c.l.b16 %v1025
      %v1082 = vunpack.c.l.b16 %v1026
      %v1083 = vunpack.c.l.b16 %v1027
      %v1084 = vunpack.c.l.b16 %v1028
      %v1085 = vunpack.c.l.b16 %v1029
      %v1086 = vpack.c.b16 %v1071, %v1070
      %v1087 = vpack.c.b16 %v1073, %v1072
      %v1088 = vpack.c.b16 %v1075, %v1074
      %v1089 = vpack.c.b16 %v1077, %v1076
      %v1090 = vpack.c.b16 %v1079, %v1078
      %v1091 = vpack.c.b16 %v1081, %v1080
      %v1092 = vpack.c.b16 %v1083, %v1082
      %v1093 = vpack.c.b16 %v1085, %v1084
      %1102 = vmatprep.subr.bf16.mxu0 0
      %1103 = vmatpush1.bf16.msra.mxu0 %v1086
      %1104 = vmatprep.subr.bf16.mxu0 0
      %1105 = vmatpush1.bf16.msra.mxu0 %v1087
      %1106 = vmatprep.subr.bf16.mxu0 0
      %1107 = vmatpush1.bf16.msra.mxu0 %v1088
      %1108 = vmatprep.subr.bf16.mxu0 0
      %1109 = vmatpush1.bf16.msra.mxu0 %v1089
      %1110 = vmatprep.subr.bf16.mxu0 0
      %1111 = vmatpush1.bf16.msra.mxu0 %v1090
      %1112 = vmatprep.subr.bf16.mxu0 0
      %1113 = vmatpush1.bf16.msra.mxu0 %v1091
      %1114 = vmatprep.subr.bf16.mxu0 0
      %1115 = vmatpush1.bf16.msra.mxu0 %v1092
      %1116 = vmatprep.subr.bf16.mxu0 0
      %1117 = vmatpush1.bf16.msra.mxu0 %v1093
      %1118 = vmatprep.subr.bf16.mxu0 0
      %1119 = vmatpush1.bf16.msra.mxu0 0
      %1120 = vmatprep.subr.bf16.mxu0 0
      %1121 = vmatpush1.bf16.msra.mxu0 0
      %1122 = vmatprep.subr.bf16.mxu0 0
      %1123 = vmatpush1.bf16.msra.mxu0 0
      %1124 = vmatprep.subr.bf16.mxu0 0
      %1125 = vmatpush1.bf16.msra.mxu0 0
      %1126 = vmatprep.subr.bf16.mxu0 0
      %1127 = vmatpush1.bf16.msra.mxu0 0
      %1128 = vmatprep.subr.bf16.mxu0 0
      %1129 = vmatpush1.bf16.msra.mxu0 0
      %1130 = vmatprep.subr.bf16.mxu0 0
      %1131 = vmatpush1.bf16.msra.mxu0 0
      %1132 = vmatprep.subr.bf16.mxu0 0
      %1133 = vmatpush1.bf16.msra.mxu0 0
      %1134 = vmatprep.mubr.bf16.mxu0 0
      %1135 = vmatmul.mubr.bf16.gmra.mrb[0].mxu0 %v1046
      %v1136 = vpop.f32.mrb[0].mxu0
      %v1137 = vadd.f32 0.0, %v1136
      %v1138 = vpop.f32.mrb[0].mxu0
      %v1139 = vpop.f32.mrb[0].mxu0
      %v1140 = vadd.f32 0.0, %v1139
      %v1141 = vpop.f32.mrb[0].mxu0
      %1142 = vmatprep.mubr.bf16.mxu0 0
      %1143 = vmatmul.mubr.bf16.gmra.mrb[0].mxu0 %v1047
      %v1144 = vpop.f32.mrb[0].mxu0
      %v1145 = vadd.f32 0.0, %v1144
      %v1146 = vpop.f32.mrb[0].mxu0
      %v1147 = vpop.f32.mrb[0].mxu0
      %v1148 = vadd.f32 0.0, %v1147
      %v1149 = vpop.f32.mrb[0].mxu0
      %1150 = vmatprep.mubr.bf16.mxu0 0
      %1151 = vmatmul.mubr.bf16.gmra.mrb[0].mxu0 %v1048
      %v1152 = vpop.f32.mrb[0].mxu0
      %v1153 = vadd.f32 0.0, %v1152
      %v1154 = vpop.f32.mrb[0].mxu0
      %v1155 = vpop.f32.mrb[0].mxu0
      %v1156 = vadd.f32 0.0, %v1155
      %v1157 = vpop.f32.mrb[0].mxu0
      %1158 = vmatprep.mubr.bf16.mxu0 0
      %1159 = vmatmul.mubr.bf16.gmra.mrb[0].mxu0 %v1049
      %v1160 = vpop.f32.mrb[0].mxu0
      %v1161 = vadd.f32 0.0, %v1160
      %v1162 = vpop.f32.mrb[0].mxu0
      %v1163 = vpop.f32.mrb[0].mxu0
      %v1164 = vadd.f32 0.0, %v1163
      %v1165 = vpop.f32.mrb[0].mxu0
      %1166 = vdwg.mxu0
      %v1167 = vadd.f32 %v994, %v1137
      %v1168 = vadd.f32 %v995, %v1140
      %v1169 = vadd.f32 %v996, %v1145
      %v1170 = vadd.f32 %v997, %v1148
      %v1171 = vadd.f32 %v998, %v1153
      %v1172 = vadd.f32 %v999, %v1156
      %v1173 = vadd.f32 %v1000, %v1161
      %v1174 = vadd.f32 %v1001, %v1164
      %v1175 = vld [vmem:[%s831] sm:$0xf]
      %v1176 = vld [vmem:[%s831 + $0x4] sm:$0x1]
      %v1177 = vld [vmem:[%s831 + $0x8] sm:$0xf]
      %v1178 = vld [vmem:[%s831 + $0xc] sm:$0x1]
      %v1179 = vld [vmem:[%s831 + $0x10] sm:$0xf]
      %v1180 = vld [vmem:[%s831 + $0x14] sm:$0x1]
      %v1181 = vld [vmem:[%s831 + $0x18] sm:$0xf]
      %v1182 = vld [vmem:[%s831 + $0x1c] sm:$0x1]
      %v1183 = vld [vmem:[%s831 + $0x20] sm:$0xf]
      %v1184 = vld [vmem:[%s831 + $0x24] sm:$0x1]
      %v1185 = vld [vmem:[%s831 + $0x28] sm:$0xf]
      %v1186 = vld [vmem:[%s831 + $0x2c] sm:$0x1]
      %v1187 = vld [vmem:[%s831 + $0x30] sm:$0xf]
      %v1188 = vld [vmem:[%s831 + $0x34] sm:$0x1]
      %v1189 = vld [vmem:[%s831 + $0x38] sm:$0xf]
      %v1190 = vld [vmem:[%s831 + $0x3c] sm:$0x1]
      %v1192 = vshrl.u32 %v1175, 16
      %v1194 = vrot.slane %v1192, 4
      %v1195 = vshll.u32 %v1175, 16
      %v1197 = vrot.slane %v1195, 5
      %v1198 = vor.u32 %v1194, %v1197
      %v1199 = vrot.slane %v1198, 4
      %v1201 = vshll.u32 %v1176, 16
      %v1203 = vrot.slane %v1201, 5
      %v1204 = vsel %vm562, %v1199, %v1203
      %v1206 = vshrl.u32 %v1177, 16
      %v1208 = vrot.slane %v1206, 4
      %v1209 = vshll.u32 %v1177, 16
      %v1211 = vrot.slane %v1209, 5
      %v1212 = vor.u32 %v1208, %v1211
      %v1213 = vrot.slane %v1212, 4
      %v1215 = vshll.u32 %v1178, 16
      %v1217 = vrot.slane %v1215, 5
      %v1218 = vsel %vm562, %v1213, %v1217
      %v1220 = vshrl.u32 %v1179, 16
      %v1222 = vrot.slane %v1220, 4
      %v1223 = vshll.u32 %v1179, 16
      %v1225 = vrot.slane %v1223, 5
      %v1226 = vor.u32 %v1222, %v1225
      %v1227 = vrot.slane %v1226, 4
      %v1229 = vshll.u32 %v1180, 16
      %v1231 = vrot.slane %v1229, 5
      %v1232 = vsel %vm562, %v1227, %v1231
      %v1234 = vshrl.u32 %v1181, 16
      %v1236 = vrot.slane %v1234, 4
      %v1237 = vshll.u32 %v1181, 16
      %v1239 = vrot.slane %v1237, 5
      %v1240 = vor.u32 %v1236, %v1239
      %v1241 = vrot.slane %v1240, 4
      %v1243 = vshll.u32 %v1182, 16
      %v1245 = vrot.slane %v1243, 5
      %v1246 = vsel %vm562, %v1241, %v1245
      %v1248 = vshrl.u32 %v1183, 16
      %v1250 = vrot.slane %v1248, 4
      %v1251 = vshll.u32 %v1183, 16
      %v1253 = vrot.slane %v1251, 5
      %v1254 = vor.u32 %v1250, %v1253
      %v1255 = vrot.slane %v1254, 4
      %v1257 = vshll.u32 %v1184, 16
      %v1259 = vrot.slane %v1257, 5
      %v1260 = vsel %vm562, %v1255, %v1259
      %v1262 = vshrl.u32 %v1185, 16
      %v1264 = vrot.slane %v1262, 4
      %v1265 = vshll.u32 %v1185, 16
      %v1267 = vrot.slane %v1265, 5
      %v1268 = vor.u32 %v1264, %v1267
      %v1269 = vrot.slane %v1268, 4
      %v1271 = vshll.u32 %v1186, 16
      %v1273 = vrot.slane %v1271, 5
      %v1274 = vsel %vm562, %v1269, %v1273
      %v1276 = vshrl.u32 %v1187, 16
      %v1278 = vrot.slane %v1276, 4
      %v1279 = vshll.u32 %v1187, 16
      %v1281 = vrot.slane %v1279, 5
      %v1282 = vor.u32 %v1278, %v1281
      %v1283 = vrot.slane %v1282, 4
      %v1285 = vshll.u32 %v1188, 16
      %v1287 = vrot.slane %v1285, 5
      %v1288 = vsel %vm562, %v1283, %v1287
      %v1290 = vshrl.u32 %v1189, 16
      %v1292 = vrot.slane %v1290, 4
      %v1293 = vshll.u32 %v1189, 16
      %v1295 = vrot.slane %v1293, 5
      %v1296 = vor.u32 %v1292, %v1295
      %v1297 = vrot.slane %v1296, 4
      %v1299 = vshll.u32 %v1190, 16
      %v1301 = vrot.slane %v1299, 5
      %v1302 = vsel %vm562, %v1297, %v1301
      %s1303 = scalar_lea.vmem %s1, 320
      %v1304 = vld [vmem:[%s1303] sm:$0xf]
      %v1305 = vld [vmem:[%s1303 + $0x4] sm:$0xf]
      %v1306 = vld [vmem:[%s1303 + $0x8] sm:$0xf]
      %v1307 = vld [vmem:[%s1303 + $0xc] sm:$0xf]
      %v1308 = vld [vmem:[%s1303 + $0x10] sm:$0xf]
      %v1309 = vld [vmem:[%s1303 + $0x14] sm:$0xf]
      %v1310 = vld [vmem:[%s1303 + $0x18] sm:$0xf]
      %v1311 = vld [vmem:[%s1303 + $0x1c] sm:$0xf]
      %v1312 = vld [vmem:[%s1303 + $0x20] sm:$0xf]
      %v1313 = vld [vmem:[%s1303 + $0x24] sm:$0xf]
      %v1314 = vld [vmem:[%s1303 + $0x28] sm:$0xf]
      %v1315 = vld [vmem:[%s1303 + $0x2c] sm:$0xf]
      %v1316 = vld [vmem:[%s1303 + $0x30] sm:$0xf]
      %v1317 = vld [vmem:[%s1303 + $0x34] sm:$0xf]
      %v1318 = vld [vmem:[%s1303 + $0x38] sm:$0xf]
      %v1319 = vld [vmem:[%s1303 + $0x3c] sm:$0xf]
      %v1320 = vunpack.c.l.b16 %v1204
      %v1321 = vunpack.c.l.b16 %v1218
      %v1322 = vunpack.c.l.b16 %v1232
      %v1323 = vunpack.c.l.b16 %v1246
      %v1324 = vunpack.c.l.b16 %v1260
      %v1325 = vunpack.c.l.b16 %v1274
      %v1326 = vunpack.c.l.b16 %v1288
      %v1327 = vunpack.c.l.b16 %v1302
      %v1328 = vpack.c.b16 %v1321, %v1320
      %v1329 = vpack.c.b16 %v1323, %v1322
      %v1330 = vpack.c.b16 %v1325, %v1324
      %v1331 = vpack.c.b16 %v1327, %v1326
      %v1352 = vunpack.c.l.b16 %v1304
      %v1353 = vunpack.c.l.b16 %v1305
      %v1354 = vunpack.c.l.b16 %v1306
      %v1355 = vunpack.c.l.b16 %v1307
      %v1356 = vunpack.c.l.b16 %v1308
      %v1357 = vunpack.c.l.b16 %v1309
      %v1358 = vunpack.c.l.b16 %v1310
      %v1359 = vunpack.c.l.b16 %v1311
      %v1360 = vunpack.c.l.b16 %v1312
      %v1361 = vunpack.c.l.b16 %v1313
      %v1362 = vunpack.c.l.b16 %v1314
      %v1363 = vunpack.c.l.b16 %v1315
      %v1364 = vunpack.c.l.b16 %v1316
      %v1365 = vunpack.c.l.b16 %v1317
      %v1366 = vunpack.c.l.b16 %v1318
      %v1367 = vunpack.c.l.b16 %v1319
      %v1368 = vpack.c.b16 %v1353, %v1352
      %v1369 = vpack.c.b16 %v1355, %v1354
      %v1370 = vpack.c.b16 %v1357, %v1356
      %v1371 = vpack.c.b16 %v1359, %v1358
      %v1372 = vpack.c.b16 %v1361, %v1360
      %v1373 = vpack.c.b16 %v1363, %v1362
      %v1374 = vpack.c.b16 %v1365, %v1364
      %v1375 = vpack.c.b16 %v1367, %v1366
      %1384 = vmatprep.subr.bf16.mxu0 0
      %1385 = vmatpush1.bf16.msra.mxu0 %v1368
      %1386 = vmatprep.subr.bf16.mxu0 0
      %1387 = vmatpush1.bf16.msra.mxu0 %v1369
      %1388 = vmatprep.subr.bf16.mxu0 0
      %1389 = vmatpush1.bf16.msra.mxu0 %v1370
      %1390 = vmatprep.subr.bf16.mxu0 0
      %1391 = vmatpush1.bf16.msra.mxu0 %v1371
      %1392 = vmatprep.subr.bf16.mxu0 0
      %1393 = vmatpush1.bf16.msra.mxu0 %v1372
      %1394 = vmatprep.subr.bf16.mxu0 0
      %1395 = vmatpush1.bf16.msra.mxu0 %v1373
      %1396 = vmatprep.subr.bf16.mxu0 0
      %1397 = vmatpush1.bf16.msra.mxu0 %v1374
      %1398 = vmatprep.subr.bf16.mxu0 0
      %1399 = vmatpush1.bf16.msra.mxu0 %v1375
      %1400 = vmatprep.subr.bf16.mxu0 0
      %1401 = vmatpush1.bf16.msra.mxu0 0
      %1402 = vmatprep.subr.bf16.mxu0 0
      %1403 = vmatpush1.bf16.msra.mxu0 0
      %1404 = vmatprep.subr.bf16.mxu0 0
      %1405 = vmatpush1.bf16.msra.mxu0 0
      %1406 = vmatprep.subr.bf16.mxu0 0
      %1407 = vmatpush1.bf16.msra.mxu0 0
      %1408 = vmatprep.subr.bf16.mxu0 0
      %1409 = vmatpush1.bf16.msra.mxu0 0
      %1410 = vmatprep.subr.bf16.mxu0 0
      %1411 = vmatpush1.bf16.msra.mxu0 0
      %1412 = vmatprep.subr.bf16.mxu0 0
      %1413 = vmatpush1.bf16.msra.mxu0 0
      %1414 = vmatprep.subr.bf16.mxu0 0
      %1415 = vmatpush1.bf16.msra.mxu0 0
      %1416 = vmatprep.mubr.bf16.mxu0 0
      %1417 = vmatmul.mubr.bf16.gmra.mrb[0].mxu0 %v1328
      %v1418 = vpop.f32.mrb[0].mxu0
      %v1419 = vadd.f32 0.0, %v1418
      %v1420 = vpop.f32.mrb[0].mxu0
      %v1421 = vpop.f32.mrb[0].mxu0
      %v1422 = vadd.f32 0.0, %v1421
      %v1423 = vpop.f32.mrb[0].mxu0
      %1424 = vmatprep.mubr.bf16.mxu0 0
      %1425 = vmatmul.mubr.bf16.gmra.mrb[0].mxu0 %v1329
      %v1426 = vpop.f32.mrb[0].mxu0
      %v1427 = vadd.f32 0.0, %v1426
      %v1428 = vpop.f32.mrb[0].mxu0
      %v1429 = vpop.f32.mrb[0].mxu0
      %v1430 = vadd.f32 0.0, %v1429
      %v1431 = vpop.f32.mrb[0].mxu0
      %1432 = vmatprep.mubr.bf16.mxu0 0
      %1433 = vmatmul.mubr.bf16.gmra.mrb[0].mxu0 %v1330
      %v1434 = vpop.f32.mrb[0].mxu0
      %v1435 = vadd.f32 0.0, %v1434
      %v1436 = vpop.f32.mrb[0].mxu0
      %v1437 = vpop.f32.mrb[0].mxu0
      %v1438 = vadd.f32 0.0, %v1437
      %v1439 = vpop.f32.mrb[0].mxu0
      %1440 = vmatprep.mubr.bf16.mxu0 0
      %1441 = vmatmul.mubr.bf16.gmra.mrb[0].mxu0 %v1331
      %v1442 = vpop.f32.mrb[0].mxu0
      %v1443 = vadd.f32 0.0, %v1442
      %v1444 = vpop.f32.mrb[0].mxu0
      %v1445 = vpop.f32.mrb[0].mxu0
      %v1446 = vadd.f32 0.0, %v1445
      %v1447 = vpop.f32.mrb[0].mxu0
      %1448 = vdwg.mxu0
      %v1449 = vadd.f32 %v1167, %v1419
      %v1450 = vadd.f32 %v1168, %v1422
      %v1451 = vadd.f32 %v1169, %v1427
      %v1452 = vadd.f32 %v1170, %v1430
      %v1453 = vadd.f32 %v1171, %v1435
      %v1454 = vadd.f32 %v1172, %v1438
      %v1455 = vadd.f32 %v1173, %v1443
      %v1456 = vadd.f32 %v1174, %v1446
      %s1457 = sadd.s32 %s214, 1
      %s1458 = smul.u32 %s1457, 2
      %s1459 = smul.addr %s1458, 4
      %s1460 = scalar_lea.vmem %s195, %s1459
      %v1461 = vld [vmem:[%s1460] sm:$0xf]
      %v1462 = vld [vmem:[%s1460 + $0x8] sm:$0xf]
      %v1463 = vld [vmem:[%s1460 + $0x10] sm:$0xf]
      %v1464 = vld [vmem:[%s1460 + $0x18] sm:$0xf]
      %v1465 = vld [vmem:[%s1460 + $0x20] sm:$0xf]
      %v1466 = vld [vmem:[%s1460 + $0x28] sm:$0xf]
      %v1467 = vld [vmem:[%s1460 + $0x30] sm:$0xf]
      %v1468 = vld [vmem:[%s1460 + $0x38] sm:$0xf]
      %s1469 = scalar_lea.vmem %s1, 384
      %v1470 = vld [vmem:[%s1469] sm:$0xf]
      %v1471 = vld [vmem:[%s1469 + $0x4] sm:$0xf]
      %v1472 = vld [vmem:[%s1469 + $0x8] sm:$0xf]
      %v1473 = vld [vmem:[%s1469 + $0xc] sm:$0xf]
      %v1474 = vld [vmem:[%s1469 + $0x10] sm:$0xf]
      %v1475 = vld [vmem:[%s1469 + $0x14] sm:$0xf]
      %v1476 = vld [vmem:[%s1469 + $0x18] sm:$0xf]
      %v1477 = vld [vmem:[%s1469 + $0x1c] sm:$0xf]
      %v1478 = vld [vmem:[%s1469 + $0x20] sm:$0xf]
      %v1479 = vld [vmem:[%s1469 + $0x24] sm:$0xf]
      %v1480 = vld [vmem:[%s1469 + $0x28] sm:$0xf]
      %v1481 = vld [vmem:[%s1469 + $0x2c] sm:$0xf]
      %v1482 = vld [vmem:[%s1469 + $0x30] sm:$0xf]
      %v1483 = vld [vmem:[%s1469 + $0x34] sm:$0xf]
      %v1484 = vld [vmem:[%s1469 + $0x38] sm:$0xf]
      %v1485 = vld [vmem:[%s1469 + $0x3c] sm:$0xf]
      %v1494 = vunpack.c.l.b16 %v1461
      %v1495 = vunpack.c.l.b16 %v1462
      %v1496 = vunpack.c.l.b16 %v1463
      %v1497 = vunpack.c.l.b16 %v1464
      %v1498 = vunpack.c.l.b16 %v1465
      %v1499 = vunpack.c.l.b16 %v1466
      %v1500 = vunpack.c.l.b16 %v1467
      %v1501 = vunpack.c.l.b16 %v1468
      %v1502 = vpack.c.b16 %v1495, %v1494
      %v1503 = vpack.c.b16 %v1497, %v1496
      %v1504 = vpack.c.b16 %v1499, %v1498
      %v1505 = vpack.c.b16 %v1501, %v1500
      %v1526 = vunpack.c.l.b16 %v1470
      %v1527 = vunpack.c.l.b16 %v1471
      %v1528 = vunpack.c.l.b16 %v1472
      %v1529 = vunpack.c.l.b16 %v1473
      %v1530 = vunpack.c.l.b16 %v1474
      %v1531 = vunpack.c.l.b16 %v1475
      %v1532 = vunpack.c.l.b16 %v1476
      %v1533 = vunpack.c.l.b16 %v1477
      %v1534 = vunpack.c.l.b16 %v1478
      %v1535 = vunpack.c.l.b16 %v1479
      %v1536 = vunpack.c.l.b16 %v1480
      %v1537 = vunpack.c.l.b16 %v1481
      %v1538 = vunpack.c.l.b16 %v1482
      %v1539 = vunpack.c.l.b16 %v1483
      %v1540 = vunpack.c.l.b16 %v1484
      %v1541 = vunpack.c.l.b16 %v1485
      %v1542 = vpack.c.b16 %v1527, %v1526
      %v1543 = vpack.c.b16 %v1529, %v1528
      %v1544 = vpack.c.b16 %v1531, %v1530
      %v1545 = vpack.c.b16 %v1533, %v1532
      %v1546 = vpack.c.b16 %v1535, %v1534
      %v1547 = vpack.c.b16 %v1537, %v1536
      %v1548 = vpack.c.b16 %v1539, %v1538
      %v1549 = vpack.c.b16 %v1541, %v1540
      %1558 = vmatprep.subr.bf16.mxu0 0
      %1559 = vmatpush1.bf16.msra.mxu0 %v1542
      %1560 = vmatprep.subr.bf16.mxu0 0
      %1561 = vmatpush1.bf16.msra.mxu0 %v1543
      %1562 = vmatprep.subr.bf16.mxu0 0
      %1563 = vmatpush1.bf16.msra.mxu0 %v1544
      %1564 = vmatprep.subr.bf16.mxu0 0
      %1565 = vmatpush1.bf16.msra.mxu0 %v1545
      %1566 = vmatprep.subr.bf16.mxu0 0
      %1567 = vmatpush1.bf16.msra.mxu0 %v1546
      %1568 = vmatprep.subr.bf16.mxu0 0
      %1569 = vmatpush1.bf16.msra.mxu0 %v1547
      %1570 = vmatprep.subr.bf16.mxu0 0
      %1571 = vmatpush1.bf16.msra.mxu0 %v1548
      %1572 = vmatprep.subr.bf16.mxu0 0
      %1573 = vmatpush1.bf16.msra.mxu0 %v1549
      %1574 = vmatprep.subr.bf16.mxu0 0
      %1575 = vmatpush1.bf16.msra.mxu0 0
      %1576 = vmatprep.subr.bf16.mxu0 0
      %1577 = vmatpush1.bf16.msra.mxu0 0
      %1578 = vmatprep.subr.bf16.mxu0 0
      %1579 = vmatpush1.bf16.msra.mxu0 0
      %1580 = vmatprep.subr.bf16.mxu0 0
      %1581 = vmatpush1.bf16.msra.mxu0 0
      %1582 = vmatprep.subr.bf16.mxu0 0
      %1583 = vmatpush1.bf16.msra.mxu0 0
      %1584 = vmatprep.subr.bf16.mxu0 0
      %1585 = vmatpush1.bf16.msra.mxu0 0
      %1586 = vmatprep.subr.bf16.mxu0 0
      %1587 = vmatpush1.bf16.msra.mxu0 0
      %1588 = vmatprep.subr.bf16.mxu0 0
      %1589 = vmatpush1.bf16.msra.mxu0 0
      %1590 = vmatprep.mubr.bf16.mxu0 0
      %1591 = vmatmul.mubr.bf16.gmra.mrb[0].mxu0 %v1502
      %v1592 = vpop.f32.mrb[0].mxu0
      %v1593 = vadd.f32 0.0, %v1592
      %v1594 = vpop.f32.mrb[0].mxu0
      %v1595 = vpop.f32.mrb[0].mxu0
      %v1596 = vadd.f32 0.0, %v1595
      %v1597 = vpop.f32.mrb[0].mxu0
      %1598 = vmatprep.mubr.bf16.mxu0 0
      %1599 = vmatmul.mubr.bf16.gmra.mrb[0].mxu0 %v1503
      %v1600 = vpop.f32.mrb[0].mxu0
      %v1601 = vadd.f32 0.0, %v1600
      %v1602 = vpop.f32.mrb[0].mxu0
      %v1603 = vpop.f32.mrb[0].mxu0
      %v1604 = vadd.f32 0.0, %v1603
      %v1605 = vpop.f32.mrb[0].mxu0
      %1606 = vmatprep.mubr.bf16.mxu0 0
      %1607 = vmatmul.mubr.bf16.gmra.mrb[0].mxu0 %v1504
      %v1608 = vpop.f32.mrb[0].mxu0
      %v1609 = vadd.f32 0.0, %v1608
      %v1610 = vpop.f32.mrb[0].mxu0
      %v1611 = vpop.f32.mrb[0].mxu0
      %v1612 = vadd.f32 0.0, %v1611
      %v1613 = vpop.f32.mrb[0].mxu0
      %1614 = vmatprep.mubr.bf16.mxu0 0
      %1615 = vmatmul.mubr.bf16.gmra.mrb[0].mxu0 %v1505
      %v1616 = vpop.f32.mrb[0].mxu0
      %v1617 = vadd.f32 0.0, %v1616
      %v1618 = vpop.f32.mrb[0].mxu0
      %v1619 = vpop.f32.mrb[0].mxu0
      %v1620 = vadd.f32 0.0, %v1619
      %v1621 = vpop.f32.mrb[0].mxu0
      %1622 = vdwg.mxu0
      %v1623 = vadd.f32 %v1449, %v1593
      %v1624 = vadd.f32 %v1450, %v1596
      %v1625 = vadd.f32 %v1451, %v1601
      %v1626 = vadd.f32 %v1452, %v1604
      %v1627 = vadd.f32 %v1453, %v1609
      %v1628 = vadd.f32 %v1454, %v1612
      %v1629 = vadd.f32 %v1455, %v1617
      %v1630 = vadd.f32 %v1456, %v1620
      %s1631 = sadd.s32 %s1458, 18
      %s1632 = smul.addr %s1631, 4
      %s1633 = scalar_lea.vmem %s195, %s1632
      %v1634 = vld [vmem:[%s1633] sm:$0xf]
      %v1635 = vld [vmem:[%s1633 + $0x8] sm:$0xf]
      %v1636 = vld [vmem:[%s1633 + $0x10] sm:$0xf]
      %v1637 = vld [vmem:[%s1633 + $0x18] sm:$0xf]
      %v1638 = vld [vmem:[%s1633 + $0x20] sm:$0xf]
      %v1639 = vld [vmem:[%s1633 + $0x28] sm:$0xf]
      %v1640 = vld [vmem:[%s1633 + $0x30] sm:$0xf]
      %v1641 = vld [vmem:[%s1633 + $0x38] sm:$0xf]
      %s1642 = scalar_lea.vmem %s1, 448
      %v1643 = vld [vmem:[%s1642] sm:$0xf]
      %v1644 = vld [vmem:[%s1642 + $0x4] sm:$0xf]
      %v1645 = vld [vmem:[%s1642 + $0x8] sm:$0xf]
      %v1646 = vld [vmem:[%s1642 + $0xc] sm:$0xf]
      %v1647 = vld [vmem:[%s1642 + $0x10] sm:$0xf]
      %v1648 = vld [vmem:[%s1642 + $0x14] sm:$0xf]
      %v1649 = vld [vmem:[%s1642 + $0x18] sm:$0xf]
      %v1650 = vld [vmem:[%s1642 + $0x1c] sm:$0xf]
      %v1651 = vld [vmem:[%s1642 + $0x20] sm:$0xf]
      %v1652 = vld [vmem:[%s1642 + $0x24] sm:$0xf]
      %v1653 = vld [vmem:[%s1642 + $0x28] sm:$0xf]
      %v1654 = vld [vmem:[%s1642 + $0x2c] sm:$0xf]
      %v1655 = vld [vmem:[%s1642 + $0x30] sm:$0xf]
      %v1656 = vld [vmem:[%s1642 + $0x34] sm:$0xf]
      %v1657 = vld [vmem:[%s1642 + $0x38] sm:$0xf]
      %v1658 = vld [vmem:[%s1642 + $0x3c] sm:$0xf]
      %v1667 = vunpack.c.l.b16 %v1634
      %v1668 = vunpack.c.l.b16 %v1635
      %v1669 = vunpack.c.l.b16 %v1636
      %v1670 = vunpack.c.l.b16 %v1637
      %v1671 = vunpack.c.l.b16 %v1638
      %v1672 = vunpack.c.l.b16 %v1639
      %v1673 = vunpack.c.l.b16 %v1640
      %v1674 = vunpack.c.l.b16 %v1641
      %v1675 = vpack.c.b16 %v1668, %v1667
      %v1676 = vpack.c.b16 %v1670, %v1669
      %v1677 = vpack.c.b16 %v1672, %v1671
      %v1678 = vpack.c.b16 %v1674, %v1673
      %v1699 = vunpack.c.l.b16 %v1643
      %v1700 = vunpack.c.l.b16 %v1644
      %v1701 = vunpack.c.l.b16 %v1645
      %v1702 = vunpack.c.l.b16 %v1646
      %v1703 = vunpack.c.l.b16 %v1647
      %v1704 = vunpack.c.l.b16 %v1648
      %v1705 = vunpack.c.l.b16 %v1649
      %v1706 = vunpack.c.l.b16 %v1650
      %v1707 = vunpack.c.l.b16 %v1651
      %v1708 = vunpack.c.l.b16 %v1652
      %v1709 = vunpack.c.l.b16 %v1653
      %v1710 = vunpack.c.l.b16 %v1654
      %v1711 = vunpack.c.l.b16 %v1655
      %v1712 = vunpack.c.l.b16 %v1656
      %v1713 = vunpack.c.l.b16 %v1657
      %v1714 = vunpack.c.l.b16 %v1658
      %v1715 = vpack.c.b16 %v1700, %v1699
      %v1716 = vpack.c.b16 %v1702, %v1701
      %v1717 = vpack.c.b16 %v1704, %v1703
      %v1718 = vpack.c.b16 %v1706, %v1705
      %v1719 = vpack.c.b16 %v1708, %v1707
      %v1720 = vpack.c.b16 %v1710, %v1709
      %v1721 = vpack.c.b16 %v1712, %v1711
      %v1722 = vpack.c.b16 %v1714, %v1713
      %1731 = vmatprep.subr.bf16.mxu0 0
      %1732 = vmatpush1.bf16.msra.mxu0 %v1715
      %1733 = vmatprep.subr.bf16.mxu0 0
      %1734 = vmatpush1.bf16.msra.mxu0 %v1716
      %1735 = vmatprep.subr.bf16.mxu0 0
      %1736 = vmatpush1.bf16.msra.mxu0 %v1717
      %1737 = vmatprep.subr.bf16.mxu0 0
      %1738 = vmatpush1.bf16.msra.mxu0 %v1718
      %1739 = vmatprep.subr.bf16.mxu0 0
      %1740 = vmatpush1.bf16.msra.mxu0 %v1719
      %1741 = vmatprep.subr.bf16.mxu0 0
      %1742 = vmatpush1.bf16.msra.mxu0 %v1720
      %1743 = vmatprep.subr.bf16.mxu0 0
      %1744 = vmatpush1.bf16.msra.mxu0 %v1721
      %1745 = vmatprep.subr.bf16.mxu0 0
      %1746 = vmatpush1.bf16.msra.mxu0 %v1722
      %1747 = vmatprep.subr.bf16.mxu0 0
      %1748 = vmatpush1.bf16.msra.mxu0 0
      %1749 = vmatprep.subr.bf16.mxu0 0
      %1750 = vmatpush1.bf16.msra.mxu0 0
      %1751 = vmatprep.subr.bf16.mxu0 0
      %1752 = vmatpush1.bf16.msra.mxu0 0
      %1753 = vmatprep.subr.bf16.mxu0 0
      %1754 = vmatpush1.bf16.msra.mxu0 0
      %1755 = vmatprep.subr.bf16.mxu0 0
      %1756 = vmatpush1.bf16.msra.mxu0 0
      %1757 = vmatprep.subr.bf16.mxu0 0
      %1758 = vmatpush1.bf16.msra.mxu0 0
      %1759 = vmatprep.subr.bf16.mxu0 0
      %1760 = vmatpush1.bf16.msra.mxu0 0
      %1761 = vmatprep.subr.bf16.mxu0 0
      %1762 = vmatpush1.bf16.msra.mxu0 0
      %1763 = vmatprep.mubr.bf16.mxu0 0
      %1764 = vmatmul.mubr.bf16.gmra.mrb[0].mxu0 %v1675
      %v1765 = vpop.f32.mrb[0].mxu0
      %v1766 = vadd.f32 0.0, %v1765
      %v1767 = vpop.f32.mrb[0].mxu0
      %v1768 = vpop.f32.mrb[0].mxu0
      %v1769 = vadd.f32 0.0, %v1768
      %v1770 = vpop.f32.mrb[0].mxu0
      %1771 = vmatprep.mubr.bf16.mxu0 0
      %1772 = vmatmul.mubr.bf16.gmra.mrb[0].mxu0 %v1676
      %v1773 = vpop.f32.mrb[0].mxu0
      %v1774 = vadd.f32 0.0, %v1773
      %v1775 = vpop.f32.mrb[0].mxu0
      %v1776 = vpop.f32.mrb[0].mxu0
      %v1777 = vadd.f32 0.0, %v1776
      %v1778 = vpop.f32.mrb[0].mxu0
      %1779 = vmatprep.mubr.bf16.mxu0 0
      %1780 = vmatmul.mubr.bf16.gmra.mrb[0].mxu0 %v1677
      %v1781 = vpop.f32.mrb[0].mxu0
      %v1782 = vadd.f32 0.0, %v1781
      %v1783 = vpop.f32.mrb[0].mxu0
      %v1784 = vpop.f32.mrb[0].mxu0
      %v1785 = vadd.f32 0.0, %v1784
      %v1786 = vpop.f32.mrb[0].mxu0
      %1787 = vmatprep.mubr.bf16.mxu0 0
      %1788 = vmatmul.mubr.bf16.gmra.mrb[0].mxu0 %v1678
      %v1789 = vpop.f32.mrb[0].mxu0
      %v1790 = vadd.f32 0.0, %v1789
      %v1791 = vpop.f32.mrb[0].mxu0
      %v1792 = vpop.f32.mrb[0].mxu0
      %v1793 = vadd.f32 0.0, %v1792
      %v1794 = vpop.f32.mrb[0].mxu0
      %1795 = vdwg.mxu0
      %v1796 = vadd.f32 %v1623, %v1766
      %v1797 = vadd.f32 %v1624, %v1769
      %v1798 = vadd.f32 %v1625, %v1774
      %v1799 = vadd.f32 %v1626, %v1777
      %v1800 = vadd.f32 %v1627, %v1782
      %v1801 = vadd.f32 %v1628, %v1785
      %v1802 = vadd.f32 %v1629, %v1790
      %v1803 = vadd.f32 %v1630, %v1793
      %v1804 = vld [vmem:[%s1460] sm:$0xf]
      %v1805 = vld [vmem:[%s1460 + $0x4] sm:$0x1]
      %v1806 = vld [vmem:[%s1460 + $0x8] sm:$0xf]
      %v1807 = vld [vmem:[%s1460 + $0xc] sm:$0x1]
      %v1808 = vld [vmem:[%s1460 + $0x10] sm:$0xf]
      %v1809 = vld [vmem:[%s1460 + $0x14] sm:$0x1]
      %v1810 = vld [vmem:[%s1460 + $0x18] sm:$0xf]
      %v1811 = vld [vmem:[%s1460 + $0x1c] sm:$0x1]
      %v1812 = vld [vmem:[%s1460 + $0x20] sm:$0xf]
      %v1813 = vld [vmem:[%s1460 + $0x24] sm:$0x1]
      %v1814 = vld [vmem:[%s1460 + $0x28] sm:$0xf]
      %v1815 = vld [vmem:[%s1460 + $0x2c] sm:$0x1]
      %v1816 = vld [vmem:[%s1460 + $0x30] sm:$0xf]
      %v1817 = vld [vmem:[%s1460 + $0x34] sm:$0x1]
      %v1818 = vld [vmem:[%s1460 + $0x38] sm:$0xf]
      %v1819 = vld [vmem:[%s1460 + $0x3c] sm:$0x1]
      %v1821 = vshrl.u32 %v1804, 16
      %v1823 = vrot.slane %v1821, 4
      %v1824 = vshll.u32 %v1804, 16
      %v1826 = vrot.slane %v1824, 5
      %v1827 = vor.u32 %v1823, %v1826
      %v1828 = vrot.slane %v1827, 4
      %v1830 = vshll.u32 %v1805, 16
      %v1832 = vrot.slane %v1830, 5
      %v1833 = vsel %vm562, %v1828, %v1832
      %v1835 = vshrl.u32 %v1806, 16
      %v1837 = vrot.slane %v1835, 4
      %v1838 = vshll.u32 %v1806, 16
      %v1840 = vrot.slane %v1838, 5
      %v1841 = vor.u32 %v1837, %v1840
      %v1842 = vrot.slane %v1841, 4
      %v1844 = vshll.u32 %v1807, 16
      %v1846 = vrot.slane %v1844, 5
      %v1847 = vsel %vm562, %v1842, %v1846
      %v1849 = vshrl.u32 %v1808, 16
      %v1851 = vrot.slane %v1849, 4
      %v1852 = vshll.u32 %v1808, 16
      %v1854 = vrot.slane %v1852, 5
      %v1855 = vor.u32 %v1851, %v1854
      %v1856 = vrot.slane %v1855, 4
      %v1858 = vshll.u32 %v1809, 16
      %v1860 = vrot.slane %v1858, 5
      %v1861 = vsel %vm562, %v1856, %v1860
      %v1863 = vshrl.u32 %v1810, 16
      %v1865 = vrot.slane %v1863, 4
      %v1866 = vshll.u32 %v1810, 16
      %v1868 = vrot.slane %v1866, 5
      %v1869 = vor.u32 %v1865, %v1868
      %v1870 = vrot.slane %v1869, 4
      %v1872 = vshll.u32 %v1811, 16
      %v1874 = vrot.slane %v1872, 5
      %v1875 = vsel %vm562, %v1870, %v1874
      %v1877 = vshrl.u32 %v1812, 16
      %v1879 = vrot.slane %v1877, 4
      %v1880 = vshll.u32 %v1812, 16
      %v1882 = vrot.slane %v1880, 5
      %v1883 = vor.u32 %v1879, %v1882
      %v1884 = vrot.slane %v1883, 4
      %v1886 = vshll.u32 %v1813, 16
      %v1888 = vrot.slane %v1886, 5
      %v1889 = vsel %vm562, %v1884, %v1888
      %v1891 = vshrl.u32 %v1814, 16
      %v1893 = vrot.slane %v1891, 4
      %v1894 = vshll.u32 %v1814, 16
      %v1896 = vrot.slane %v1894, 5
      %v1897 = vor.u32 %v1893, %v1896
      %v1898 = vrot.slane %v1897, 4
      %v1900 = vshll.u32 %v1815, 16
      %v1902 = vrot.slane %v1900, 5
      %v1903 = vsel %vm562, %v1898, %v1902
      %v1905 = vshrl.u32 %v1816, 16
      %v1907 = vrot.slane %v1905, 4
      %v1908 = vshll.u32 %v1816, 16
      %v1910 = vrot.slane %v1908, 5
      %v1911 = vor.u32 %v1907, %v1910
      %v1912 = vrot.slane %v1911, 4
      %v1914 = vshll.u32 %v1817, 16
      %v1916 = vrot.slane %v1914, 5
      %v1917 = vsel %vm562, %v1912, %v1916
      %v1919 = vshrl.u32 %v1818, 16
      %v1921 = vrot.slane %v1919, 4
      %v1922 = vshll.u32 %v1818, 16
      %v1924 = vrot.slane %v1922, 5
      %v1925 = vor.u32 %v1921, %v1924
      %v1926 = vrot.slane %v1925, 4
      %v1928 = vshll.u32 %v1819, 16
      %v1930 = vrot.slane %v1928, 5
      %v1931 = vsel %vm562, %v1926, %v1930
      %s1932 = scalar_lea.vmem %s1, 512
      %v1933 = vld [vmem:[%s1932] sm:$0xf]
      %v1934 = vld [vmem:[%s1932 + $0x4] sm:$0xf]
      %v1935 = vld [vmem:[%s1932 + $0x8] sm:$0xf]
      %v1936 = vld [vmem:[%s1932 + $0xc] sm:$0xf]
      %v1937 = vld [vmem:[%s1932 + $0x10] sm:$0xf]
      %v1938 = vld [vmem:[%s1932 + $0x14] sm:$0xf]
      %v1939 = vld [vmem:[%s1932 + $0x18] sm:$0xf]
      %v1940 = vld [vmem:[%s1932 + $0x1c] sm:$0xf]
      %v1941 = vld [vmem:[%s1932 + $0x20] sm:$0xf]
      %v1942 = vld [vmem:[%s1932 + $0x24] sm:$0xf]
      %v1943 = vld [vmem:[%s1932 + $0x28] sm:$0xf]
      %v1944 = vld [vmem:[%s1932 + $0x2c] sm:$0xf]
      %v1945 = vld [vmem:[%s1932 + $0x30] sm:$0xf]
      %v1946 = vld [vmem:[%s1932 + $0x34] sm:$0xf]
      %v1947 = vld [vmem:[%s1932 + $0x38] sm:$0xf]
      %v1948 = vld [vmem:[%s1932 + $0x3c] sm:$0xf]
      %v1949 = vunpack.c.l.b16 %v1833
      %v1950 = vunpack.c.l.b16 %v1847
      %v1951 = vunpack.c.l.b16 %v1861
      %v1952 = vunpack.c.l.b16 %v1875
      %v1953 = vunpack.c.l.b16 %v1889
      %v1954 = vunpack.c.l.b16 %v1903
      %v1955 = vunpack.c.l.b16 %v1917
      %v1956 = vunpack.c.l.b16 %v1931
      %v1957 = vpack.c.b16 %v1950, %v1949
      %v1958 = vpack.c.b16 %v1952, %v1951
      %v1959 = vpack.c.b16 %v1954, %v1953
      %v1960 = vpack.c.b16 %v1956, %v1955
      %v1981 = vunpack.c.l.b16 %v1933
      %v1982 = vunpack.c.l.b16 %v1934
      %v1983 = vunpack.c.l.b16 %v1935
      %v1984 = vunpack.c.l.b16 %v1936
      %v1985 = vunpack.c.l.b16 %v1937
      %v1986 = vunpack.c.l.b16 %v1938
      %v1987 = vunpack.c.l.b16 %v1939
      %v1988 = vunpack.c.l.b16 %v1940
      %v1989 = vunpack.c.l.b16 %v1941
      %v1990 = vunpack.c.l.b16 %v1942
      %v1991 = vunpack.c.l.b16 %v1943
      %v1992 = vunpack.c.l.b16 %v1944
      %v1993 = vunpack.c.l.b16 %v1945
      %v1994 = vunpack.c.l.b16 %v1946
      %v1995 = vunpack.c.l.b16 %v1947
      %v1996 = vunpack.c.l.b16 %v1948
      %v1997 = vpack.c.b16 %v1982, %v1981
      %v1998 = vpack.c.b16 %v1984, %v1983
      %v1999 = vpack.c.b16 %v1986, %v1985
      %v2000 = vpack.c.b16 %v1988, %v1987
      %v2001 = vpack.c.b16 %v1990, %v1989
      %v2002 = vpack.c.b16 %v1992, %v1991
      %v2003 = vpack.c.b16 %v1994, %v1993
      %v2004 = vpack.c.b16 %v1996, %v1995
      %2013 = vmatprep.subr.bf16.mxu0 0
      %2014 = vmatpush1.bf16.msra.mxu0 %v1997
      %2015 = vmatprep.subr.bf16.mxu0 0
      %2016 = vmatpush1.bf16.msra.mxu0 %v1998
      %2017 = vmatprep.subr.bf16.mxu0 0
      %2018 = vmatpush1.bf16.msra.mxu0 %v1999
      %2019 = vmatprep.subr.bf16.mxu0 0
      %2020 = vmatpush1.bf16.msra.mxu0 %v2000
      %2021 = vmatprep.subr.bf16.mxu0 0
      %2022 = vmatpush1.bf16.msra.mxu0 %v2001
      %2023 = vmatprep.subr.bf16.mxu0 0
      %2024 = vmatpush1.bf16.msra.mxu0 %v2002
      %2025 = vmatprep.subr.bf16.mxu0 0
      %2026 = vmatpush1.bf16.msra.mxu0 %v2003
      %2027 = vmatprep.subr.bf16.mxu0 0
      %2028 = vmatpush1.bf16.msra.mxu0 %v2004
      %2029 = vmatprep.subr.bf16.mxu0 0
      %2030 = vmatpush1.bf16.msra.mxu0 0
      %2031 = vmatprep.subr.bf16.mxu0 0
      %2032 = vmatpush1.bf16.msra.mxu0 0
      %2033 = vmatprep.subr.bf16.mxu0 0
      %2034 = vmatpush1.bf16.msra.mxu0 0
      %2035 = vmatprep.subr.bf16.mxu0 0
      %2036 = vmatpush1.bf16.msra.mxu0 0
      %2037 = vmatprep.subr.bf16.mxu0 0
      %2038 = vmatpush1.bf16.msra.mxu0 0
      %2039 = vmatprep.subr.bf16.mxu0 0
      %2040 = vmatpush1.bf16.msra.mxu0 0
      %2041 = vmatprep.subr.bf16.mxu0 0
      %2042 = vmatpush1.bf16.msra.mxu0 0
      %2043 = vmatprep.subr.bf16.mxu0 0
      %2044 = vmatpush1.bf16.msra.mxu0 0
      %2045 = vmatprep.mubr.bf16.mxu0 0
      %2046 = vmatmul.mubr.bf16.gmra.mrb[0].mxu0 %v1957
      %v2047 = vpop.f32.mrb[0].mxu0
      %v2048 = vadd.f32 0.0, %v2047
      %v2049 = vpop.f32.mrb[0].mxu0
      %v2050 = vpop.f32.mrb[0].mxu0
      %v2051 = vadd.f32 0.0, %v2050
      %v2052 = vpop.f32.mrb[0].mxu0
      %2053 = vmatprep.mubr.bf16.mxu0 0
      %2054 = vmatmul.mubr.bf16.gmra.mrb[0].mxu0 %v1958
      %v2055 = vpop.f32.mrb[0].mxu0
      %v2056 = vadd.f32 0.0, %v2055
      %v2057 = vpop.f32.mrb[0].mxu0
      %v2058 = vpop.f32.mrb[0].mxu0
      %v2059 = vadd.f32 0.0, %v2058
      %v2060 = vpop.f32.mrb[0].mxu0
      %2061 = vmatprep.mubr.bf16.mxu0 0
      %2062 = vmatmul.mubr.bf16.gmra.mrb[0].mxu0 %v1959
      %v2063 = vpop.f32.mrb[0].mxu0
      %v2064 = vadd.f32 0.0, %v2063
      %v2065 = vpop.f32.mrb[0].mxu0
      %v2066 = vpop.f32.mrb[0].mxu0
      %v2067 = vadd.f32 0.0, %v2066
      %v2068 = vpop.f32.mrb[0].mxu0
      %2069 = vmatprep.mubr.bf16.mxu0 0
      %2070 = vmatmul.mubr.bf16.gmra.mrb[0].mxu0 %v1960
      %v2071 = vpop.f32.mrb[0].mxu0
      %v2072 = vadd.f32 0.0, %v2071
      %v2073 = vpop.f32.mrb[0].mxu0
      %v2074 = vpop.f32.mrb[0].mxu0
      %v2075 = vadd.f32 0.0, %v2074
      %v2076 = vpop.f32.mrb[0].mxu0
      %2077 = vdwg.mxu0
      %v2078 = vadd.f32 %v1796, %v2048
      %v2079 = vadd.f32 %v1797, %v2051
      %v2080 = vadd.f32 %v1798, %v2056
      %v2081 = vadd.f32 %v1799, %v2059
      %v2082 = vadd.f32 %v1800, %v2064
      %v2083 = vadd.f32 %v1801, %v2067
      %v2084 = vadd.f32 %v1802, %v2072
      %v2085 = vadd.f32 %v1803, %v2075
      %v2086 = vpack.c.bf16 %v2078, %v2078
      %v2087 = vpack.c.bf16 %v2079, %v2079
      %v2088 = vpack.c.bf16 %v2080, %v2080
      %v2089 = vpack.c.bf16 %v2081, %v2081
      %v2090 = vpack.c.bf16 %v2082, %v2082
      %v2091 = vpack.c.bf16 %v2083, %v2083
      %v2092 = vpack.c.bf16 %v2084, %v2084
      %v2093 = vpack.c.bf16 %v2085, %v2085
      %2094 = vst [vmem:[%s204] sm:$0xf] %v2086
      %2095 = vst [vmem:[%s204 + $0x4] sm:$0xf] %v2087
      %2096 = vst [vmem:[%s204 + $0x8] sm:$0xf] %v2088
      %2097 = vst [vmem:[%s204 + $0xc] sm:$0xf] %v2089
      %2098 = vst [vmem:[%s204 + $0x10] sm:$0xf] %v2090
      %2099 = vst [vmem:[%s204 + $0x14] sm:$0xf] %v2091
      %2100 = vst [vmem:[%s204 + $0x18] sm:$0xf] %v2092
      %2101 = vst [vmem:[%s204 + $0x1c] sm:$0xf] %v2093
      %v2102 = vadd.f32 %v2078, %v2079
      %v2103 = vadd.f32 %v2102, %v2080
      %v2104 = vadd.f32 %v2103, %v2081
      %v2105 = vadd.f32 %v2104, %v2082
      %v2106 = vadd.f32 %v2105, %v2083
      %v2107 = vadd.f32 %v2106, %v2084
      %v2108 = vadd.f32 %v2107, %v2085
      %v2109 = vrot.slane %v2108, 4
      %v2110 = vadd.f32 %v2108, %v2109
      %v2111 = vrot.slane %v2110, 2
      %v2112 = vadd.f32 %v2110, %v2111
      %v2113 = vrot.slane %v2112, 1
      %v2114 = vadd.f32 %v2112, %v2113
      %2115 = vst [vmem:[%s212] sm:$0x1] %v2114
      %v2116 = vmul.f32 %v2078, %v2078
      %v2117 = vmul.f32 %v2079, %v2079
      %v2118 = vmul.f32 %v2080, %v2080
      %v2119 = vmul.f32 %v2081, %v2081
      %v2120 = vmul.f32 %v2082, %v2082
      %v2121 = vmul.f32 %v2083, %v2083
      %v2122 = vmul.f32 %v2084, %v2084
      %v2123 = vmul.f32 %v2085, %v2085
      %v2124 = vadd.f32 %v2116, %v2117
      %v2125 = vadd.f32 %v2124, %v2118
      %v2126 = vadd.f32 %v2125, %v2119
      %v2127 = vadd.f32 %v2126, %v2120
      %v2128 = vadd.f32 %v2127, %v2121
      %v2129 = vadd.f32 %v2128, %v2122
      %v2130 = vadd.f32 %v2129, %v2123
      %v2131 = vrot.slane %v2130, 4
      %v2132 = vadd.f32 %v2130, %v2131
      %v2133 = vrot.slane %v2132, 2
      %v2134 = vadd.f32 %v2132, %v2133
      %v2135 = vrot.slane %v2134, 1
      %v2136 = vadd.f32 %v2134, %v2135
      %2137 = vst [vmem:[%s212 + $0x1] sm:$0x1] %v2136
      %s2138 = smul.u32 8, %s20
      %p2139 = scmp.lt.s32.totalorder %s19, 1
      %s2140 = scalar_select %p2139, %s19, 1
      %p2141 = scmp.lt.s32.totalorder %s2138, 7
      %s2142 = scalar_select %p2141, %s2138, 7
      %s2143 = smul.addr %s2140, 8
      %s2144 = sadd.s32 %s2142, %s2143
      %s2145 = smul.addr %s2144, 4
      %s2146 = scalar_lea.vmem %s2, %s2145
      %p2147 = scmp.lt.s32.totalorder %s19, 1
      %s2148 = scalar_select %p2147, %s19, 1
      %p2149 = scmp.lt.s32.totalorder %s20, 0
      %s2150 = scalar_select %p2149, %s20, 0
      %s2151 = sadd.s32 %s2150, %s2148
      %s2152 = smul.addr %s2151, 2
      %s2153 = scalar_lea.vmem %s3, %s2152
      // Predicated region
      $region29: #{residual_forward.3} parent=27 // pred_check
        %p2154 = pneg %p94
      $region30: #{residual_forward.3} parent=27 // pred_check_branch
        %2156 = sbr.rel (%p2154) target = $region32
      $region31: #{residual_forward.3} parent=27 // pred_region
        %s2157 = smul.u32 8, %s20
      $region32: #{residual_forward.3} parent=27 // pred_fallthru
        _
      // Predicated region
      $region33: #{residual_forward.3} parent=27 // pred_check
        %p2158 = pneg %p122
      $region34: #{residual_forward.3} parent=27 // pred_check_branch
        %2160 = sbr.rel (%p2158) target = $region36
      $region35: #{residual_forward.3} parent=27 // pred_region
        _
      $region36: #{residual_forward.3} parent=27 // pred_fallthru
        _
    $region28: #{residual_forward.3} parent=5 // pred_fallthru
      _
    %p2161 = scmp.le.s32.totalorder 2, %s10
    // Predicated region
    $region37: #{residual_forward.3} parent=5 // pred_check
      %p2162 = pneg %p2161
    $region38: #{residual_forward.3} parent=5 // pred_check_branch
      %2164 = sbr.rel (%p2162) target = $region40
    $region39: #{residual_forward.3} parent=5 // pred_region
      %s2165 = ssub.s32 %s10, 2
      // Predicated region
      $region41: #{residual_forward.3} parent=39 // pred_check
        %p2166 = pneg %p100
      $region42: #{residual_forward.3} parent=39 // pred_check_branch
        %2168 = sbr.rel (%p2166) target = $region44
      $region43: #{residual_forward.3} parent=39 // pred_region
        %s2169 = smul.u32 8, %s22
        %p2170 = scmp.lt.s32.totalorder %s21, 1
        %s2171 = scalar_select %p2170, %s21, 1
        %p2172 = scmp.lt.s32.totalorder %s2169, 7
        %s2173 = scalar_select %p2172, %s2169, 7
        %s2174 = smul.addr %s2171, 8
        %s2175 = sadd.s32 %s2173, %s2174
        %s2176 = smul.addr %s2175, 4
        %s2177 = scalar_lea.vmem %s2, %s2176
      $region44: #{residual_forward.3} parent=39 // pred_fallthru
        _
      // Predicated region
      $region45: #{residual_forward.3} parent=39 // pred_check
        %p2178 = pneg %p128
      $region46: #{residual_forward.3} parent=39 // pred_check_branch
        %2180 = sbr.rel (%p2178) target = $region48
      $region47: #{residual_forward.3} parent=39 // pred_region
        %p2181 = scmp.lt.s32.totalorder %s21, 1
        %s2182 = scalar_select %p2181, %s21, 1
        %p2183 = scmp.lt.s32.totalorder %s22, 0
        %s2184 = scalar_select %p2183, %s22, 0
        %s2185 = sadd.s32 %s2184, %s2182
        %s2186 = smul.addr %s2185, 2
        %s2187 = scalar_lea.vmem %s3, %s2186
      $region48: #{residual_forward.3} parent=39 // pred_fallthru
        _
    $region40: #{residual_forward.3} parent=5 // pred_fallthru
      _
  $region6: #{residual_forward.3} parent=0 // loop_footer
    %s14 = sadd.s32 1, %s10
  $region7: #{residual_forward.3} parent=0 // loop_footer_branch
    %9 = sbr.rel target = $region3
  $region8: #{residual_forward.3} parent=0 // loop_exit
    _

// kernel: residual_forward.4
$region0: #{residual_forward.4}
  #allocation0 [shape = 'u32[]', space=smem, size = 0x4, offset = 0x4, fixed_abs, tag = 'smem constant byte address 0x4 - core index']
  #allocation1 [shape = 'u32[144,128]{1,0:T(1,128)}', space=vmem, size = 0x12000, scoped, tag = 'internal scratch']
  #allocation2 [shape = 'bf16[10,10,128]{2,1,0:T(8,128)(2,1)}', space=vmem, size = 0xa000, scoped, tag = 'scratch operand']
  %s0 = inlined_call_operand.vmem [shape: bf16[2,8,8,128], index: 0, kind: input, shape index: {}]
  %s1 = inlined_call_operand.vmem [shape: f32[1,128], index: 1, kind: input, shape index: {}]
  %s2 = inlined_call_operand.vmem [shape: f32[1,128], index: 2, kind: input, shape index: {}]
  %s3 = inlined_call_operand.vmem [shape: bf16[3,3,128,128], index: 3, kind: input, shape index: {}]
  %s4 = inlined_call_operand.vmem [shape: bf16[2,8,8,128], index: 4, kind: output, shape index: {0}]
  %s5 = inlined_call_operand.vmem [shape: f32[2,1,2,128], index: 5, kind: output, shape index: {1}]
  %6 = xla_tuple %s4, %s5
  %s7 = sld [smem:[#allocation0]]
  $region61: #{residual_forward.4} parent=0
    _
  %s9 = ssub.s32 1, %s7
  %s10 = scalar_select 0, %s9, %s7
  loop: start=0, step=1, limit=4
  $region2: #{residual_forward.4} parent=0 // loop_pre_header
    _
  $region3: #{residual_forward.4} parent=0 // loop_header
    %s12 = sphi 0, %s16
    %p13 = scmp.ge.s32.totalorder %s12, 4
    %s19 = sphi 0, %s31
    %s20 = sphi 0, %s27
    %s21 = sphi 0, %s19
    %s22 = sphi 0, %s20
    %s23 = sphi 0, %s21
    %s24 = sphi 0, %s22
    %s34 = sphi 0, %s36
    %s37 = sphi 0, %s34
    %s38 = sphi 0, %s37
    %s54 = sphi 0, %s38
    %s58 = sphi 0, %s58
    %s60 = sphi 0, %s58
    %s61 = sphi 0, %s60
    %s75 = sphi 0, %s61
    %s79 = sphi 0, %s79
    %s81 = sphi 0, %s79
    %s82 = sphi 0, %s81
    %s96 = sphi 0, %s82
    %s100 = sphi 0, %s100
    %s102 = sphi 0, %s100
    %s103 = sphi 0, %s102
    %s117 = sphi 0, %s103
    %s125 = sphi 0, %s127
    %s128 = sphi 0, %s125
    %s129 = sphi 0, %s128
    %s145 = sphi 0, %s129
    %s153 = sphi 0, %s155
    %s156 = sphi 0, %s153
    %s157 = sphi 0, %s156
    %s173 = sphi 0, %s157
  $region4: #{residual_forward.4} parent=0 // loop_header_branch
    %15 = sbr.rel (%p13) target = $region8
  $region5: #{residual_forward.4} parent=0 // loop_body
    %s17 = ssub.s32 %s12, 1
    %s18 = ssub.s32 %s12, 2
    %s25 = sadd.s32 1, %s20
    %p26 = scmp.ge.s32.totalorder %s25, 1
    %s27 = scalar_select %p26, 0, %s25
    %s28 = sadd.s32 1, %s19
    %s29 = scalar_select %p26, %s28, %s19
    %p30 = scmp.ge.s32.totalorder %s29, 2
    %s31 = scalar_select %p30, 0, %s29
    %s32 = ssub.s32 %s19, %s31
    %p33 = scmp.eq.s32.totalorder %s32, 0
    %s35 = sadd.s32 %s34, 1
    %s36 = scalar_select %p33, %s34, %s35
    %p39 = pneg %p33
    %p40 = scmp.eq.s32.totalorder %s12, 1
    %p41 = por %p39, %p40
    %p42 = scmp.ne.s32.totalorder %s34, %s37
    %p43 = scmp.eq.s32.totalorder %s12, 0
    %p44 = por %p42, %p43
    %p45 = scmp.ne.s32.totalorder %s34, %s37
    %p46 = scmp.eq.s32.totalorder %s17, 1
    %p47 = por %p45, %p46
    %p48 = scmp.ne.s32.totalorder %s37, %s38
    %p49 = scmp.eq.s32.totalorder %s17, 0
    %p50 = por %p48, %p49
    %p51 = scmp.ne.s32.totalorder %s37, %s38
    %p52 = scmp.eq.s32.totalorder %s18, 1
    %p53 = por %p51, %p52
    %p55 = scmp.ne.s32.totalorder %s38, %s54
    %p56 = scmp.eq.s32.totalorder %s18, 0
    %p57 = por %p55, %p56
    %s59 = sadd.s32 %s58, 1
    %p62 = scmp.eq.s32.totalorder %s12, 1
    %p63 = scmp.ne.s32.totalorder %s58, %s60
    %p64 = scmp.eq.s32.totalorder %s12, 0
    %p65 = por %p63, %p64
    %p66 = scmp.ne.s32.totalorder %s58, %s60
    %p67 = scmp.eq.s32.totalorder %s17, 1
    %p68 = por %p66, %p67
    %p69 = scmp.ne.s32.totalorder %s60, %s61
    %p70 = scmp.eq.s32.totalorder %s17, 0
    %p71 = por %p69, %p70
    %p72 = scmp.ne.s32.totalorder %s60, %s61
    %p73 = scmp.eq.s32.totalorder %s18, 1
    %p74 = por %p72, %p73
    %p76 = scmp.ne.s32.totalorder %s61, %s75
    %p77 = scmp.eq.s32.totalorder %s18, 0
    %p78 = por %p76, %p77
    %s80 = sadd.s32 %s79, 1
    %p83 = scmp.eq.s32.totalorder %s12, 1
    %p84 = scmp.ne.s32.totalorder %s79, %s81
    %p85 = scmp.eq.s32.totalorder %s12, 0
    %p86 = por %p84, %p85
    %p87 = scmp.ne.s32.totalorder %s79, %s81
    %p88 = scmp.eq.s32.totalorder %s17, 1
    %p89 = por %p87, %p88
    %p90 = scmp.ne.s32.totalorder %s81, %s82
    %p91 = scmp.eq.s32.totalorder %s17, 0
    %p92 = por %p90, %p91
    %p93 = scmp.ne.s32.totalorder %s81, %s82
    %p94 = scmp.eq.s32.totalorder %s18, 1
    %p95 = por %p93, %p94
    %p97 = scmp.ne.s32.totalorder %s82, %s96
    %p98 = scmp.eq.s32.totalorder %s18, 0
    %p99 = por %p97, %p98
    %s101 = sadd.s32 %s100, 1
    %p104 = scmp.eq.s32.totalorder %s12, 1
    %p105 = scmp.ne.s32.totalorder %s100, %s102
    %p106 = scmp.eq.s32.totalorder %s12, 0
    %p107 = por %p105, %p106
    %p108 = scmp.ne.s32.totalorder %s100, %s102
    %p109 = scmp.eq.s32.totalorder %s17, 1
    %p110 = por %p108, %p109
    %p111 = scmp.ne.s32.totalorder %s102, %s103
    %p112 = scmp.eq.s32.totalorder %s17, 0
    %p113 = por %p111, %p112
    %p114 = scmp.ne.s32.totalorder %s102, %s103
    %p115 = scmp.eq.s32.totalorder %s18, 1
    %p116 = por %p114, %p115
    %p118 = scmp.ne.s32.totalorder %s103, %s117
    %p119 = scmp.eq.s32.totalorder %s18, 0
    %p120 = por %p118, %p119
    %s121 = ssub.s32 %s19, %s31
    %s122 = ssub.s32 %s20, %s27
    %s123 = sor.u32 %s121, %s122
    %p124 = scmp.eq.s32.totalorder %s123, 0
    %s126 = sadd.s32 %s125, 1
    %s127 = scalar_select %p124, %s125, %s126
    %p130 = pneg %p124
    %p131 = scmp.eq.s32.totalorder %s12, 1
    %p132 = por %p130, %p131
    %p133 = scmp.ne.s32.totalorder %s125, %s128
    %p134 = scmp.eq.s32.totalorder %s12, 0
    %p135 = por %p133, %p134
    %p136 = scmp.ne.s32.totalorder %s125, %s128
    %p137 = scmp.eq.s32.totalorder %s17, 1
    %p138 = por %p136, %p137
    %p139 = scmp.ne.s32.totalorder %s128, %s129
    %p140 = scmp.eq.s32.totalorder %s17, 0
    %p141 = por %p139, %p140
    %p142 = scmp.ne.s32.totalorder %s128, %s129
    %p143 = scmp.eq.s32.totalorder %s18, 1
    %p144 = por %p142, %p143
    %p146 = scmp.ne.s32.totalorder %s129, %s145
    %p147 = scmp.eq.s32.totalorder %s18, 0
    %p148 = por %p146, %p147
    %s149 = ssub.s32 %s19, %s31
    %s150 = ssub.s32 %s20, %s27
    %s151 = sor.u32 %s149, %s150
    %p152 = scmp.eq.s32.totalorder %s151, 0
    %s154 = sadd.s32 %s153, 1
    %s155 = scalar_select %p152, %s153, %s154
    %p158 = pneg %p152
    %p159 = scmp.eq.s32.totalorder %s12, 1
    %p160 = por %p158, %p159
    %p161 = scmp.ne.s32.totalorder %s153, %s156
    %p162 = scmp.eq.s32.totalorder %s12, 0
    %p163 = por %p161, %p162
    %p164 = scmp.ne.s32.totalorder %s153, %s156
    %p165 = scmp.eq.s32.totalorder %s17, 1
    %p166 = por %p164, %p165
    %p167 = scmp.ne.s32.totalorder %s156, %s157
    %p168 = scmp.eq.s32.totalorder %s17, 0
    %p169 = por %p167, %p168
    %p170 = scmp.ne.s32.totalorder %s156, %s157
    %p171 = scmp.eq.s32.totalorder %s18, 1
    %p172 = por %p170, %p171
    %p174 = scmp.ne.s32.totalorder %s157, %s173
    %p175 = scmp.eq.s32.totalorder %s18, 0
    %p176 = por %p174, %p175
    %p177 = scmp.le.s32.totalorder 1, %s12
    %p178 = scmp.lt.s32.totalorder %s12, 3
    %p179 = pnand %p177, %p178
    %p180 = pneg %p179
    // Predicated region
    $region9: #{residual_forward.4} parent=5 // pred_check
      _
    $region10: #{residual_forward.4} parent=5 // pred_check_branch
      %182 = sbr.rel (%p179) target = $region12
    $region11: #{residual_forward.4} parent=5 // pred_region
      %s183 = ssub.s32 %s12, 1
      // Predicated region
      $region13: #{residual_forward.4} parent=11 // pred_check
        %p184 = pneg %p71
      $region14: #{residual_forward.4} parent=11 // pred_check_branch
        %186 = sbr.rel (%p184) target = $region16
      $region15: #{residual_forward.4} parent=11 // pred_region
        _
      $region16: #{residual_forward.4} parent=11 // pred_fallthru
        _
      // Predicated region
      $region17: #{residual_forward.4} parent=11 // pred_check
        %p187 = pneg %p92
      $region18: #{residual_forward.4} parent=11 // pred_check_branch
        %189 = sbr.rel (%p187) target = $region20
      $region19: #{residual_forward.4} parent=11 // pred_region
        _
      $region20: #{residual_forward.4} parent=11 // pred_fallthru
        _
      // Predicated region
      $region21: #{residual_forward.4} parent=11 // pred_check
        %p190 = pneg %p113
      $region22: #{residual_forward.4} parent=11 // pred_check_branch
        %192 = sbr.rel (%p190) target = $region24
      $region23: #{residual_forward.4} parent=11 // pred_region
        _
      $region24: #{residual_forward.4} parent=11 // pred_fallthru
        _
    $region12: #{residual_forward.4} parent=5 // pred_fallthru
      _
    %p193 = scmp.lt.s32.totalorder %s12, 2
    // Predicated region
    $region25: #{residual_forward.4} parent=5 // pred_check
      %p194 = pneg %p193
    $region26: #{residual_forward.4} parent=5 // pred_check_branch
      %196 = sbr.rel (%p194) target = $region28
    $region27: #{residual_forward.4} parent=5 // pred_region
      // Predicated region
      $region29: #{residual_forward.4} parent=27 // pred_check
        %p197 = pneg %p44
      $region30: #{residual_forward.4} parent=27 // pred_check_branch
        %199 = sbr.rel (%p197) target = $region32
      $region31: #{residual_forward.4} parent=27 // pred_region
        %p200 = scmp.lt.s32.totalorder %s19, 1
        %s201 = scalar_select %p200, %s19, 1
        %s202 = smul.addr %s201, 8
        %s203 = smul.addr %s202, 4
        %s204 = scalar_lea.vmem %s0, %s203
      $region32: #{residual_forward.4} parent=27 // pred_fallthru
        _
    $region28: #{residual_forward.4} parent=5 // pred_fallthru
      _
    %p205 = scmp.le.s32.totalorder 1, %s12
    %p206 = scmp.lt.s32.totalorder %s12, 3
    %p207 = pnand %p205, %p206
    %p208 = pneg %p207
    // Predicated region
    $region33: #{residual_forward.4} parent=5 // pred_check
      _
    $region34: #{residual_forward.4} parent=5 // pred_check_branch
      %210 = sbr.rel (%p207) target = $region36
    $region35: #{residual_forward.4} parent=5 // pred_region
      %s211 = ssub.s32 %s12, 1
      %p212 = scmp.lt.s32.totalorder %s21, 1
      %s213 = scalar_select %p212, %s21, 1
      %s214 = smul.addr %s213, 8
      %s215 = smul.addr %s214, 4
      %s216 = scalar_lea.vmem %s0, %s215
      %p217 = pneg %p50
      %p218 = pneg %p47
      %p219 = pneg %p71
      %p220 = pneg %p68
      %p221 = pneg %p92
      %p222 = pneg %p89
      %p223 = pneg %p113
      %p224 = pneg %p110
      %p225 = pneg %p141
      %p226 = pneg %p138
      %s227 = smul.u32 8, %s22
      %p228 = scmp.lt.s32.totalorder %s21, 1
      %s229 = scalar_select %p228, %s21, 1
      %p230 = scmp.lt.s32.totalorder %s227, 7
      %s231 = scalar_select %p230, %s227, 7
      %s232 = smul.addr %s229, 8
      %s233 = sadd.s32 %s231, %s232
      %s234 = smul.addr %s233, 4
      %s235 = scalar_lea.vmem %s4, %s234
      %p236 = pneg %p169
      %p237 = pneg %p166
      %p238 = scmp.lt.s32.totalorder %s21, 1
      %s239 = scalar_select %p238, %s21, 1
      %p240 = scmp.lt.s32.totalorder %s22, 0
      %s241 = scalar_select %p240, %s22, 0
      %s242 = sadd.s32 %s241, %s239
      %s243 = smul.addr %s242, 2
      %s244 = scalar_lea.vmem %s5, %s243
      %p245 = scmp.lt.s32.totalorder %s21, 1
      %s246 = scalar_select %p245, %s21, 1
      %s247 = smul.addr %s246, 8
      %s248 = smul.addr %s247, 4
      %s249 = scalar_lea.vmem %s0, %s248
      %s250 = smul.u32 8, %s22
      %p251 = scmp.lt.s32.totalorder %s21, 1
      %s252 = scalar_select %p251, %s21, 1
      %p253 = scmp.lt.s32.totalorder %s250, 7
      %s254 = scalar_select %p253, %s250, 7
      %s255 = smul.addr %s252, 8
      %s256 = sadd.s32 %s254, %s255
      %s257 = smul.addr %s256, 4
      %s258 = scalar_lea.vmem %s4, %s257
      %s259 = smul.u32 8, %s22
      %p260 = scmp.lt.s32.totalorder %s21, 1
      %s261 = scalar_select %p260, %s21, 1
      %p262 = scmp.lt.s32.totalorder %s22, 0
      %s263 = scalar_select %p262, %s22, 0
      %s264 = sadd.s32 %s263, %s261
      %s265 = smul.addr %s264, 2
      %s266 = scalar_lea.vmem %s5, %s265
      %p268 = scmp.eq.s32.totalorder %s22, 0
      // Predicated region
      $region37: #{residual_forward.4} parent=35 // pred_check
        %p269 = pneg %p268
      $region38: #{residual_forward.4} parent=35 // pred_check_branch
        %271 = sbr.rel (%p269) target = $region40
      $region39: #{residual_forward.4} parent=35 // pred_region
        %272 = vst [vmem:[#allocation2] sm:$0xf] 0
        %273 = vst [vmem:[#allocation2 + $0x4] sm:$0x1] 0
        %274 = vst [vmem:[#allocation2 + $0x8] sm:$0xf] 0
        %275 = vst [vmem:[#allocation2 + $0xc] sm:$0x1] 0
        %276 = vst [vmem:[#allocation2 + $0x10] sm:$0xf] 0
        %277 = vst [vmem:[#allocation2 + $0x14] sm:$0x1] 0
        %278 = vst [vmem:[#allocation2 + $0x18] sm:$0xf] 0
        %279 = vst [vmem:[#allocation2 + $0x1c] sm:$0x1] 0
        %280 = vst [vmem:[#allocation2 + $0x20] sm:$0xf] 0
        %281 = vst [vmem:[#allocation2 + $0x24] sm:$0x1] 0
        %282 = vst [vmem:[#allocation2 + $0x28] sm:$0xf] 0
        %283 = vst [vmem:[#allocation2 + $0x2c] sm:$0x1] 0
        %284 = vst [vmem:[#allocation2 + $0x30] sm:$0xf] 0
        %285 = vst [vmem:[#allocation2 + $0x34] sm:$0x1] 0
        %286 = vst [vmem:[#allocation2 + $0x38] sm:$0xf] 0
        %287 = vst [vmem:[#allocation2 + $0x3c] sm:$0x1] 0
        %288 = vst [vmem:[#allocation2 + $0x40] sm:$0xf] 0
        %289 = vst [vmem:[#allocation2 + $0x44] sm:$0x1] 0
        %290 = vst [vmem:[#allocation2 + $0x48] sm:$0xf] 0
        %291 = vst [vmem:[#allocation2 + $0x4c] sm:$0x1] 0
        %v292 = vld [vmem:[%s249] sm:$0xf]
        %v293 = vld [vmem:[%s249 + $0x4] sm:$0xf]
        %v294 = vld [vmem:[%s249 + $0x8] sm:$0xf]
        %v295 = vld [vmem:[%s249 + $0xc] sm:$0xf]
        %v296 = vld [vmem:[%s249 + $0x10] sm:$0xf]
        %v297 = vld [vmem:[%s249 + $0x14] sm:$0xf]
        %v298 = vld [vmem:[%s249 + $0x18] sm:$0xf]
        %v299 = vld [vmem:[%s249 + $0x1c] sm:$0xf]
        %v300 = vunpack.c.l.bf16 %v292
        %v301 = vunpack.c.l.bf16 %v293
        %v302 = vunpack.c.l.bf16 %v294
        %v303 = vunpack.c.l.bf16 %v295
        %v304 = vunpack.c.l.bf16 %v296
        %v305 = vunpack.c.l.bf16 %v297
        %v306 = vunpack.c.l.bf16 %v298
        %v307 = vunpack.c.l.bf16 %v299
        %v308 = vld [vmem:[%s1] sm:$0x1]
        %v310 = vlaneseq
        %v311 = vshrl.u32 %v310, 7
        %v312 = vsub.s32 0, %v311
        %v313 = vrot.slane %v308, %v312
        %v315 = vmul.f32 %v300, %v313
        %v316 = vmul.f32 %v301, %v313
        %v317 = vmul.f32 %v302, %v313
        %v318 = vmul.f32 %v303, %v313
        %v319 = vmul.f32 %v304, %v313
        %v320 = vmul.f32 %v305, %v313
        %v321 = vmul.f32 %v306, %v313
        %v322 = vmul.f32 %v307, %v313
        %v323 = vld [vmem:[%s2] sm:$0x1]
        %v325 = vlaneseq
        %v326 = vshrl.u32 %v325, 7
        %v327 = vsub.s32 0, %v326
        %v328 = vrot.slane %v323, %v327
        %v330 = vadd.f32 %v315, %v328
        %v331 = vadd.f32 %v316, %v328
        %v332 = vadd.f32 %v317, %v328
        %v333 = vadd.f32 %v318, %v328
        %v334 = vadd.f32 %v319, %v328
        %v335 = vadd.f32 %v320, %v328
        %v336 = vadd.f32 %v321, %v328
        %v337 = vadd.f32 %v322, %v328
        %v338 = vmax.f32 %v330, 0.0
        %v339 = vmax.f32 %v331, 0.0
        %v340 = vmax.f32 %v332, 0.0
        %v341 = vmax.f32 %v333, 0.0
        %v342 = vmax.f32 %v334, 0.0
        %v343 = vmax.f32 %v335, 0.0
        %v344 = vmax.f32 %v336, 0.0
        %v345 = vmax.f32 %v337, 0.0
        %v346 = vpack.c.bf16 %v338, %v338
        %v347 = vpack.c.bf16 %v339, %v339
        %v348 = vpack.c.bf16 %v340, %v340
        %v349 = vpack.c.bf16 %v341, %v341
        %v350 = vpack.c.bf16 %v342, %v342
        %v351 = vpack.c.bf16 %v343, %v343
        %v352 = vpack.c.bf16 %v344, %v344
        %v353 = vpack.c.bf16 %v345, %v345
        %v362 = vunpack.c.l.b16 %v346
        %v363 = vunpack.c.l.b16 %v347
        %v364 = vunpack.c.l.b16 %v348
        %v365 = vunpack.c.l.b16 %v349
        %v366 = vunpack.c.l.b16 %v350
        %v367 = vunpack.c.l.b16 %v351
        %v368 = vunpack.c.l.b16 %v352
        %v369 = vunpack.c.l.b16 %v353
        %v370 = vpack.c.b16 %v362, %v362
        %v371 = vpack.c.b16 %v363, %v363
        %v372 = vpack.c.b16 %v364, %v364
        %v373 = vpack.c.b16 %v365, %v365
        %v374 = vpack.c.b16 %v366, %v366
        %v375 = vpack.c.b16 %v367, %v367
        %v376 = vpack.c.b16 %v368, %v368
        %v377 = vpack.c.b16 %v369, %v369
        %v379 = vshrl.u32 %v370, 16
        %v381 = vrot.slane %v379, 7
        %v382 = vshll.u32 %v370, 16
        %v384 = vor.u32 %v381, %v382
        %v385 = vrot.slane %v381, 4
        %v387 = vshrl.u32 %v371, 16
        %v389 = vrot.slane %v387, 7
        %v390 = vshll.u32 %v371, 16
        %v392 = vor.u32 %v389, %v390
        %v393 = vrot.slane %v389, 4
        %v395 = vshrl.u32 %v372, 16
        %v397 = vrot.slane %v395, 7
        %v398 = vshll.u32 %v372, 16
        %v400 = vor.u32 %v397, %v398
        %v401 = vrot.slane %v397, 4
        %v403 = vshrl.u32 %v373, 16
        %v405 = vrot.slane %v403, 7
        %v406 = vshll.u32 %v373, 16
        %v408 = vor.u32 %v405, %v406
        %v409 = vrot.slane %v405, 4
        %v411 = vshrl.u32 %v374, 16
        %v413 = vrot.slane %v411, 7
        %v414 = vshll.u32 %v374, 16
        %v416 = vor.u32 %v413, %v414
        %v417 = vrot.slane %v413, 4
        %v419 = vshrl.u32 %v375, 16
        %v421 = vrot.slane %v419, 7
        %v422 = vshll.u32 %v375, 16
        %v424 = vor.u32 %v421, %v422
        %v425 = vrot.slane %v421, 4
        %v427 = vshrl.u32 %v376, 16
        %v429 = vrot.slane %v427, 7
        %v430 = vshll.u32 %v376, 16
        %v432 = vor.u32 %v429, %v430
        %v433 = vrot.slane %v429, 4
        %v435 = vshrl.u32 %v377, 16
        %v437 = vrot.slane %v435, 7
        %v438 = vshll.u32 %v377, 16
        %v440 = vor.u32 %v437, %v438
        %v441 = vrot.slane %v437, 4
        %s458 = scalar_lea.vmem [#allocation2], 8
        %vm459 = vcmask 1043456
        %vm460 = vsmask.f32 7938
        %vm461 = vmand %vm459, %vm460
        %v462 = vld [vmem:[%s458] sm:$0xf]
        %v463 = vsel %vm461, %v384, %v462
        %464 = vst [vmem:[%s458] sm:$0xf] %v463
        %vm465 = vcmask 1040384
        %vm466 = vsmask.f32 256
        %vm467 = vmand %vm465, %vm466
        %v468 = vld [vmem:[%s458 + $0x4] sm:$0x1]
        %v469 = vsel %vm467, %v385, %v468
        %470 = vst [vmem:[%s458 + $0x4] sm:$0x1] %v469
        %v471 = vld [vmem:[%s458 + $0x8] sm:$0xf]
        %v472 = vsel %vm461, %v392, %v471
        %473 = vst [vmem:[%s458 + $0x8] sm:$0xf] %v472
        %v474 = vld [vmem:[%s458 + $0xc] sm:$0x1]
        %v475 = vsel %vm467, %v393, %v474
        %476 = vst [vmem:[%s458 + $0xc] sm:$0x1] %v475
        %v477 = vld [vmem:[%s458 + $0x10] sm:$0xf]
        %v478 = vsel %vm461, %v400, %v477
        %479 = vst [vmem:[%s458 + $0x10] sm:$0xf] %v478
        %v480 = vld [vmem:[%s458 + $0x14] sm:$0x1]
        %v481 = vsel %vm467, %v401, %v480
        %482 = vst [vmem:[%s458 + $0x14] sm:$0x1] %v481
        %v483 = vld [vmem:[%s458 + $0x18] sm:$0xf]
        %v484 = vsel %vm461, %v408, %v483
        %485 = vst [vmem:[%s458 + $0x18] sm:$0xf] %v484
        %v486 = vld [vmem:[%s458 + $0x1c] sm:$0x1]
        %v487 = vsel %vm467, %v409, %v486
        %488 = vst [vmem:[%s458 + $0x1c] sm:$0x1] %v487
        %v489 = vld [vmem:[%s458 + $0x20] sm:$0xf]
        %v490 = vsel %vm461, %v416, %v489
        %491 = vst [vmem:[%s458 + $0x20] sm:$0xf] %v490
        %v492 = vld [vmem:[%s458 + $0x24] sm:$0x1]
        %v493 = vsel %vm467, %v417, %v492
        %494 = vst [vmem:[%s458 + $0x24] sm:$0x1] %v493
        %v495 = vld [vmem:[%s458 + $0x28] sm:$0xf]
        %v496 = vsel %vm461, %v424, %v495
        %497 = vst [vmem:[%s458 + $0x28] sm:$0xf] %v496
        %v498 = vld [vmem:[%s458 + $0x2c] sm:$0x1]
        %v499 = vsel %vm467, %v425, %v498
        %500 = vst [vmem:[%s458 + $0x2c] sm:$0x1] %v499
        %v501 = vld [vmem:[%s458 + $0x30] sm:$0xf]
        %v502 = vsel %vm461, %v432, %v501
        %503 = vst [vmem:[%s458 + $0x30] sm:$0xf] %v502
        %v504 = vld [vmem:[%s458 + $0x34] sm:$0x1]
        %v505 = vsel %vm467, %v433, %v504
        %506 = vst [vmem:[%s458 + $0x34] sm:$0x1] %v505
        %v507 = vld [vmem:[%s458 + $0x38] sm:$0xf]
        %v508 = vsel %vm461, %v440, %v507
        %509 = vst [vmem:[%s458 + $0x38] sm:$0xf] %v508
        %v510 = vld [vmem:[%s458 + $0x3c] sm:$0x1]
        %v511 = vsel %vm467, %v441, %v510
        %512 = vst [vmem:[%s458 + $0x3c] sm:$0x1] %v511
      $region40: #{residual_forward.4} parent=35 // pred_fallthru
        _
      %s513 = smul.u32 %s22, 8
      %s514 = smul.u32 %s513, 2
      %s515 = smul.addr %s514, 4
      %s516 = scalar_lea.vmem [#allocation2], %s515
      %v517 = vld [vmem:[%s516] sm:$0xf]
      %v518 = vld [vmem:[%s516 + $0x8] sm:$0xf]
      %v519 = vld [vmem:[%s516 + $0x10] sm:$0xf]
      %v520 = vld [vmem:[%s516 + $0x18] sm:$0xf]
      %v521 = vld [vmem:[%s516 + $0x20] sm:$0xf]
      %v522 = vld [vmem:[%s516 + $0x28] sm:$0xf]
      %v523 = vld [vmem:[%s516 + $0x30] sm:$0xf]
      %v524 = vld [vmem:[%s516 + $0x38] sm:$0xf]
      %v525 = vld [vmem:[%s3] sm:$0xf]
      %v526 = vld [vmem:[%s3 + $0x4] sm:$0xf]
      %v527 = vld [vmem:[%s3 + $0x8] sm:$0xf]
      %v528 = vld [vmem:[%s3 + $0xc] sm:$0xf]
      %v529 = vld [vmem:[%s3 + $0x10] sm:$0xf]
      %v530 = vld [vmem:[%s3 + $0x14] sm:$0xf]
      %v531 = vld [vmem:[%s3 + $0x18] sm:$0xf]
      %v532 = vld [vmem:[%s3 + $0x1c] sm:$0xf]
      %v533 = vld [vmem:[%s3 + $0x20] sm:$0xf]
      %v534 = vld [vmem:[%s3 + $0x24] sm:$0xf]
      %v535 = vld [vmem:[%s3 + $0x28] sm:$0xf]
      %v536 = vld [vmem:[%s3 + $0x2c] sm:$0xf]
      %v537 = vld [vmem:[%s3 + $0x30] sm:$0xf]
      %v538 = vld [vmem:[%s3 + $0x34] sm:$0xf]
      %v539 = vld [vmem:[%s3 + $0x38] sm:$0xf]
      %v540 = vld [vmem:[%s3 + $0x3c] sm:$0xf]
      %v541 = vld [vmem:[%s516 + $0x4] sm:$0x1]
      %v542 = vld [vmem:[%s516 + $0xc] sm:$0x1]
      %v543 = vld [vmem:[%s516 + $0x14] sm:$0x1]
      %v544 = vld [vmem:[%s516 + $0x1c] sm:$0x1]
      %v545 = vld [vmem:[%s516 + $0x24] sm:$0x1]
      %v546 = vld [vmem:[%s516 + $0x2c] sm:$0x1]
      %v547 = vld [vmem:[%s516 + $0x34] sm:$0x1]
      %v548 = vld [vmem:[%s516 + $0x3c] sm:$0x1]
      %vm549 = vsmask.f32 3328
      %vm550 = vsmask.f32 7440
      %vm551 = vmor %vm549, %vm550
      %v553 = vshrl.u32 %v517, 16
      %v555 = vrot.slane %v553, 4
      %v556 = vshll.u32 %v517, 16
      %v558 = vrot.slane %v556, 5
      %v559 = vor.u32 %v555, %v558
      %v560 = vrot.slane %v559, 4
      %v562 = vshll.u32 %v541, 16
      %v564 = vrot.slane %v562, 5
      %v565 = vsel %vm551, %v560, %v564
      %v567 = vshrl.u32 %v518, 16
      %v569 = vrot.slane %v567, 4
      %v570 = vshll.u32 %v518, 16
      %v572 = vrot.slane %v570, 5
      %v573 = vor.u32 %v569, %v572
      %v574 = vrot.slane %v573, 4
      %v576 = vshll.u32 %v542, 16
      %v578 = vrot.slane %v576, 5
      %v579 = vsel %vm551, %v574, %v578
      %v581 = vshrl.u32 %v519, 16
      %v583 = vrot.slane %v581, 4
      %v584 = vshll.u32 %v519, 16
      %v586 = vrot.slane %v584, 5
      %v587 = vor.u32 %v583, %v586
      %v588 = vrot.slane %v587, 4
      %v590 = vshll.u32 %v543, 16
      %v592 = vrot.slane %v590, 5
      %v593 = vsel %vm551, %v588, %v592
      %v595 = vshrl.u32 %v520, 16
      %v597 = vrot.slane %v595, 4
      %v598 = vshll.u32 %v520, 16
      %v600 = vrot.slane %v598, 5
      %v601 = vor.u32 %v597, %v600
      %v602 = vrot.slane %v601, 4
      %v604 = vshll.u32 %v544, 16
      %v606 = vrot.slane %v604, 5
      %v607 = vsel %vm551, %v602, %v606
      %v609 = vshrl.u32 %v521, 16
      %v611 = vrot.slane %v609, 4
      %v612 = vshll.u32 %v521, 16
      %v614 = vrot.slane %v612, 5
      %v615 = vor.u32 %v611, %v614
      %v616 = vrot.slane %v615, 4
      %v618 = vshll.u32 %v545, 16
      %v620 = vrot.slane %v618, 5
      %v621 = vsel %vm551, %v616, %v620
      %v623 = vshrl.u32 %v522, 16
      %v625 = vrot.slane %v623, 4
      %v626 = vshll.u32 %v522, 16
      %v628 = vrot.slane %v626, 5
      %v629 = vor.u32 %v625, %v628
      %v630 = vrot.slane %v629, 4
      %v632 = vshll.u32 %v546, 16
      %v634 = vrot.slane %v632, 5
      %v635 = vsel %vm551, %v630, %v634
      %v637 = vshrl.u32 %v523, 16
      %v639 = vrot.slane %v637, 4
      %v640 = vshll.u32 %v523, 16
      %v642 = vrot.slane %v640, 5
      %v643 = vor.u32 %v639, %v642
      %v644 = vrot.slane %v643, 4
      %v646 = vshll.u32 %v547, 16
      %v648 = vrot.slane %v646, 5
      %v649 = vsel %vm551, %v644, %v648
      %v651 = vshrl.u32 %v524, 16
      %v653 = vrot.slane %v651, 4
      %v654 = vshll.u32 %v524, 16
      %v656 = vrot.slane %v654, 5
      %v657 = vor.u32 %v653, %v656
      %v658 = vrot.slane %v657, 4
      %v660 = vshll.u32 %v548, 16
      %v662 = vrot.slane %v660, 5
      %v663 = vsel %vm551, %v658, %v662
      %s664 = scalar_lea.vmem %s3, 64
      %v665 = vld [vmem:[%s664] sm:$0xf]
      %v666 = vld [vmem:[%s664 + $0x4] sm:$0xf]
      %v667 = vld [vmem:[%s664 + $0x8] sm:$0xf]
      %v668 = vld [vmem:[%s664 + $0xc] sm:$0xf]
      %v669 = vld [vmem:[%s664 + $0x10] sm:$0xf]
      %v670 = vld [vmem:[%s664 + $0x14] sm:$0xf]
      %v671 = vld [vmem:[%s664 + $0x18] sm:$0xf]
      %v672 = vld [vmem:[%s664 + $0x1c] sm:$0xf]
      %v673 = vld [vmem:[%s664 + $0x20] sm:$0xf]
      %v674 = vld [vmem:[%s664 + $0x24] sm:$0xf]
      %v675 = vld [vmem:[%s664 + $0x28] sm:$0xf]
      %v676 = vld [vmem:[%s664 + $0x2c] sm:$0xf]
      %v677 = vld [vmem:[%s664 + $0x30] sm:$0xf]
      %v678 = vld [vmem:[%s664 + $0x34] sm:$0xf]
      %v679 = vld [vmem:[%s664 + $0x38] sm:$0xf]
      %v680 = vld [vmem:[%s664 + $0x3c] sm:$0xf]
      %v681 = vunpack.c.l.b16 %v565
      %v682 = vunpack.c.l.b16 %v579
      %v683 = vunpack.c.l.b16 %v593
      %v684 = vunpack.c.l.b16 %v607
      %v685 = vunpack.c.l.b16 %v621
      %v686 = vunpack.c.l.b16 %v635
      %v687 = vunpack.c.l.b16 %v649
      %v688 = vunpack.c.l.b16 %v663
      %v689 = vpack.c.b16 %v682, %v681
      %v690 = vpack.c.b16 %v684, %v683
      %v691 = vpack.c.b16 %v686, %v685
      %v692 = vpack.c.b16 %v688, %v687
      %v713 = vunpack.c.l.b16 %v665
      %v714 = vunpack.c.l.b16 %v666
      %v715 = vunpack.c.l.b16 %v667
      %v716 = vunpack.c.l.b16 %v668
      %v717 = vunpack.c.l.b16 %v669
      %v718 = vunpack.c.l.b16 %v670
      %v719 = vunpack.c.l.b16 %v671
      %v720 = vunpack.c.l.b16 %v672
      %v721 = vunpack.c.l.b16 %v673
      %v722 = vunpack.c.l.b16 %v674
      %v723 = vunpack.c.l.b16 %v675
      %v724 = vunpack.c.l.b16 %v676
      %v725 = vunpack.c.l.b16 %v677
      %v726 = vunpack.c.l.b16 %v678
      %v727 = vunpack.c.l.b16 %v679
      %v728 = vunpack.c.l.b16 %v680
      %v729 = vpack.c.b16 %v714, %v713
      %v730 = vpack.c.b16 %v716, %v715
      %v731 = vpack.c.b16 %v718, %v717
      %v732 = vpack.c.b16 %v720, %v719
      %v733 = vpack.c.b16 %v722, %v721
      %v734 = vpack.c.b16 %v724, %v723
      %v735 = vpack.c.b16 %v726, %v725
      %v736 = vpack.c.b16 %v728, %v727
      %745 = vmatprep.subr.bf16.mxu0 0
      %746 = vmatpush1.bf16.msra.mxu0 %v729
      %747 = vmatprep.subr.bf16.mxu0 0
      %748 = vmatpush1.bf16.msra.mxu0 %v730
      %749 = vmatprep.subr.bf16.mxu0 0
      %750 = vmatpush1.bf16.msra.mxu0 %v731
      %751 = vmatprep.subr.bf16.mxu0 0
      %752 = vmatpush1.bf16.msra.mxu0 %v732
      %753 = vmatprep.subr.bf16.mxu0 0
      %754 = vmatpush1.bf16.msra.mxu0 %v733
      %755 = vmatprep.subr.bf16.mxu0 0
      %756 = vmatpush1.bf16.msra.mxu0 %v734
      %757 = vmatprep.subr.bf16.mxu0 0
      %758 = vmatpush1.bf16.msra.mxu0 %v735
      %759 = vmatprep.subr.bf16.mxu0 0
      %760 = vmatpush1.bf16.msra.mxu0 %v736
      %761 = vmatprep.subr.bf16.mxu0 0
      %762 = vmatpush1.bf16.msra.mxu0 0
      %763 = vmatprep.subr.bf16.mxu0 0
      %764 = vmatpush1.bf16.msra.mxu0 0
      %765 = vmatprep.subr.bf16.mxu0 0
      %766 = vmatpush1.bf16.msra.mxu0 0
      %767 = vmatprep.subr.bf16.mxu0 0
      %768 = vmatpush1.bf16.msra.mxu0 0
      %769 = vmatprep.subr.bf16.mxu0 0
      %770 = vmatpush1.bf16.msra.mxu0 0
      %771 = vmatprep.subr.bf16.mxu0 0
      %772 = vmatpush1.bf16.msra.mxu0 0
      %773 = vmatprep.subr.bf16.mxu0 0
      %774 = vmatpush1.bf16.msra.mxu0 0
      %775 = vmatprep.subr.bf16.mxu0 0
      %776 = vmatpush1.bf16.msra.mxu0 0
      %777 = vmatprep.mubr.bf16.mxu0 0
      %778 = vmatmul.mubr.bf16.gmra.mrb[0].mxu0 %v689
      %v779 = vpop.f32.mrb[0].mxu0
      %v780 = vadd.f32 0.0, %v779
      %v781 = vpop.f32.mrb[0].mxu0
      %v782 = vpop.f32.mrb[0].mxu0
      %v783 = vadd.f32 0.0, %v782
      %v784 = vpop.f32.mrb[0].mxu0
      %785 = vmatprep.mubr.bf16.mxu0 0
      %786 = vmatmul.mubr.bf16.gmra.mrb[0].mxu0 %v690
      %v787 = vpop.f32.mrb[0].mxu0
      %v788 = vadd.f32 0.0, %v787
      %v789 = vpop.f32.mrb[0].mxu0
      %v790 = vpop.f32.mrb[0].mxu0
      %v791 = vadd.f32 0.0, %v790
      %v792 = vpop.f32.mrb[0].mxu0
      %793 = vmatprep.mubr.bf16.mxu0 0
      %794 = vmatmul.mubr.bf16.gmra.mrb[0].mxu0 %v691
      %v795 = vpop.f32.mrb[0].mxu0
      %v796 = vadd.f32 0.0, %v795
      %v797 = vpop.f32.mrb[0].mxu0
      %v798 = vpop.f32.mrb[0].mxu0
      %v799 = vadd.f32 0.0, %v798
      %v800 = vpop.f32.mrb[0].mxu0
      %801 = vmatprep.mubr.bf16.mxu0 0
      %802 = vmatmul.mubr.bf16.gmra.mrb[0].mxu0 %v692
      %v803 = vpop.f32.mrb[0].mxu0
      %v804 = vadd.f32 0.0, %v803
      %v805 = vpop.f32.mrb[0].mxu0
      %v806 = vpop.f32.mrb[0].mxu0
      %v807 = vadd.f32 0.0, %v806
      %v808 = vpop.f32.mrb[0].mxu0
      %809 = vdwg.mxu0
      %v818 = vunpack.c.l.b16 %v517
      %v819 = vunpack.c.l.b16 %v518
      %v820 = vunpack.c.l.b16 %v519
      %v821 = vunpack.c.l.b16 %v520
      %v822 = vunpack.c.l.b16 %v521
      %v823 = vunpack.c.l.b16 %v522
      %v824 = vunpack.c.l.b16 %v523
      %v825 = vunpack.c.l.b16 %v524
      %v826 = vpack.c.b16 %v819, %v818
      %v827 = vpack.c.b16 %v821, %v820
      %v828 = vpack.c.b16 %v823, %v822
      %v829 = vpack.c.b16 %v825, %v824
      %v850 = vunpack.c.l.b16 %v525
      %v851 = vunpack.c.l.b16 %v526
      %v852 = vunpack.c.l.b16 %v527
      %v853 = vunpack.c.l.b16 %v528
      %v854 = vunpack.c.l.b16 %v529
      %v855 = vunpack.c.l.b16 %v530
      %v856 = vunpack.c.l.b16 %v531
      %v857 = vunpack.c.l.b16 %v532
      %v858 = vunpack.c.l.b16 %v533
      %v859 = vunpack.c.l.b16 %v534
      %v860 = vunpack.c.l.b16 %v535
      %v861 = vunpack.c.l.b16 %v536
      %v862 = vunpack.c.l.b16 %v537
      %v863 = vunpack.c.l.b16 %v538
      %v864 = vunpack.c.l.b16 %v539
      %v865 = vunpack.c.l.b16 %v540
      %v866 = vpack.c.b16 %v851, %v850
      %v867 = vpack.c.b16 %v853, %v852
      %v868 = vpack.c.b16 %v855, %v854
      %v869 = vpack.c.b16 %v857, %v856
      %v870 = vpack.c.b16 %v859, %v858
      %v871 = vpack.c.b16 %v861, %v860
      %v872 = vpack.c.b16 %v863, %v862
      %v873 = vpack.c.b16 %v865, %v864
      %882 = vmatprep.subr.bf16.mxu0 0
      %883 = vmatpush1.bf16.msra.mxu0 %v866
      %884 = vmatprep.subr.bf16.mxu0 0
      %885 = vmatpush1.bf16.msra.mxu0 %v867
      %886 = vmatprep.subr.bf16.mxu0 0
      %887 = vmatpush1.bf16.msra.mxu0 %v868
      %888 = vmatprep.subr.bf16.mxu0 0
      %889 = vmatpush1.bf16.msra.mxu0 %v869
      %890 = vmatprep.subr.bf16.mxu0 0
      %891 = vmatpush1.bf16.msra.mxu0 %v870
      %892 = vmatprep.subr.bf16.mxu0 0
      %893 = vmatpush1.bf16.msra.mxu0 %v871
      %894 = vmatprep.subr.bf16.mxu0 0
      %895 = vmatpush1.bf16.msra.mxu0 %v872
      %896 = vmatprep.subr.bf16.mxu0 0
      %897 = vmatpush1.bf16.msra.mxu0 %v873
      %898 = vmatprep.subr.bf16.mxu0 0
      %899 = vmatpush1.bf16.msra.mxu0 0
      %900 = vmatprep.subr.bf16.mxu0 0
      %901 = vmatpush1.bf16.msra.mxu0 0
      %902 = vmatprep.subr.bf16.mxu0 0
      %903 = vmatpush1.bf16.msra.mxu0 0
      %904 = vmatprep.subr.bf16.mxu0 0
      %905 = vmatpush1.bf16.msra.mxu0 0
      %906 = vmatprep.subr.bf16.mxu0 0
      %907 = vmatpush1.bf16.msra.mxu0 0
      %908 = vmatprep.subr.bf16.mxu0 0
      %909 = vmatpush1.bf16.msra.mxu0 0
      %910 = vmatprep.subr.bf16.mxu0 0
      %911 = vmatpush1.bf16.msra.mxu0 0
      %912 = vmatprep.subr.bf16.mxu0 0
      %913 = vmatpush1.bf16.msra.mxu0 0
      %914 = vmatprep.mubr.bf16.mxu0 0
      %915 = vmatmul.mubr.bf16.gmra.mrb[0].mxu0 %v826
      %v916 = vpop.f32.mrb[0].mxu0
      %v917 = vadd.f32 %v780, %v916
      %v918 = vpop.f32.mrb[0].mxu0
      %v919 = vpop.f32.mrb[0].mxu0
      %v920 = vadd.f32 %v783, %v919
      %v921 = vpop.f32.mrb[0].mxu0
      %922 = vmatprep.mubr.bf16.mxu0 0
      %923 = vmatmul.mubr.bf16.gmra.mrb[0].mxu0 %v827
      %v924 = vpop.f32.mrb[0].mxu0
      %v925 = vadd.f32 %v788, %v924
      %v926 = vpop.f32.mrb[0].mxu0
      %v927 = vpop.f32.mrb[0].mxu0
      %v928 = vadd.f32 %v791, %v927
      %v929 = vpop.f32.mrb[0].mxu0
      %930 = vmatprep.mubr.bf16.mxu0 0
      %931 = vmatmul.mubr.bf16.gmra.mrb[0].mxu0 %v828
      %v932 = vpop.f32.mrb[0].mxu0
      %v933 = vadd.f32 %v796, %v932
      %v934 = vpop.f32.mrb[0].mxu0
      %v935 = vpop.f32.mrb[0].mxu0
      %v936 = vadd.f32 %v799, %v935
      %v937 = vpop.f32.mrb[0].mxu0
      %938 = vmatprep.mubr.bf16.mxu0 0
      %939 = vmatmul.mubr.bf16.gmra.mrb[0].mxu0 %v829
      %v940 = vpop.f32.mrb[0].mxu0
      %v941 = vadd.f32 %v804, %v940
      %v942 = vpop.f32.mrb[0].mxu0
      %v943 = vpop.f32.mrb[0].mxu0
      %v944 = vadd.f32 %v807, %v943
      %v945 = vpop.f32.mrb[0].mxu0
      %946 = vdwg.mxu0
      %v947 = vld [vmem:[%s516] sm:$0xe]
      %v948 = vld [vmem:[%s516 + $0x8] sm:$0xe]
      %v949 = vld [vmem:[%s516 + $0x10] sm:$0xe]
      %v950 = vld [vmem:[%s516 + $0x18] sm:$0xe]
      %v951 = vld [vmem:[%s516 + $0x20] sm:$0xe]
      %v952 = vld [vmem:[%s516 + $0x28] sm:$0xe]
      %v953 = vld [vmem:[%s516 + $0x30] sm:$0xe]
      %v954 = vld [vmem:[%s516 + $0x38] sm:$0xe]
      %vm971 = vcmask 1042432
      %vm972 = vcmask 1046532
      %vm973 = vmor %vm971, %vm972
      %v974 = vrot.slane %v947, 5
      %v975 = vrot.slane %v974, 4
      %v976 = vrot.slane %v541, 5
      %v977 = vsel %vm973, %v975, %v976
      %v978 = vrot.slane %v948, 5
      %v979 = vrot.slane %v978, 4
      %v980 = vrot.slane %v542, 5
      %v981 = vsel %vm973, %v979, %v980
      %v982 = vrot.slane %v949, 5
      %v983 = vrot.slane %v982, 4
      %v984 = vrot.slane %v543, 5
      %v985 = vsel %vm973, %v983, %v984
      %v986 = vrot.slane %v950, 5
      %v987 = vrot.slane %v986, 4
      %v988 = vrot.slane %v544, 5
      %v989 = vsel %vm973, %v987, %v988
      %v990 = vrot.slane %v951, 5
      %v991 = vrot.slane %v990, 4
      %v992 = vrot.slane %v545, 5
      %v993 = vsel %vm973, %v991, %v992
      %v994 = vrot.slane %v952, 5
      %v995 = vrot.slane %v994, 4
      %v996 = vrot.slane %v546, 5
      %v997 = vsel %vm973, %v995, %v996
      %v998 = vrot.slane %v953, 5
      %v999 = vrot.slane %v998, 4
      %v1000 = vrot.slane %v547, 5
      %v1001 = vsel %vm973, %v999, %v1000
      %v1002 = vrot.slane %v954, 5
      %v1003 = vrot.slane %v1002, 4
      %v1004 = vrot.slane %v548, 5
      %v1005 = vsel %vm973, %v1003, %v1004
      %s1006 = scalar_lea.vmem %s3, 128
      %v1007 = vld [vmem:[%s1006] sm:$0xf]
      %v1008 = vld [vmem:[%s1006 + $0x4] sm:$0xf]
      %v1009 = vld [vmem:[%s1006 + $0x8] sm:$0xf]
      %v1010 = vld [vmem:[%s1006 + $0xc] sm:$0xf]
      %v1011 = vld [vmem:[%s1006 + $0x10] sm:$0xf]
      %v1012 = vld [vmem:[%s1006 + $0x14] sm:$0xf]
      %v1013 = vld [vmem:[%s1006 + $0x18] sm:$0xf]
      %v1014 = vld [vmem:[%s1006 + $0x1c] sm:$0xf]
      %v1015 = vld [vmem:[%s1006 + $0x20] sm:$0xf]
      %v1016 = vld [vmem:[%s1006 + $0x24] sm:$0xf]
      %v1017 = vld [vmem:[%s1006 + $0x28] sm:$0xf]
      %v1018 = vld [vmem:[%s1006 + $0x2c] sm:$0xf]
      %v1019 = vld [vmem:[%s1006 + $0x30] sm:$0xf]
      %v1020 = vld [vmem:[%s1006 + $0x34] sm:$0xf]
      %v1021 = vld [vmem:[%s1006 + $0x38] sm:$0xf]
      %v1022 = vld [vmem:[%s1006 + $0x3c] sm:$0xf]
      %v1023 = vunpack.c.l.b16 %v977
      %v1024 = vunpack.c.l.b16 %v981
      %v1025 = vunpack.c.l.b16 %v985
      %v1026 = vunpack.c.l.b16 %v989
      %v1027 = vunpack.c.l.b16 %v993
      %v1028 = vunpack.c.l.b16 %v997
      %v1029 = vunpack.c.l.b16 %v1001
      %v1030 = vunpack.c.l.b16 %v1005
      %v1031 = vpack.c.b16 %v1024, %v1023
      %v1032 = vpack.c.b16 %v1026, %v1025
      %v1033 = vpack.c.b16 %v1028, %v1027
      %v1034 = vpack.c.b16 %v1030, %v1029
      %v1055 = vunpack.c.l.b16 %v1007
      %v1056 = vunpack.c.l.b16 %v1008
      %v1057 = vunpack.c.l.b16 %v1009
      %v1058 = vunpack.c.l.b16 %v1010
      %v1059 = vunpack.c.l.b16 %v1011
      %v1060 = vunpack.c.l.b16 %v1012
      %v1061 = vunpack.c.l.b16 %v1013
      %v1062 = vunpack.c.l.b16 %v1014
      %v1063 = vunpack.c.l.b16 %v1015
      %v1064 = vunpack.c.l.b16 %v1016
      %v1065 = vunpack.c.l.b16 %v1017
      %v1066 = vunpack.c.l.b16 %v1018
      %v1067 = vunpack.c.l.b16 %v1019
      %v1068 = vunpack.c.l.b16 %v1020
      %v1069 = vunpack.c.l.b16 %v1021
      %v1070 = vunpack.c.l.b16 %v1022
      %v1071 = vpack.c.b16 %v1056, %v1055
      %v1072 = vpack.c.b16 %v1058, %v1057
      %v1073 = vpack.c.b16 %v1060, %v1059
      %v1074 = vpack.c.b16 %v1062, %v1061
      %v1075 = vpack.c.b16 %v1064, %v1063
      %v1076 = vpack.c.b16 %v1066, %v1065
      %v1077 = vpack.c.b16 %v1068, %v1067
      %v1078 = vpack.c.b16 %v1070, %v1069
      %1087 = vmatprep.subr.bf16.mxu0 0
      %1088 = vmatpush1.bf16.msra.mxu0 %v1071
      %1089 = vmatprep.subr.bf16.mxu0 0
      %1090 = vmatpush1.bf16.msra.mxu0 %v1072
      %1091 = vmatprep.subr.bf16.mxu0 0
      %1092 = vmatpush1.bf16.msra.mxu0 %v1073
      %1093 = vmatprep.subr.bf16.mxu0 0
      %1094 = vmatpush1.bf16.msra.mxu0 %v1074
      %1095 = vmatprep.subr.bf16.mxu0 0
      %1096 = vmatpush1.bf16.msra.mxu0 %v1075
      %1097 = vmatprep.subr.bf16.mxu0 0
      %1098 = vmatpush1.bf16.msra.mxu0 %v1076
      %1099 = vmatprep.subr.bf16.mxu0 0
      %1100 = vmatpush1.bf16.msra.mxu0 %v1077
      %1101 = vmatprep.subr.bf16.mxu0 0
      %1102 = vmatpush1.bf16.msra.mxu0 %v1078
      %1103 = vmatprep.subr.bf16.mxu0 0
      %1104 = vmatpush1.bf16.msra.mxu0 0
      %1105 = vmatprep.subr.bf16.mxu0 0
      %1106 = vmatpush1.bf16.msra.mxu0 0
      %1107 = vmatprep.subr.bf16.mxu0 0
      %1108 = vmatpush1.bf16.msra.mxu0 0
      %1109 = vmatprep.subr.bf16.mxu0 0
      %1110 = vmatpush1.bf16.msra.mxu0 0
      %1111 = vmatprep.subr.bf16.mxu0 0
      %1112 = vmatpush1.bf16.msra.mxu0 0
      %1113 = vmatprep.subr.bf16.mxu0 0
      %1114 = vmatpush1.bf16.msra.mxu0 0
      %1115 = vmatprep.subr.bf16.mxu0 0
      %1116 = vmatpush1.bf16.msra.mxu0 0
      %1117 = vmatprep.subr.bf16.mxu0 0
      %1118 = vmatpush1.bf16.msra.mxu0 0
      %1119 = vmatprep.mubr.bf16.mxu0 0
      %1120 = vmatmul.mubr.bf16.gmra.mrb[0].mxu0 %v1031
      %v1121 = vpop.f32.mrb[0].mxu0
      %v1122 = vadd.f32 0.0, %v1121
      %v1123 = vpop.f32.mrb[0].mxu0
      %v1124 = vpop.f32.mrb[0].mxu0
      %v1125 = vadd.f32 0.0, %v1124
      %v1126 = vpop.f32.mrb[0].mxu0
      %1127 = vmatprep.mubr.bf16.mxu0 0
      %1128 = vmatmul.mubr.bf16.gmra.mrb[0].mxu0 %v1032
      %v1129 = vpop.f32.mrb[0].mxu0
      %v1130 = vadd.f32 0.0, %v1129
      %v1131 = vpop.f32.mrb[0].mxu0
      %v1132 = vpop.f32.mrb[0].mxu0
      %v1133 = vadd.f32 0.0, %v1132
      %v1134 = vpop.f32.mrb[0].mxu0
      %1135 = vmatprep.mubr.bf16.mxu0 0
      %1136 = vmatmul.mubr.bf16.gmra.mrb[0].mxu0 %v1033
      %v1137 = vpop.f32.mrb[0].mxu0
      %v1138 = vadd.f32 0.0, %v1137
      %v1139 = vpop.f32.mrb[0].mxu0
      %v1140 = vpop.f32.mrb[0].mxu0
      %v1141 = vadd.f32 0.0, %v1140
      %v1142 = vpop.f32.mrb[0].mxu0
      %1143 = vmatprep.mubr.bf16.mxu0 0
      %1144 = vmatmul.mubr.bf16.gmra.mrb[0].mxu0 %v1034
      %v1145 = vpop.f32.mrb[0].mxu0
      %v1146 = vadd.f32 0.0, %v1145
      %v1147 = vpop.f32.mrb[0].mxu0
      %v1148 = vpop.f32.mrb[0].mxu0
      %v1149 = vadd.f32 0.0, %v1148
      %v1150 = vpop.f32.mrb[0].mxu0
      %1151 = vdwg.mxu0
      %v1152 = vadd.f32 %v917, %v1122
      %v1153 = vadd.f32 %v920, %v1125
      %v1154 = vadd.f32 %v925, %v1130
      %v1155 = vadd.f32 %v928, %v1133
      %v1156 = vadd.f32 %v933, %v1138
      %v1157 = vadd.f32 %v936, %v1141
      %v1158 = vadd.f32 %v941, %v1146
      %v1159 = vadd.f32 %v944, %v1149
      %s1160 = sadd.s32 %s513, 1
      %s1161 = smul.u32 %s1160, 2
      %s1162 = smul.addr %s1161, 4
      %s1163 = scalar_lea.vmem [#allocation2], %s1162
      %v1164 = vld [vmem:[%s1163] sm:$0xf]
      %v1165 = vld [vmem:[%s1163 + $0x8] sm:$0xf]
      %v1166 = vld [vmem:[%s1163 + $0x10] sm:$0xf]
      %v1167 = vld [vmem:[%s1163 + $0x18] sm:$0xf]
      %v1168 = vld [vmem:[%s1163 + $0x20] sm:$0xf]
      %v1169 = vld [vmem:[%s1163 + $0x28] sm:$0xf]
      %v1170 = vld [vmem:[%s1163 + $0x30] sm:$0xf]
      %v1171 = vld [vmem:[%s1163 + $0x38] sm:$0xf]
      %s1172 = scalar_lea.vmem %s3, 192
      %v1173 = vld [vmem:[%s1172] sm:$0xf]
      %v1174 = vld [vmem:[%s1172 + $0x4] sm:$0xf]
      %v1175 = vld [vmem:[%s1172 + $0x8] sm:$0xf]
      %v1176 = vld [vmem:[%s1172 + $0xc] sm:$0xf]
      %v1177 = vld [vmem:[%s1172 + $0x10] sm:$0xf]
      %v1178 = vld [vmem:[%s1172 + $0x14] sm:$0xf]
      %v1179 = vld [vmem:[%s1172 + $0x18] sm:$0xf]
      %v1180 = vld [vmem:[%s1172 + $0x1c] sm:$0xf]
      %v1181 = vld [vmem:[%s1172 + $0x20] sm:$0xf]
      %v1182 = vld [vmem:[%s1172 + $0x24] sm:$0xf]
      %v1183 = vld [vmem:[%s1172 + $0x28] sm:$0xf]
      %v1184 = vld [vmem:[%s1172 + $0x2c] sm:$0xf]
      %v1185 = vld [vmem:[%s1172 + $0x30] sm:$0xf]
      %v1186 = vld [vmem:[%s1172 + $0x34] sm:$0xf]
      %v1187 = vld [vmem:[%s1172 + $0x38] sm:$0xf]
      %v1188 = vld [vmem:[%s1172 + $0x3c] sm:$0xf]
      %v1197 = vunpack.c.l.b16 %v1164
      %v1198 = vunpack.c.l.b16 %v1165
      %v1199 = vunpack.c.l.b16 %v1166
      %v1200 = vunpack.c.l.b16 %v1167
      %v1201 = vunpack.c.l.b16 %v1168
      %v1202 = vunpack.c.l.b16 %v1169
      %v1203 = vunpack.c.l.b16 %v1170
      %v1204 = vunpack.c.l.b16 %v1171
      %v1205 = vpack.c.b16 %v1198, %v1197
      %v1206 = vpack.c.b16 %v1200, %v1199
      %v1207 = vpack.c.b16 %v1202, %v1201
      %v1208 = vpack.c.b16 %v1204, %v1203
      %v1229 = vunpack.c.l.b16 %v1173
      %v1230 = vunpack.c.l.b16 %v1174
      %v1231 = vunpack.c.l.b16 %v1175
      %v1232 = vunpack.c.l.b16 %v1176
      %v1233 = vunpack.c.l.b16 %v1177
      %v1234 = vunpack.c.l.b16 %v1178
      %v1235 = vunpack.c.l.b16 %v1179
      %v1236 = vunpack.c.l.b16 %v1180
      %v1237 = vunpack.c.l.b16 %v1181
      %v1238 = vunpack.c.l.b16 %v1182
      %v1239 = vunpack.c.l.b16 %v1183
      %v1240 = vunpack.c.l.b16 %v1184
      %v1241 = vunpack.c.l.b16 %v1185
      %v1242 = vunpack.c.l.b16 %v1186
      %v1243 = vunpack.c.l.b16 %v1187
      %v1244 = vunpack.c.l.b16 %v1188
      %v1245 = vpack.c.b16 %v1230, %v1229
      %v1246 = vpack.c.b16 %v1232, %v1231
      %v1247 = vpack.c.b16 %v1234, %v1233
      %v1248 = vpack.c.b16 %v1236, %v1235
      %v1249 = vpack.c.b16 %v1238, %v1237
      %v1250 = vpack.c.b16 %v1240, %v1239
      %v1251 = vpack.c.b16 %v1242, %v1241
      %v1252 = vpack.c.b16 %v1244, %v1243
      %1261 = vmatprep.subr.bf16.mxu0 0
      %1262 = vmatpush1.bf16.msra.mxu0 %v1245
      %1263 = vmatprep.subr.bf16.mxu0 0
      %1264 = vmatpush1.bf16.msra.mxu0 %v1246
      %1265 = vmatprep.subr.bf16.mxu0 0
      %1266 = vmatpush1.bf16.msra.mxu0 %v1247
      %1267 = vmatprep.subr.bf16.mxu0 0
      %1268 = vmatpush1.bf16.msra.mxu0 %v1248
      %1269 = vmatprep.subr.bf16.mxu0 0
      %1270 = vmatpush1.bf16.msra.mxu0 %v1249
      %1271 = vmatprep.subr.bf16.mxu0 0
      %1272 = vmatpush1.bf16.msra.mxu0 %v1250
      %1273 = vmatprep.subr.bf16.mxu0 0
      %1274 = vmatpush1.bf16.msra.mxu0 %v1251
      %1275 = vmatprep.subr.bf16.mxu0 0
      %1276 = vmatpush1.bf16.msra.mxu0 %v1252
      %1277 = vmatprep.subr.bf16.mxu0 0
      %1278 = vmatpush1.bf16.msra.mxu0 0
      %1279 = vmatprep.subr.bf16.mxu0 0
      %1280 = vmatpush1.bf16.msra.mxu0 0
      %1281 = vmatprep.subr.bf16.mxu0 0
      %1282 = vmatpush1.bf16.msra.mxu0 0
      %1283 = vmatprep.subr.bf16.mxu0 0
      %1284 = vmatpush1.bf16.msra.mxu0 0
      %1285 = vmatprep.subr.bf16.mxu0 0
      %1286 = vmatpush1.bf16.msra.mxu0 0
      %1287 = vmatprep.subr.bf16.mxu0 0
      %1288 = vmatpush1.bf16.msra.mxu0 0
      %1289 = vmatprep.subr.bf16.mxu0 0
      %1290 = vmatpush1.bf16.msra.mxu0 0
      %1291 = vmatprep.subr.bf16.mxu0 0
      %1292 = vmatpush1.bf16.msra.mxu0 0
      %1293 = vmatprep.mubr.bf16.mxu0 0
      %1294 = vmatmul.mubr.bf16.gmra.mrb[0].mxu0 %v1205
      %v1295 = vpop.f32.mrb[0].mxu0
      %v1296 = vadd.f32 0.0, %v1295
      %v1297 = vpop.f32.mrb[0].mxu0
      %v1298 = vpop.f32.mrb[0].mxu0
      %v1299 = vadd.f32 0.0, %v1298
      %v1300 = vpop.f32.mrb[0].mxu0
      %1301 = vmatprep.mubr.bf16.mxu0 0
      %1302 = vmatmul.mubr.bf16.gmra.mrb[0].mxu0 %v1206
      %v1303 = vpop.f32.mrb[0].mxu0
      %v1304 = vadd.f32 0.0, %v1303
      %v1305 = vpop.f32.mrb[0].mxu0
      %v1306 = vpop.f32.mrb[0].mxu0
      %v1307 = vadd.f32 0.0, %v1306
      %v1308 = vpop.f32.mrb[0].mxu0
      %1309 = vmatprep.mubr.bf16.mxu0 0
      %1310 = vmatmul.mubr.bf16.gmra.mrb[0].mxu0 %v1207
      %v1311 = vpop.f32.mrb[0].mxu0
      %v1312 = vadd.f32 0.0, %v1311
      %v1313 = vpop.f32.mrb[0].mxu0
      %v1314 = vpop.f32.mrb[0].mxu0
      %v1315 = vadd.f32 0.0, %v1314
      %v1316 = vpop.f32.mrb[0].mxu0
      %1317 = vmatprep.mubr.bf16.mxu0 0
      %1318 = vmatmul.mubr.bf16.gmra.mrb[0].mxu0 %v1208
      %v1319 = vpop.f32.mrb[0].mxu0
      %v1320 = vadd.f32 0.0, %v1319
      %v1321 = vpop.f32.mrb[0].mxu0
      %v1322 = vpop.f32.mrb[0].mxu0
      %v1323 = vadd.f32 0.0, %v1322
      %v1324 = vpop.f32.mrb[0].mxu0
      %1325 = vdwg.mxu0
      %v1326 = vadd.f32 %v1152, %v1296
      %v1327 = vadd.f32 %v1153, %v1299
      %v1328 = vadd.f32 %v1154, %v1304
      %v1329 = vadd.f32 %v1155, %v1307
      %v1330 = vadd.f32 %v1156, %v1312
      %v1331 = vadd.f32 %v1157, %v1315
      %v1332 = vadd.f32 %v1158, %v1320
      %v1333 = vadd.f32 %v1159, %v1323
      %v1334 = vld [vmem:[%s1163] sm:$0xf]
      %v1335 = vld [vmem:[%s1163 + $0x4] sm:$0x1]
      %v1336 = vld [vmem:[%s1163 + $0x8] sm:$0xf]
      %v1337 = vld [vmem:[%s1163 + $0xc] sm:$0x1]
      %v1338 = vld [vmem:[%s1163 + $0x10] sm:$0xf]
      %v1339 = vld [vmem:[%s1163 + $0x14] sm:$0x1]
      %v1340 = vld [vmem:[%s1163 + $0x18] sm:$0xf]
      %v1341 = vld [vmem:[%s1163 + $0x1c] sm:$0x1]
      %v1342 = vld [vmem:[%s1163 + $0x20] sm:$0xf]
      %v1343 = vld [vmem:[%s1163 + $0x24] sm:$0x1]
      %v1344 = vld [vmem:[%s1163 + $0x28] sm:$0xf]
      %v1345 = vld [vmem:[%s1163 + $0x2c] sm:$0x1]
      %v1346 = vld [vmem:[%s1163 + $0x30] sm:$0xf]
      %v1347 = vld [vmem:[%s1163 + $0x34] sm:$0x1]
      %v1348 = vld [vmem:[%s1163 + $0x38] sm:$0xf]
      %v1349 = vld [vmem:[%s1163 + $0x3c] sm:$0x1]
      %v1351 = vshrl.u32 %v1334, 16
      %v1353 = vrot.slane %v1351, 4
      %v1354 = vshll.u32 %v1334, 16
      %v1356 = vrot.slane %v1354, 5
      %v1357 = vor.u32 %v1353, %v1356
      %v1358 = vrot.slane %v1357, 4
      %v1360 = vshll.u32 %v1335, 16
      %v1362 = vrot.slane %v1360, 5
      %v1363 = vsel %vm551, %v1358, %v1362
      %v1365 = vshrl.u32 %v1336, 16
      %v1367 = vrot.slane %v1365, 4
      %v1368 = vshll.u32 %v1336, 16
      %v1370 = vrot.slane %v1368, 5
      %v1371 = vor.u32 %v1367, %v1370
      %v1372 = vrot.slane %v1371, 4
      %v1374 = vshll.u32 %v1337, 16
      %v1376 = vrot.slane %v1374, 5
      %v1377 = vsel %vm551, %v1372, %v1376
      %v1379 = vshrl.u32 %v1338, 16
      %v1381 = vrot.slane %v1379, 4
      %v1382 = vshll.u32 %v1338, 16
      %v1384 = vrot.slane %v1382, 5
      %v1385 = vor.u32 %v1381, %v1384
      %v1386 = vrot.slane %v1385, 4
      %v1388 = vshll.u32 %v1339, 16
      %v1390 = vrot.slane %v1388, 5
      %v1391 = vsel %vm551, %v1386, %v1390
      %v1393 = vshrl.u32 %v1340, 16
      %v1395 = vrot.slane %v1393, 4
      %v1396 = vshll.u32 %v1340, 16
      %v1398 = vrot.slane %v1396, 5
      %v1399 = vor.u32 %v1395, %v1398
      %v1400 = vrot.slane %v1399, 4
      %v1402 = vshll.u32 %v1341, 16
      %v1404 = vrot.slane %v1402, 5
      %v1405 = vsel %vm551, %v1400, %v1404
      %v1407 = vshrl.u32 %v1342, 16
      %v1409 = vrot.slane %v1407, 4
      %v1410 = vshll.u32 %v1342, 16
      %v1412 = vrot.slane %v1410, 5
      %v1413 = vor.u32 %v1409, %v1412
      %v1414 = vrot.slane %v1413, 4
      %v1416 = vshll.u32 %v1343, 16
      %v1418 = vrot.slane %v1416, 5
      %v1419 = vsel %vm551, %v1414, %v1418
      %v1421 = vshrl.u32 %v1344, 16
      %v1423 = vrot.slane %v1421, 4
      %v1424 = vshll.u32 %v1344, 16
      %v1426 = vrot.slane %v1424, 5
      %v1427 = vor.u32 %v1423, %v1426
      %v1428 = vrot.slane %v1427, 4
      %v1430 = vshll.u32 %v1345, 16
      %v1432 = vrot.slane %v1430, 5
      %v1433 = vsel %vm551, %v1428, %v1432
      %v1435 = vshrl.u32 %v1346, 16
      %v1437 = vrot.slane %v1435, 4
      %v1438 = vshll.u32 %v1346, 16
      %v1440 = vrot.slane %v1438, 5
      %v1441 = vor.u32 %v1437, %v1440
      %v1442 = vrot.slane %v1441, 4
      %v1444 = vshll.u32 %v1347, 16
      %v1446 = vrot.slane %v1444, 5
      %v1447 = vsel %vm551, %v1442, %v1446
      %v1449 = vshrl.u32 %v1348, 16
      %v1451 = vrot.slane %v1449, 4
      %v1452 = vshll.u32 %v1348, 16
      %v1454 = vrot.slane %v1452, 5
      %v1455 = vor.u32 %v1451, %v1454
      %v1456 = vrot.slane %v1455, 4
      %v1458 = vshll.u32 %v1349, 16
      %v1460 = vrot.slane %v1458, 5
      %v1461 = vsel %vm551, %v1456, %v1460
      %s1462 = scalar_lea.vmem %s3, 256
      %v1463 = vld [vmem:[%s1462] sm:$0xf]
      %v1464 = vld [vmem:[%s1462 + $0x4] sm:$0xf]
      %v1465 = vld [vmem:[%s1462 + $0x8] sm:$0xf]
      %v1466 = vld [vmem:[%s1462 + $0xc] sm:$0xf]
      %v1467 = vld [vmem:[%s1462 + $0x10] sm:$0xf]
      %v1468 = vld [vmem:[%s1462 + $0x14] sm:$0xf]
      %v1469 = vld [vmem:[%s1462 + $0x18] sm:$0xf]
      %v1470 = vld [vmem:[%s1462 + $0x1c] sm:$0xf]
      %v1471 = vld [vmem:[%s1462 + $0x20] sm:$0xf]
      %v1472 = vld [vmem:[%s1462 + $0x24] sm:$0xf]
      %v1473 = vld [vmem:[%s1462 + $0x28] sm:$0xf]
      %v1474 = vld [vmem:[%s1462 + $0x2c] sm:$0xf]
      %v1475 = vld [vmem:[%s1462 + $0x30] sm:$0xf]
      %v1476 = vld [vmem:[%s1462 + $0x34] sm:$0xf]
      %v1477 = vld [vmem:[%s1462 + $0x38] sm:$0xf]
      %v1478 = vld [vmem:[%s1462 + $0x3c] sm:$0xf]
      %v1479 = vunpack.c.l.b16 %v1363
      %v1480 = vunpack.c.l.b16 %v1377
      %v1481 = vunpack.c.l.b16 %v1391
      %v1482 = vunpack.c.l.b16 %v1405
      %v1483 = vunpack.c.l.b16 %v1419
      %v1484 = vunpack.c.l.b16 %v1433
      %v1485 = vunpack.c.l.b16 %v1447
      %v1486 = vunpack.c.l.b16 %v1461
      %v1487 = vpack.c.b16 %v1480, %v1479
      %v1488 = vpack.c.b16 %v1482, %v1481
      %v1489 = vpack.c.b16 %v1484, %v1483
      %v1490 = vpack.c.b16 %v1486, %v1485
      %v1511 = vunpack.c.l.b16 %v1463
      %v1512 = vunpack.c.l.b16 %v1464
      %v1513 = vunpack.c.l.b16 %v1465
      %v1514 = vunpack.c.l.b16 %v1466
      %v1515 = vunpack.c.l.b16 %v1467
      %v1516 = vunpack.c.l.b16 %v1468
      %v1517 = vunpack.c.l.b16 %v1469
      %v1518 = vunpack.c.l.b16 %v1470
      %v1519 = vunpack.c.l.b16 %v1471
      %v1520 = vunpack.c.l.b16 %v1472
      %v1521 = vunpack.c.l.b16 %v1473
      %v1522 = vunpack.c.l.b16 %v1474
      %v1523 = vunpack.c.l.b16 %v1475
      %v1524 = vunpack.c.l.b16 %v1476
      %v1525 = vunpack.c.l.b16 %v1477
      %v1526 = vunpack.c.l.b16 %v1478
      %v1527 = vpack.c.b16 %v1512, %v1511
      %v1528 = vpack.c.b16 %v1514, %v1513
      %v1529 = vpack.c.b16 %v1516, %v1515
      %v1530 = vpack.c.b16 %v1518, %v1517
      %v1531 = vpack.c.b16 %v1520, %v1519
      %v1532 = vpack.c.b16 %v1522, %v1521
      %v1533 = vpack.c.b16 %v1524, %v1523
      %v1534 = vpack.c.b16 %v1526, %v1525
      %1543 = vmatprep.subr.bf16.mxu0 0
      %1544 = vmatpush1.bf16.msra.mxu0 %v1527
      %1545 = vmatprep.subr.bf16.mxu0 0
      %1546 = vmatpush1.bf16.msra.mxu0 %v1528
      %1547 = vmatprep.subr.bf16.mxu0 0
      %1548 = vmatpush1.bf16.msra.mxu0 %v1529
      %1549 = vmatprep.subr.bf16.mxu0 0
      %1550 = vmatpush1.bf16.msra.mxu0 %v1530
      %1551 = vmatprep.subr.bf16.mxu0 0
      %1552 = vmatpush1.bf16.msra.mxu0 %v1531
      %1553 = vmatprep.subr.bf16.mxu0 0
      %1554 = vmatpush1.bf16.msra.mxu0 %v1532
      %1555 = vmatprep.subr.bf16.mxu0 0
      %1556 = vmatpush1.bf16.msra.mxu0 %v1533
      %1557 = vmatprep.subr.bf16.mxu0 0
      %1558 = vmatpush1.bf16.msra.mxu0 %v1534
      %1559 = vmatprep.subr.bf16.mxu0 0
      %1560 = vmatpush1.bf16.msra.mxu0 0
      %1561 = vmatprep.subr.bf16.mxu0 0
      %1562 = vmatpush1.bf16.msra.mxu0 0
      %1563 = vmatprep.subr.bf16.mxu0 0
      %1564 = vmatpush1.bf16.msra.mxu0 0
      %1565 = vmatprep.subr.bf16.mxu0 0
      %1566 = vmatpush1.bf16.msra.mxu0 0
      %1567 = vmatprep.subr.bf16.mxu0 0
      %1568 = vmatpush1.bf16.msra.mxu0 0
      %1569 = vmatprep.subr.bf16.mxu0 0
      %1570 = vmatpush1.bf16.msra.mxu0 0
      %1571 = vmatprep.subr.bf16.mxu0 0
      %1572 = vmatpush1.bf16.msra.mxu0 0
      %1573 = vmatprep.subr.bf16.mxu0 0
      %1574 = vmatpush1.bf16.msra.mxu0 0
      %1575 = vmatprep.mubr.bf16.mxu0 0
      %1576 = vmatmul.mubr.bf16.gmra.mrb[0].mxu0 %v1487
      %v1577 = vpop.f32.mrb[0].mxu0
      %v1578 = vadd.f32 0.0, %v1577
      %v1579 = vpop.f32.mrb[0].mxu0
      %v1580 = vpop.f32.mrb[0].mxu0
      %v1581 = vadd.f32 0.0, %v1580
      %v1582 = vpop.f32.mrb[0].mxu0
      %1583 = vmatprep.mubr.bf16.mxu0 0
      %1584 = vmatmul.mubr.bf16.gmra.mrb[0].mxu0 %v1488
      %v1585 = vpop.f32.mrb[0].mxu0
      %v1586 = vadd.f32 0.0, %v1585
      %v1587 = vpop.f32.mrb[0].mxu0
      %v1588 = vpop.f32.mrb[0].mxu0
      %v1589 = vadd.f32 0.0, %v1588
      %v1590 = vpop.f32.mrb[0].mxu0
      %1591 = vmatprep.mubr.bf16.mxu0 0
      %1592 = vmatmul.mubr.bf16.gmra.mrb[0].mxu0 %v1489
      %v1593 = vpop.f32.mrb[0].mxu0
      %v1594 = vadd.f32 0.0, %v1593
      %v1595 = vpop.f32.mrb[0].mxu0
      %v1596 = vpop.f32.mrb[0].mxu0
      %v1597 = vadd.f32 0.0, %v1596
      %v1598 = vpop.f32.mrb[0].mxu0
      %1599 = vmatprep.mubr.bf16.mxu0 0
      %1600 = vmatmul.mubr.bf16.gmra.mrb[0].mxu0 %v1490
      %v1601 = vpop.f32.mrb[0].mxu0
      %v1602 = vadd.f32 0.0, %v1601
      %v1603 = vpop.f32.mrb[0].mxu0
      %v1604 = vpop.f32.mrb[0].mxu0
      %v1605 = vadd.f32 0.0, %v1604
      %v1606 = vpop.f32.mrb[0].mxu0
      %1607 = vdwg.mxu0
      %v1608 = vadd.f32 %v1326, %v1578
      %v1609 = vadd.f32 %v1327, %v1581
      %v1610 = vadd.f32 %v1328, %v1586
      %v1611 = vadd.f32 %v1329, %v1589
      %v1612 = vadd.f32 %v1330, %v1594
      %v1613 = vadd.f32 %v1331, %v1597
      %v1614 = vadd.f32 %v1332, %v1602
      %v1615 = vadd.f32 %v1333, %v1605
      %v1616 = vld [vmem:[%s1163] sm:$0xe]
      %v1617 = vld [vmem:[%s1163 + $0x8] sm:$0xe]
      %v1618 = vld [vmem:[%s1163 + $0x10] sm:$0xe]
      %v1619 = vld [vmem:[%s1163 + $0x18] sm:$0xe]
      %v1620 = vld [vmem:[%s1163 + $0x20] sm:$0xe]
      %v1621 = vld [vmem:[%s1163 + $0x28] sm:$0xe]
      %v1622 = vld [vmem:[%s1163 + $0x30] sm:$0xe]
      %v1623 = vld [vmem:[%s1163 + $0x38] sm:$0xe]
      %v1640 = vrot.slane %v1616, 5
      %v1641 = vrot.slane %v1640, 4
      %v1642 = vrot.slane %v1335, 5
      %v1643 = vsel %vm973, %v1641, %v1642
      %v1644 = vrot.slane %v1617, 5
      %v1645 = vrot.slane %v1644, 4
      %v1646 = vrot.slane %v1337, 5
      %v1647 = vsel %vm973, %v1645, %v1646
      %v1648 = vrot.slane %v1618, 5
      %v1649 = vrot.slane %v1648, 4
      %v1650 = vrot.slane %v1339, 5
      %v1651 = vsel %vm973, %v1649, %v1650
      %v1652 = vrot.slane %v1619, 5
      %v1653 = vrot.slane %v1652, 4
      %v1654 = vrot.slane %v1341, 5
      %v1655 = vsel %vm973, %v1653, %v1654
      %v1656 = vrot.slane %v1620, 5
      %v1657 = vrot.slane %v1656, 4
      %v1658 = vrot.slane %v1343, 5
      %v1659 = vsel %vm973, %v1657, %v1658
      %v1660 = vrot.slane %v1621, 5
      %v1661 = vrot.slane %v1660, 4
      %v1662 = vrot.slane %v1345, 5
      %v1663 = vsel %vm973, %v1661, %v1662
      %v1664 = vrot.slane %v1622, 5
      %v1665 = vrot.slane %v1664, 4
      %v1666 = vrot.slane %v1347, 5
      %v1667 = vsel %vm973, %v1665, %v1666
      %v1668 = vrot.slane %v1623, 5
      %v1669 = vrot.slane %v1668, 4
      %v1670 = vrot.slane %v1349, 5
      %v1671 = vsel %vm973, %v1669, %v1670
      %s1672 = scalar_lea.vmem %s3, 320
      %v1673 = vld [vmem:[%s1672] sm:$0xf]
      %v1674 = vld [vmem:[%s1672 + $0x4] sm:$0xf]
      %v1675 = vld [vmem:[%s1672 + $0x8] sm:$0xf]
      %v1676 = vld [vmem:[%s1672 + $0xc] sm:$0xf]
      %v1677 = vld [vmem:[%s1672 + $0x10] sm:$0xf]
      %v1678 = vld [vmem:[%s1672 + $0x14] sm:$0xf]
      %v1679 = vld [vmem:[%s1672 + $0x18] sm:$0xf]
      %v1680 = vld [vmem:[%s1672 + $0x1c] sm:$0xf]
      %v1681 = vld [vmem:[%s1672 + $0x20] sm:$0xf]
      %v1682 = vld [vmem:[%s1672 + $0x24] sm:$0xf]
      %v1683 = vld [vmem:[%s1672 + $0x28] sm:$0xf]
      %v1684 = vld [vmem:[%s1672 + $0x2c] sm:$0xf]
      %v1685 = vld [vmem:[%s1672 + $0x30] sm:$0xf]
      %v1686 = vld [vmem:[%s1672 + $0x34] sm:$0xf]
      %v1687 = vld [vmem:[%s1672 + $0x38] sm:$0xf]
      %v1688 = vld [vmem:[%s1672 + $0x3c] sm:$0xf]
      %v1689 = vunpack.c.l.b16 %v1643
      %v1690 = vunpack.c.l.b16 %v1647
      %v1691 = vunpack.c.l.b16 %v1651
      %v1692 = vunpack.c.l.b16 %v1655
      %v1693 = vunpack.c.l.b16 %v1659
      %v1694 = vunpack.c.l.b16 %v1663
      %v1695 = vunpack.c.l.b16 %v1667
      %v1696 = vunpack.c.l.b16 %v1671
      %v1697 = vpack.c.b16 %v1690, %v1689
      %v1698 = vpack.c.b16 %v1692, %v1691
      %v1699 = vpack.c.b16 %v1694, %v1693
      %v1700 = vpack.c.b16 %v1696, %v1695
      %v1721 = vunpack.c.l.b16 %v1673
      %v1722 = vunpack.c.l.b16 %v1674
      %v1723 = vunpack.c.l.b16 %v1675
      %v1724 = vunpack.c.l.b16 %v1676
      %v1725 = vunpack.c.l.b16 %v1677
      %v1726 = vunpack.c.l.b16 %v1678
      %v1727 = vunpack.c.l.b16 %v1679
      %v1728 = vunpack.c.l.b16 %v1680
      %v1729 = vunpack.c.l.b16 %v1681
      %v1730 = vunpack.c.l.b16 %v1682
      %v1731 = vunpack.c.l.b16 %v1683
      %v1732 = vunpack.c.l.b16 %v1684
      %v1733 = vunpack.c.l.b16 %v1685
      %v1734 = vunpack.c.l.b16 %v1686
      %v1735 = vunpack.c.l.b16 %v1687
      %v1736 = vunpack.c.l.b16 %v1688
      %v1737 = vpack.c.b16 %v1722, %v1721
      %v1738 = vpack.c.b16 %v1724, %v1723
      %v1739 = vpack.c.b16 %v1726, %v1725
      %v1740 = vpack.c.b16 %v1728, %v1727
      %v1741 = vpack.c.b16 %v1730, %v1729
      %v1742 = vpack.c.b16 %v1732, %v1731
      %v1743 = vpack.c.b16 %v1734, %v1733
      %v1744 = vpack.c.b16 %v1736, %v1735
      %1753 = vmatprep.subr.bf16.mxu0 0
      %1754 = vmatpush1.bf16.msra.mxu0 %v1737
      %1755 = vmatprep.subr.bf16.mxu0 0
      %1756 = vmatpush1.bf16.msra.mxu0 %v1738
      %1757 = vmatprep.subr.bf16.mxu0 0
      %1758 = vmatpush1.bf16.msra.mxu0 %v1739
      %1759 = vmatprep.subr.bf16.mxu0 0
      %1760 = vmatpush1.bf16.msra.mxu0 %v1740
      %1761 = vmatprep.subr.bf16.mxu0 0
      %1762 = vmatpush1.bf16.msra.mxu0 %v1741
      %1763 = vmatprep.subr.bf16.mxu0 0
      %1764 = vmatpush1.bf16.msra.mxu0 %v1742
      %1765 = vmatprep.subr.bf16.mxu0 0
      %1766 = vmatpush1.bf16.msra.mxu0 %v1743
      %1767 = vmatprep.subr.bf16.mxu0 0
      %1768 = vmatpush1.bf16.msra.mxu0 %v1744
      %1769 = vmatprep.subr.bf16.mxu0 0
      %1770 = vmatpush1.bf16.msra.mxu0 0
      %1771 = vmatprep.subr.bf16.mxu0 0
      %1772 = vmatpush1.bf16.msra.mxu0 0
      %1773 = vmatprep.subr.bf16.mxu0 0
      %1774 = vmatpush1.bf16.msra.mxu0 0
      %1775 = vmatprep.subr.bf16.mxu0 0
      %1776 = vmatpush1.bf16.msra.mxu0 0
      %1777 = vmatprep.subr.bf16.mxu0 0
      %1778 = vmatpush1.bf16.msra.mxu0 0
      %1779 = vmatprep.subr.bf16.mxu0 0
      %1780 = vmatpush1.bf16.msra.mxu0 0
      %1781 = vmatprep.subr.bf16.mxu0 0
      %1782 = vmatpush1.bf16.msra.mxu0 0
      %1783 = vmatprep.subr.bf16.mxu0 0
      %1784 = vmatpush1.bf16.msra.mxu0 0
      %1785 = vmatprep.mubr.bf16.mxu0 0
      %1786 = vmatmul.mubr.bf16.gmra.mrb[0].mxu0 %v1697
      %v1787 = vpop.f32.mrb[0].mxu0
      %v1788 = vadd.f32 0.0, %v1787
      %v1789 = vpop.f32.mrb[0].mxu0
      %v1790 = vpop.f32.mrb[0].mxu0
      %v1791 = vadd.f32 0.0, %v1790
      %v1792 = vpop.f32.mrb[0].mxu0
      %1793 = vmatprep.mubr.bf16.mxu0 0
      %1794 = vmatmul.mubr.bf16.gmra.mrb[0].mxu0 %v1698
      %v1795 = vpop.f32.mrb[0].mxu0
      %v1796 = vadd.f32 0.0, %v1795
      %v1797 = vpop.f32.mrb[0].mxu0
      %v1798 = vpop.f32.mrb[0].mxu0
      %v1799 = vadd.f32 0.0, %v1798
      %v1800 = vpop.f32.mrb[0].mxu0
      %1801 = vmatprep.mubr.bf16.mxu0 0
      %1802 = vmatmul.mubr.bf16.gmra.mrb[0].mxu0 %v1699
      %v1803 = vpop.f32.mrb[0].mxu0
      %v1804 = vadd.f32 0.0, %v1803
      %v1805 = vpop.f32.mrb[0].mxu0
      %v1806 = vpop.f32.mrb[0].mxu0
      %v1807 = vadd.f32 0.0, %v1806
      %v1808 = vpop.f32.mrb[0].mxu0
      %1809 = vmatprep.mubr.bf16.mxu0 0
      %1810 = vmatmul.mubr.bf16.gmra.mrb[0].mxu0 %v1700
      %v1811 = vpop.f32.mrb[0].mxu0
      %v1812 = vadd.f32 0.0, %v1811
      %v1813 = vpop.f32.mrb[0].mxu0
      %v1814 = vpop.f32.mrb[0].mxu0
      %v1815 = vadd.f32 0.0, %v1814
      %v1816 = vpop.f32.mrb[0].mxu0
      %1817 = vdwg.mxu0
      %v1818 = vadd.f32 %v1608, %v1788
      %v1819 = vadd.f32 %v1609, %v1791
      %v1820 = vadd.f32 %v1610, %v1796
      %v1821 = vadd.f32 %v1611, %v1799
      %v1822 = vadd.f32 %v1612, %v1804
      %v1823 = vadd.f32 %v1613, %v1807
      %v1824 = vadd.f32 %v1614, %v1812
      %v1825 = vadd.f32 %v1615, %v1815
      %s1826 = sadd.s32 %s513, 2
      %s1827 = smul.u32 %s1826, 2
      %s1828 = smul.addr %s1827, 4
      %s1829 = scalar_lea.vmem [#allocation2], %s1828
      %v1830 = vld [vmem:[%s1829] sm:$0xf]
      %v1831 = vld [vmem:[%s1829 + $0x8] sm:$0xf]
      %v1832 = vld [vmem:[%s1829 + $0x10] sm:$0xf]
      %v1833 = vld [vmem:[%s1829 + $0x18] sm:$0xf]
      %v1834 = vld [vmem:[%s1829 + $0x20] sm:$0xf]
      %v1835 = vld [vmem:[%s1829 + $0x28] sm:$0xf]
      %v1836 = vld [vmem:[%s1829 + $0x30] sm:$0xf]
      %v1837 = vld [vmem:[%s1829 + $0x38] sm:$0xf]
      %s1838 = scalar_lea.vmem %s3, 384
      %v1839 = vld [vmem:[%s1838] sm:$0xf]
      %v1840 = vld [vmem:[%s1838 + $0x4] sm:$0xf]
      %v1841 = vld [vmem:[%s1838 + $0x8] sm:$0xf]
      %v1842 = vld [vmem:[%s1838 + $0xc] sm:$0xf]
      %v1843 = vld [vmem:[%s1838 + $0x10] sm:$0xf]
      %v1844 = vld [vmem:[%s1838 + $0x14] sm:$0xf]
      %v1845 = vld [vmem:[%s1838 + $0x18] sm:$0xf]
      %v1846 = vld [vmem:[%s1838 + $0x1c] sm:$0xf]
      %v1847 = vld [vmem:[%s1838 + $0x20] sm:$0xf]
      %v1848 = vld [vmem:[%s1838 + $0x24] sm:$0xf]
      %v1849 = vld [vmem:[%s1838 + $0x28] sm:$0xf]
      %v1850 = vld [vmem:[%s1838 + $0x2c] sm:$0xf]
      %v1851 = vld [vmem:[%s1838 + $0x30] sm:$0xf]
      %v1852 = vld [vmem:[%s1838 + $0x34] sm:$0xf]
      %v1853 = vld [vmem:[%s1838 + $0x38] sm:$0xf]
      %v1854 = vld [vmem:[%s1838 + $0x3c] sm:$0xf]
      %v1863 = vunpack.c.l.b16 %v1830
      %v1864 = vunpack.c.l.b16 %v1831
      %v1865 = vunpack.c.l.b16 %v1832
      %v1866 = vunpack.c.l.b16 %v1833
      %v1867 = vunpack.c.l.b16 %v1834
      %v1868 = vunpack.c.l.b16 %v1835
      %v1869 = vunpack.c.l.b16 %v1836
      %v1870 = vunpack.c.l.b16 %v1837
      %v1871 = vpack.c.b16 %v1864, %v1863
      %v1872 = vpack.c.b16 %v1866, %v1865
      %v1873 = vpack.c.b16 %v1868, %v1867
      %v1874 = vpack.c.b16 %v1870, %v1869
      %v1895 = vunpack.c.l.b16 %v1839
      %v1896 = vunpack.c.l.b16 %v1840
      %v1897 = vunpack.c.l.b16 %v1841
      %v1898 = vunpack.c.l.b16 %v1842
      %v1899 = vunpack.c.l.b16 %v1843
      %v1900 = vunpack.c.l.b16 %v1844
      %v1901 = vunpack.c.l.b16 %v1845
      %v1902 = vunpack.c.l.b16 %v1846
      %v1903 = vunpack.c.l.b16 %v1847
      %v1904 = vunpack.c.l.b16 %v1848
      %v1905 = vunpack.c.l.b16 %v1849
      %v1906 = vunpack.c.l.b16 %v1850
      %v1907 = vunpack.c.l.b16 %v1851
      %v1908 = vunpack.c.l.b16 %v1852
      %v1909 = vunpack.c.l.b16 %v1853
      %v1910 = vunpack.c.l.b16 %v1854
      %v1911 = vpack.c.b16 %v1896, %v1895
      %v1912 = vpack.c.b16 %v1898, %v1897
      %v1913 = vpack.c.b16 %v1900, %v1899
      %v1914 = vpack.c.b16 %v1902, %v1901
      %v1915 = vpack.c.b16 %v1904, %v1903
      %v1916 = vpack.c.b16 %v1906, %v1905
      %v1917 = vpack.c.b16 %v1908, %v1907
      %v1918 = vpack.c.b16 %v1910, %v1909
      %1927 = vmatprep.subr.bf16.mxu0 0
      %1928 = vmatpush1.bf16.msra.mxu0 %v1911
      %1929 = vmatprep.subr.bf16.mxu0 0
      %1930 = vmatpush1.bf16.msra.mxu0 %v1912
      %1931 = vmatprep.subr.bf16.mxu0 0
      %1932 = vmatpush1.bf16.msra.mxu0 %v1913
      %1933 = vmatprep.subr.bf16.mxu0 0
      %1934 = vmatpush1.bf16.msra.mxu0 %v1914
      %1935 = vmatprep.subr.bf16.mxu0 0
      %1936 = vmatpush1.bf16.msra.mxu0 %v1915
      %1937 = vmatprep.subr.bf16.mxu0 0
      %1938 = vmatpush1.bf16.msra.mxu0 %v1916
      %1939 = vmatprep.subr.bf16.mxu0 0
      %1940 = vmatpush1.bf16.msra.mxu0 %v1917
      %1941 = vmatprep.subr.bf16.mxu0 0
      %1942 = vmatpush1.bf16.msra.mxu0 %v1918
      %1943 = vmatprep.subr.bf16.mxu0 0
      %1944 = vmatpush1.bf16.msra.mxu0 0
      %1945 = vmatprep.subr.bf16.mxu0 0
      %1946 = vmatpush1.bf16.msra.mxu0 0
      %1947 = vmatprep.subr.bf16.mxu0 0
      %1948 = vmatpush1.bf16.msra.mxu0 0
      %1949 = vmatprep.subr.bf16.mxu0 0
      %1950 = vmatpush1.bf16.msra.mxu0 0
      %1951 = vmatprep.subr.bf16.mxu0 0
      %1952 = vmatpush1.bf16.msra.mxu0 0
      %1953 = vmatprep.subr.bf16.mxu0 0
      %1954 = vmatpush1.bf16.msra.mxu0 0
      %1955 = vmatprep.subr.bf16.mxu0 0
      %1956 = vmatpush1.bf16.msra.mxu0 0
      %1957 = vmatprep.subr.bf16.mxu0 0
      %1958 = vmatpush1.bf16.msra.mxu0 0
      %1959 = vmatprep.mubr.bf16.mxu0 0
      %1960 = vmatmul.mubr.bf16.gmra.mrb[0].mxu0 %v1871
      %v1961 = vpop.f32.mrb[0].mxu0
      %v1962 = vadd.f32 0.0, %v1961
      %v1963 = vpop.f32.mrb[0].mxu0
      %v1964 = vpop.f32.mrb[0].mxu0
      %v1965 = vadd.f32 0.0, %v1964
      %v1966 = vpop.f32.mrb[0].mxu0
      %1967 = vmatprep.mubr.bf16.mxu0 0
      %1968 = vmatmul.mubr.bf16.gmra.mrb[0].mxu0 %v1872
      %v1969 = vpop.f32.mrb[0].mxu0
      %v1970 = vadd.f32 0.0, %v1969
      %v1971 = vpop.f32.mrb[0].mxu0
      %v1972 = vpop.f32.mrb[0].mxu0
      %v1973 = vadd.f32 0.0, %v1972
      %v1974 = vpop.f32.mrb[0].mxu0
      %1975 = vmatprep.mubr.bf16.mxu0 0
      %1976 = vmatmul.mubr.bf16.gmra.mrb[0].mxu0 %v1873
      %v1977 = vpop.f32.mrb[0].mxu0
      %v1978 = vadd.f32 0.0, %v1977
      %v1979 = vpop.f32.mrb[0].mxu0
      %v1980 = vpop.f32.mrb[0].mxu0
      %v1981 = vadd.f32 0.0, %v1980
      %v1982 = vpop.f32.mrb[0].mxu0
      %1983 = vmatprep.mubr.bf16.mxu0 0
      %1984 = vmatmul.mubr.bf16.gmra.mrb[0].mxu0 %v1874
      %v1985 = vpop.f32.mrb[0].mxu0
      %v1986 = vadd.f32 0.0, %v1985
      %v1987 = vpop.f32.mrb[0].mxu0
      %v1988 = vpop.f32.mrb[0].mxu0
      %v1989 = vadd.f32 0.0, %v1988
      %v1990 = vpop.f32.mrb[0].mxu0
      %1991 = vdwg.mxu0
      %v1992 = vadd.f32 %v1818, %v1962
      %v1993 = vadd.f32 %v1819, %v1965
      %v1994 = vadd.f32 %v1820, %v1970
      %v1995 = vadd.f32 %v1821, %v1973
      %v1996 = vadd.f32 %v1822, %v1978
      %v1997 = vadd.f32 %v1823, %v1981
      %v1998 = vadd.f32 %v1824, %v1986
      %v1999 = vadd.f32 %v1825, %v1989
      %v2000 = vld [vmem:[%s1829] sm:$0xf]
      %v2001 = vld [vmem:[%s1829 + $0x4] sm:$0x1]
      %v2002 = vld [vmem:[%s1829 + $0x8] sm:$0xf]
      %v2003 = vld [vmem:[%s1829 + $0xc] sm:$0x1]
      %v2004 = vld [vmem:[%s1829 + $0x10] sm:$0xf]
      %v2005 = vld [vmem:[%s1829 + $0x14] sm:$0x1]
      %v2006 = vld [vmem:[%s1829 + $0x18] sm:$0xf]
      %v2007 = vld [vmem:[%s1829 + $0x1c] sm:$0x1]
      %v2008 = vld [vmem:[%s1829 + $0x20] sm:$0xf]
      %v2009 = vld [vmem:[%s1829 + $0x24] sm:$0x1]
      %v2010 = vld [vmem:[%s1829 + $0x28] sm:$0xf]
      %v2011 = vld [vmem:[%s1829 + $0x2c] sm:$0x1]
      %v2012 = vld [vmem:[%s1829 + $0x30] sm:$0xf]
      %v2013 = vld [vmem:[%s1829 + $0x34] sm:$0x1]
      %v2014 = vld [vmem:[%s1829 + $0x38] sm:$0xf]
      %v2015 = vld [vmem:[%s1829 + $0x3c] sm:$0x1]
      %v2017 = vshrl.u32 %v2000, 16
      %v2019 = vrot.slane %v2017, 4
      %v2020 = vshll.u32 %v2000, 16
      %v2022 = vrot.slane %v2020, 5
      %v2023 = vor.u32 %v2019, %v2022
      %v2024 = vrot.slane %v2023, 4
      %v2026 = vshll.u32 %v2001, 16
      %v2028 = vrot.slane %v2026, 5
      %v2029 = vsel %vm551, %v2024, %v2028
      %v2031 = vshrl.u32 %v2002, 16
      %v2033 = vrot.slane %v2031, 4
      %v2034 = vshll.u32 %v2002, 16
      %v2036 = vrot.slane %v2034, 5
      %v2037 = vor.u32 %v2033, %v2036
      %v2038 = vrot.slane %v2037, 4
      %v2040 = vshll.u32 %v2003, 16
      %v2042 = vrot.slane %v2040, 5
      %v2043 = vsel %vm551, %v2038, %v2042
      %v2045 = vshrl.u32 %v2004, 16
      %v2047 = vrot.slane %v2045, 4
      %v2048 = vshll.u32 %v2004, 16
      %v2050 = vrot.slane %v2048, 5
      %v2051 = vor.u32 %v2047, %v2050
      %v2052 = vrot.slane %v2051, 4
      %v2054 = vshll.u32 %v2005, 16
      %v2056 = vrot.slane %v2054, 5
      %v2057 = vsel %vm551, %v2052, %v2056
      %v2059 = vshrl.u32 %v2006, 16
      %v2061 = vrot.slane %v2059, 4
      %v2062 = vshll.u32 %v2006, 16
      %v2064 = vrot.slane %v2062, 5
      %v2065 = vor.u32 %v2061, %v2064
      %v2066 = vrot.slane %v2065, 4
      %v2068 = vshll.u32 %v2007, 16
      %v2070 = vrot.slane %v2068, 5
      %v2071 = vsel %vm551, %v2066, %v2070
      %v2073 = vshrl.u32 %v2008, 16
      %v2075 = vrot.slane %v2073, 4
      %v2076 = vshll.u32 %v2008, 16
      %v2078 = vrot.slane %v2076, 5
      %v2079 = vor.u32 %v2075, %v2078
      %v2080 = vrot.slane %v2079, 4
      %v2082 = vshll.u32 %v2009, 16
      %v2084 = vrot.slane %v2082, 5
      %v2085 = vsel %vm551, %v2080, %v2084
      %v2087 = vshrl.u32 %v2010, 16
      %v2089 = vrot.slane %v2087, 4
      %v2090 = vshll.u32 %v2010, 16
      %v2092 = vrot.slane %v2090, 5
      %v2093 = vor.u32 %v2089, %v2092
      %v2094 = vrot.slane %v2093, 4
      %v2096 = vshll.u32 %v2011, 16
      %v2098 = vrot.slane %v2096, 5
      %v2099 = vsel %vm551, %v2094, %v2098
      %v2101 = vshrl.u32 %v2012, 16
      %v2103 = vrot.slane %v2101, 4
      %v2104 = vshll.u32 %v2012, 16
      %v2106 = vrot.slane %v2104, 5
      %v2107 = vor.u32 %v2103, %v2106
      %v2108 = vrot.slane %v2107, 4
      %v2110 = vshll.u32 %v2013, 16
      %v2112 = vrot.slane %v2110, 5
      %v2113 = vsel %vm551, %v2108, %v2112
      %v2115 = vshrl.u32 %v2014, 16
      %v2117 = vrot.slane %v2115, 4
      %v2118 = vshll.u32 %v2014, 16
      %v2120 = vrot.slane %v2118, 5
      %v2121 = vor.u32 %v2117, %v2120
      %v2122 = vrot.slane %v2121, 4
      %v2124 = vshll.u32 %v2015, 16
      %v2126 = vrot.slane %v2124, 5
      %v2127 = vsel %vm551, %v2122, %v2126
      %s2128 = scalar_lea.vmem %s3, 448
      %v2129 = vld [vmem:[%s2128] sm:$0xf]
      %v2130 = vld [vmem:[%s2128 + $0x4] sm:$0xf]
      %v2131 = vld [vmem:[%s2128 + $0x8] sm:$0xf]
      %v2132 = vld [vmem:[%s2128 + $0xc] sm:$0xf]
      %v2133 = vld [vmem:[%s2128 + $0x10] sm:$0xf]
      %v2134 = vld [vmem:[%s2128 + $0x14] sm:$0xf]
      %v2135 = vld [vmem:[%s2128 + $0x18] sm:$0xf]
      %v2136 = vld [vmem:[%s2128 + $0x1c] sm:$0xf]
      %v2137 = vld [vmem:[%s2128 + $0x20] sm:$0xf]
      %v2138 = vld [vmem:[%s2128 + $0x24] sm:$0xf]
      %v2139 = vld [vmem:[%s2128 + $0x28] sm:$0xf]
      %v2140 = vld [vmem:[%s2128 + $0x2c] sm:$0xf]
      %v2141 = vld [vmem:[%s2128 + $0x30] sm:$0xf]
      %v2142 = vld [vmem:[%s2128 + $0x34] sm:$0xf]
      %v2143 = vld [vmem:[%s2128 + $0x38] sm:$0xf]
      %v2144 = vld [vmem:[%s2128 + $0x3c] sm:$0xf]
      %v2145 = vunpack.c.l.b16 %v2029
      %v2146 = vunpack.c.l.b16 %v2043
      %v2147 = vunpack.c.l.b16 %v2057
      %v2148 = vunpack.c.l.b16 %v2071
      %v2149 = vunpack.c.l.b16 %v2085
      %v2150 = vunpack.c.l.b16 %v2099
      %v2151 = vunpack.c.l.b16 %v2113
      %v2152 = vunpack.c.l.b16 %v2127
      %v2153 = vpack.c.b16 %v2146, %v2145
      %v2154 = vpack.c.b16 %v2148, %v2147
      %v2155 = vpack.c.b16 %v2150, %v2149
      %v2156 = vpack.c.b16 %v2152, %v2151
      %v2177 = vunpack.c.l.b16 %v2129
      %v2178 = vunpack.c.l.b16 %v2130
      %v2179 = vunpack.c.l.b16 %v2131
      %v2180 = vunpack.c.l.b16 %v2132
      %v2181 = vunpack.c.l.b16 %v2133
      %v2182 = vunpack.c.l.b16 %v2134
      %v2183 = vunpack.c.l.b16 %v2135
      %v2184 = vunpack.c.l.b16 %v2136
      %v2185 = vunpack.c.l.b16 %v2137
      %v2186 = vunpack.c.l.b16 %v2138
      %v2187 = vunpack.c.l.b16 %v2139
      %v2188 = vunpack.c.l.b16 %v2140
      %v2189 = vunpack.c.l.b16 %v2141
      %v2190 = vunpack.c.l.b16 %v2142
      %v2191 = vunpack.c.l.b16 %v2143
      %v2192 = vunpack.c.l.b16 %v2144
      %v2193 = vpack.c.b16 %v2178, %v2177
      %v2194 = vpack.c.b16 %v2180, %v2179
      %v2195 = vpack.c.b16 %v2182, %v2181
      %v2196 = vpack.c.b16 %v2184, %v2183
      %v2197 = vpack.c.b16 %v2186, %v2185
      %v2198 = vpack.c.b16 %v2188, %v2187
      %v2199 = vpack.c.b16 %v2190, %v2189
      %v2200 = vpack.c.b16 %v2192, %v2191
      %2209 = vmatprep.subr.bf16.mxu0 0
      %2210 = vmatpush1.bf16.msra.mxu0 %v2193
      %2211 = vmatprep.subr.bf16.mxu0 0
      %2212 = vmatpush1.bf16.msra.mxu0 %v2194
      %2213 = vmatprep.subr.bf16.mxu0 0
      %2214 = vmatpush1.bf16.msra.mxu0 %v2195
      %2215 = vmatprep.subr.bf16.mxu0 0
      %2216 = vmatpush1.bf16.msra.mxu0 %v2196
      %2217 = vmatprep.subr.bf16.mxu0 0
      %2218 = vmatpush1.bf16.msra.mxu0 %v2197
      %2219 = vmatprep.subr.bf16.mxu0 0
      %2220 = vmatpush1.bf16.msra.mxu0 %v2198
      %2221 = vmatprep.subr.bf16.mxu0 0
      %2222 = vmatpush1.bf16.msra.mxu0 %v2199
      %2223 = vmatprep.subr.bf16.mxu0 0
      %2224 = vmatpush1.bf16.msra.mxu0 %v2200
      %2225 = vmatprep.subr.bf16.mxu0 0
      %2226 = vmatpush1.bf16.msra.mxu0 0
      %2227 = vmatprep.subr.bf16.mxu0 0
      %2228 = vmatpush1.bf16.msra.mxu0 0
      %2229 = vmatprep.subr.bf16.mxu0 0
      %2230 = vmatpush1.bf16.msra.mxu0 0
      %2231 = vmatprep.subr.bf16.mxu0 0
      %2232 = vmatpush1.bf16.msra.mxu0 0
      %2233 = vmatprep.subr.bf16.mxu0 0
      %2234 = vmatpush1.bf16.msra.mxu0 0
      %2235 = vmatprep.subr.bf16.mxu0 0
      %2236 = vmatpush1.bf16.msra.mxu0 0
      %2237 = vmatprep.subr.bf16.mxu0 0
      %2238 = vmatpush1.bf16.msra.mxu0 0
      %2239 = vmatprep.subr.bf16.mxu0 0
      %2240 = vmatpush1.bf16.msra.mxu0 0
      %2241 = vmatprep.mubr.bf16.mxu0 0
      %2242 = vmatmul.mubr.bf16.gmra.mrb[0].mxu0 %v2153
      %v2243 = vpop.f32.mrb[0].mxu0
      %v2244 = vadd.f32 0.0, %v2243
      %v2245 = vpop.f32.mrb[0].mxu0
      %v2246 = vpop.f32.mrb[0].mxu0
      %v2247 = vadd.f32 0.0, %v2246
      %v2248 = vpop.f32.mrb[0].mxu0
      %2249 = vmatprep.mubr.bf16.mxu0 0
      %2250 = vmatmul.mubr.bf16.gmra.mrb[0].mxu0 %v2154
      %v2251 = vpop.f32.mrb[0].mxu0
      %v2252 = vadd.f32 0.0, %v2251
      %v2253 = vpop.f32.mrb[0].mxu0
      %v2254 = vpop.f32.mrb[0].mxu0
      %v2255 = vadd.f32 0.0, %v2254
      %v2256 = vpop.f32.mrb[0].mxu0
      %2257 = vmatprep.mubr.bf16.mxu0 0
      %2258 = vmatmul.mubr.bf16.gmra.mrb[0].mxu0 %v2155
      %v2259 = vpop.f32.mrb[0].mxu0
      %v2260 = vadd.f32 0.0, %v2259
      %v2261 = vpop.f32.mrb[0].mxu0
      %v2262 = vpop.f32.mrb[0].mxu0
      %v2263 = vadd.f32 0.0, %v2262
      %v2264 = vpop.f32.mrb[0].mxu0
      %2265 = vmatprep.mubr.bf16.mxu0 0
      %2266 = vmatmul.mubr.bf16.gmra.mrb[0].mxu0 %v2156
      %v2267 = vpop.f32.mrb[0].mxu0
      %v2268 = vadd.f32 0.0, %v2267
      %v2269 = vpop.f32.mrb[0].mxu0
      %v2270 = vpop.f32.mrb[0].mxu0
      %v2271 = vadd.f32 0.0, %v2270
      %v2272 = vpop.f32.mrb[0].mxu0
      %2273 = vdwg.mxu0
      %v2274 = vadd.f32 %v1992, %v2244
      %v2275 = vadd.f32 %v1993, %v2247
      %v2276 = vadd.f32 %v1994, %v2252
      %v2277 = vadd.f32 %v1995, %v2255
      %v2278 = vadd.f32 %v1996, %v2260
      %v2279 = vadd.f32 %v1997, %v2263
      %v2280 = vadd.f32 %v1998, %v2268
      %v2281 = vadd.f32 %v1999, %v2271
      %v2282 = vld [vmem:[%s1829] sm:$0xe]
      %v2283 = vld [vmem:[%s1829 + $0x8] sm:$0xe]
      %v2284 = vld [vmem:[%s1829 + $0x10] sm:$0xe]
      %v2285 = vld [vmem:[%s1829 + $0x18] sm:$0xe]
      %v2286 = vld [vmem:[%s1829 + $0x20] sm:$0xe]
      %v2287 = vld [vmem:[%s1829 + $0x28] sm:$0xe]
      %v2288 = vld [vmem:[%s1829 + $0x30] sm:$0xe]
      %v2289 = vld [vmem:[%s1829 + $0x38] sm:$0xe]
      %v2306 = vrot.slane %v2282, 5
      %v2307 = vrot.slane %v2306, 4
      %v2308 = vrot.slane %v2001, 5
      %v2309 = vsel %vm973, %v2307, %v2308
      %v2310 = vrot.slane %v2283, 5
      %v2311 = vrot.slane %v2310, 4
      %v2312 = vrot.slane %v2003, 5
      %v2313 = vsel %vm973, %v2311, %v2312
      %v2314 = vrot.slane %v2284, 5
      %v2315 = vrot.slane %v2314, 4
      %v2316 = vrot.slane %v2005, 5
      %v2317 = vsel %vm973, %v2315, %v2316
      %v2318 = vrot.slane %v2285, 5
      %v2319 = vrot.slane %v2318, 4
      %v2320 = vrot.slane %v2007, 5
      %v2321 = vsel %vm973, %v2319, %v2320
      %v2322 = vrot.slane %v2286, 5
      %v2323 = vrot.slane %v2322, 4
      %v2324 = vrot.slane %v2009, 5
      %v2325 = vsel %vm973, %v2323, %v2324
      %v2326 = vrot.slane %v2287, 5
      %v2327 = vrot.slane %v2326, 4
      %v2328 = vrot.slane %v2011, 5
      %v2329 = vsel %vm973, %v2327, %v2328
      %v2330 = vrot.slane %v2288, 5
      %v2331 = vrot.slane %v2330, 4
      %v2332 = vrot.slane %v2013, 5
      %v2333 = vsel %vm973, %v2331, %v2332
      %v2334 = vrot.slane %v2289, 5
      %v2335 = vrot.slane %v2334, 4
      %v2336 = vrot.slane %v2015, 5
      %v2337 = vsel %vm973, %v2335, %v2336
      %s2338 = scalar_lea.vmem %s3, 512
      %v2339 = vld [vmem:[%s2338] sm:$0xf]
      %v2340 = vld [vmem:[%s2338 + $0x4] sm:$0xf]
      %v2341 = vld [vmem:[%s2338 + $0x8] sm:$0xf]
      %v2342 = vld [vmem:[%s2338 + $0xc] sm:$0xf]
      %v2343 = vld [vmem:[%s2338 + $0x10] sm:$0xf]
      %v2344 = vld [vmem:[%s2338 + $0x14] sm:$0xf]
      %v2345 = vld [vmem:[%s2338 + $0x18] sm:$0xf]
      %v2346 = vld [vmem:[%s2338 + $0x1c] sm:$0xf]
      %v2347 = vld [vmem:[%s2338 + $0x20] sm:$0xf]
      %v2348 = vld [vmem:[%s2338 + $0x24] sm:$0xf]
      %v2349 = vld [vmem:[%s2338 + $0x28] sm:$0xf]
      %v2350 = vld [vmem:[%s2338 + $0x2c] sm:$0xf]
      %v2351 = vld [vmem:[%s2338 + $0x30] sm:$0xf]
      %v2352 = vld [vmem:[%s2338 + $0x34] sm:$0xf]
      %v2353 = vld [vmem:[%s2338 + $0x38] sm:$0xf]
      %v2354 = vld [vmem:[%s2338 + $0x3c] sm:$0xf]
      %v2355 = vunpack.c.l.b16 %v2309
      %v2356 = vunpack.c.l.b16 %v2313
      %v2357 = vunpack.c.l.b16 %v2317
      %v2358 = vunpack.c.l.b16 %v2321
      %v2359 = vunpack.c.l.b16 %v2325
      %v2360 = vunpack.c.l.b16 %v2329
      %v2361 = vunpack.c.l.b16 %v2333
      %v2362 = vunpack.c.l.b16 %v2337
      %v2363 = vpack.c.b16 %v2356, %v2355
      %v2364 = vpack.c.b16 %v2358, %v2357
      %v2365 = vpack.c.b16 %v2360, %v2359
      %v2366 = vpack.c.b16 %v2362, %v2361
      %v2387 = vunpack.c.l.b16 %v2339
      %v2388 = vunpack.c.l.b16 %v2340
      %v2389 = vunpack.c.l.b16 %v2341
      %v2390 = vunpack.c.l.b16 %v2342
      %v2391 = vunpack.c.l.b16 %v2343
      %v2392 = vunpack.c.l.b16 %v2344
      %v2393 = vunpack.c.l.b16 %v2345
      %v2394 = vunpack.c.l.b16 %v2346
      %v2395 = vunpack.c.l.b16 %v2347
      %v2396 = vunpack.c.l.b16 %v2348
      %v2397 = vunpack.c.l.b16 %v2349
      %v2398 = vunpack.c.l.b16 %v2350
      %v2399 = vunpack.c.l.b16 %v2351
      %v2400 = vunpack.c.l.b16 %v2352
      %v2401 = vunpack.c.l.b16 %v2353
      %v2402 = vunpack.c.l.b16 %v2354
      %v2403 = vpack.c.b16 %v2388, %v2387
      %v2404 = vpack.c.b16 %v2390, %v2389
      %v2405 = vpack.c.b16 %v2392, %v2391
      %v2406 = vpack.c.b16 %v2394, %v2393
      %v2407 = vpack.c.b16 %v2396, %v2395
      %v2408 = vpack.c.b16 %v2398, %v2397
      %v2409 = vpack.c.b16 %v2400, %v2399
      %v2410 = vpack.c.b16 %v2402, %v2401
      %2419 = vmatprep.subr.bf16.mxu0 0
      %2420 = vmatpush1.bf16.msra.mxu0 %v2403
      %2421 = vmatprep.subr.bf16.mxu0 0
      %2422 = vmatpush1.bf16.msra.mxu0 %v2404
      %2423 = vmatprep.subr.bf16.mxu0 0
      %2424 = vmatpush1.bf16.msra.mxu0 %v2405
      %2425 = vmatprep.subr.bf16.mxu0 0
      %2426 = vmatpush1.bf16.msra.mxu0 %v2406
      %2427 = vmatprep.subr.bf16.mxu0 0
      %2428 = vmatpush1.bf16.msra.mxu0 %v2407
      %2429 = vmatprep.subr.bf16.mxu0 0
      %2430 = vmatpush1.bf16.msra.mxu0 %v2408
      %2431 = vmatprep.subr.bf16.mxu0 0
      %2432 = vmatpush1.bf16.msra.mxu0 %v2409
      %2433 = vmatprep.subr.bf16.mxu0 0
      %2434 = vmatpush1.bf16.msra.mxu0 %v2410
      %2435 = vmatprep.subr.bf16.mxu0 0
      %2436 = vmatpush1.bf16.msra.mxu0 0
      %2437 = vmatprep.subr.bf16.mxu0 0
      %2438 = vmatpush1.bf16.msra.mxu0 0
      %2439 = vmatprep.subr.bf16.mxu0 0
      %2440 = vmatpush1.bf16.msra.mxu0 0
      %2441 = vmatprep.subr.bf16.mxu0 0
      %2442 = vmatpush1.bf16.msra.mxu0 0
      %2443 = vmatprep.subr.bf16.mxu0 0
      %2444 = vmatpush1.bf16.msra.mxu0 0
      %2445 = vmatprep.subr.bf16.mxu0 0
      %2446 = vmatpush1.bf16.msra.mxu0 0
      %2447 = vmatprep.subr.bf16.mxu0 0
      %2448 = vmatpush1.bf16.msra.mxu0 0
      %2449 = vmatprep.subr.bf16.mxu0 0
      %2450 = vmatpush1.bf16.msra.mxu0 0
      %2451 = vmatprep.mubr.bf16.mxu0 0
      %2452 = vmatmul.mubr.bf16.gmra.mrb[0].mxu0 %v2363
      %v2453 = vpop.f32.mrb[0].mxu0
      %v2454 = vadd.f32 0.0, %v2453
      %v2455 = vpop.f32.mrb[0].mxu0
      %v2456 = vpop.f32.mrb[0].mxu0
      %v2457 = vadd.f32 0.0, %v2456
      %v2458 = vpop.f32.mrb[0].mxu0
      %2459 = vmatprep.mubr.bf16.mxu0 0
      %2460 = vmatmul.mubr.bf16.gmra.mrb[0].mxu0 %v2364
      %v2461 = vpop.f32.mrb[0].mxu0
      %v2462 = vadd.f32 0.0, %v2461
      %v2463 = vpop.f32.mrb[0].mxu0
      %v2464 = vpop.f32.mrb[0].mxu0
      %v2465 = vadd.f32 0.0, %v2464
      %v2466 = vpop.f32.mrb[0].mxu0
      %2467 = vmatprep.mubr.bf16.mxu0 0
      %2468 = vmatmul.mubr.bf16.gmra.mrb[0].mxu0 %v2365
      %v2469 = vpop.f32.mrb[0].mxu0
      %v2470 = vadd.f32 0.0, %v2469
      %v2471 = vpop.f32.mrb[0].mxu0
      %v2472 = vpop.f32.mrb[0].mxu0
      %v2473 = vadd.f32 0.0, %v2472
      %v2474 = vpop.f32.mrb[0].mxu0
      %2475 = vmatprep.mubr.bf16.mxu0 0
      %2476 = vmatmul.mubr.bf16.gmra.mrb[0].mxu0 %v2366
      %v2477 = vpop.f32.mrb[0].mxu0
      %v2478 = vadd.f32 0.0, %v2477
      %v2479 = vpop.f32.mrb[0].mxu0
      %v2480 = vpop.f32.mrb[0].mxu0
      %v2481 = vadd.f32 0.0, %v2480
      %v2482 = vpop.f32.mrb[0].mxu0
      %2483 = vdwg.mxu0
      %v2484 = vadd.f32 %v2274, %v2454
      %v2485 = vadd.f32 %v2275, %v2457
      %v2486 = vadd.f32 %v2276, %v2462
      %v2487 = vadd.f32 %v2277, %v2465
      %v2488 = vadd.f32 %v2278, %v2470
      %v2489 = vadd.f32 %v2279, %v2473
      %v2490 = vadd.f32 %v2280, %v2478
      %v2491 = vadd.f32 %v2281, %v2481
      %v2492 = vpack.c.bf16 %v2484, %v2484
      %v2493 = vpack.c.bf16 %v2485, %v2485
      %v2494 = vpack.c.bf16 %v2486, %v2486
      %v2495 = vpack.c.bf16 %v2487, %v2487
      %v2496 = vpack.c.bf16 %v2488, %v2488
      %v2497 = vpack.c.bf16 %v2489, %v2489
      %v2498 = vpack.c.bf16 %v2490, %v2490
      %v2499 = vpack.c.bf16 %v2491, %v2491
      %2500 = vst [vmem:[%s258] sm:$0xf] %v2492
      %2501 = vst [vmem:[%s258 + $0x4] sm:$0xf] %v2493
      %2502 = vst [vmem:[%s258 + $0x8] sm:$0xf] %v2494
      %2503 = vst [vmem:[%s258 + $0xc] sm:$0xf] %v2495
      %2504 = vst [vmem:[%s258 + $0x10] sm:$0xf] %v2496
      %2505 = vst [vmem:[%s258 + $0x14] sm:$0xf] %v2497
      %2506 = vst [vmem:[%s258 + $0x18] sm:$0xf] %v2498
      %2507 = vst [vmem:[%s258 + $0x1c] sm:$0xf] %v2499
      %v2508 = vadd.f32 %v2484, %v2485
      %v2509 = vadd.f32 %v2508, %v2486
      %v2510 = vadd.f32 %v2509, %v2487
      %v2511 = vadd.f32 %v2510, %v2488
      %v2512 = vadd.f32 %v2511, %v2489
      %v2513 = vadd.f32 %v2512, %v2490
      %v2514 = vadd.f32 %v2513, %v2491
      %v2515 = vrot.slane %v2514, 4
      %v2516 = vadd.f32 %v2514, %v2515
      %v2517 = vrot.slane %v2516, 2
      %v2518 = vadd.f32 %v2516, %v2517
      %v2519 = vrot.slane %v2518, 1
      %v2520 = vadd.f32 %v2518, %v2519
      %2521 = vst [vmem:[%s266] sm:$0x1] %v2520
      %v2522 = vmul.f32 %v2484, %v2484
      %v2523 = vmul.f32 %v2485, %v2485
      %v2524 = vmul.f32 %v2486, %v2486
      %v2525 = vmul.f32 %v2487, %v2487
      %v2526 = vmul.f32 %v2488, %v2488
      %v2527 = vmul.f32 %v2489, %v2489
      %v2528 = vmul.f32 %v2490, %v2490
      %v2529 = vmul.f32 %v2491, %v2491
      %v2530 = vadd.f32 %v2522, %v2523
      %v2531 = vadd.f32 %v2530, %v2524
      %v2532 = vadd.f32 %v2531, %v2525
      %v2533 = vadd.f32 %v2532, %v2526
      %v2534 = vadd.f32 %v2533, %v2527
      %v2535 = vadd.f32 %v2534, %v2528
      %v2536 = vadd.f32 %v2535, %v2529
      %v2537 = vrot.slane %v2536, 4
      %v2538 = vadd.f32 %v2536, %v2537
      %v2539 = vrot.slane %v2538, 2
      %v2540 = vadd.f32 %v2538, %v2539
      %v2541 = vrot.slane %v2540, 1
      %v2542 = vadd.f32 %v2540, %v2541
      %2543 = vst [vmem:[%s266 + $0x1] sm:$0x1] %v2542
      %s2544 = smul.u32 8, %s22
      %p2545 = scmp.lt.s32.totalorder %s21, 1
      %s2546 = scalar_select %p2545, %s21, 1
      %p2547 = scmp.lt.s32.totalorder %s2544, 7
      %s2548 = scalar_select %p2547, %s2544, 7
      %s2549 = smul.addr %s2546, 8
      %s2550 = sadd.s32 %s2548, %s2549
      %s2551 = smul.addr %s2550, 4
      %s2552 = scalar_lea.vmem %s4, %s2551
      %p2553 = scmp.lt.s32.totalorder %s21, 1
      %s2554 = scalar_select %p2553, %s21, 1
      %p2555 = scmp.lt.s32.totalorder %s22, 0
      %s2556 = scalar_select %p2555, %s22, 0
      %s2557 = sadd.s32 %s2556, %s2554
      %s2558 = smul.addr %s2557, 2
      %s2559 = scalar_lea.vmem %s5, %s2558
      // Predicated region
      $region41: #{residual_forward.4} parent=35 // pred_check
        %p2560 = pneg %p138
      $region42: #{residual_forward.4} parent=35 // pred_check_branch
        %2562 = sbr.rel (%p2560) target = $region44
      $region43: #{residual_forward.4} parent=35 // pred_region
        %s2563 = smul.u32 8, %s22
      $region44: #{residual_forward.4} parent=35 // pred_fallthru
        _
      // Predicated region
      $region45: #{residual_forward.4} parent=35 // pred_check
        %p2564 = pneg %p166
      $region46: #{residual_forward.4} parent=35 // pred_check_branch
        %2566 = sbr.rel (%p2564) target = $region48
      $region47: #{residual_forward.4} parent=35 // pred_region
        _
      $region48: #{residual_forward.4} parent=35 // pred_fallthru
        _
    $region36: #{residual_forward.4} parent=5 // pred_fallthru
      _
    %p2567 = scmp.le.s32.totalorder 2, %s12
    // Predicated region
    $region49: #{residual_forward.4} parent=5 // pred_check
      %p2568 = pneg %p2567
    $region50: #{residual_forward.4} parent=5 // pred_check_branch
      %2570 = sbr.rel (%p2568) target = $region52
    $region51: #{residual_forward.4} parent=5 // pred_region
      %s2571 = ssub.s32 %s12, 2
      // Predicated region
      $region53: #{residual_forward.4} parent=51 // pred_check
        %p2572 = pneg %p144
      $region54: #{residual_forward.4} parent=51 // pred_check_branch
        %2574 = sbr.rel (%p2572) target = $region56
      $region55: #{residual_forward.4} parent=51 // pred_region
        %s2575 = smul.u32 8, %s24
        %p2576 = scmp.lt.s32.totalorder %s23, 1
        %s2577 = scalar_select %p2576, %s23, 1
        %p2578 = scmp.lt.s32.totalorder %s2575, 7
        %s2579 = scalar_select %p2578, %s2575, 7
        %s2580 = smul.addr %s2577, 8
        %s2581 = sadd.s32 %s2579, %s2580
        %s2582 = smul.addr %s2581, 4
        %s2583 = scalar_lea.vmem %s4, %s2582
      $region56: #{residual_forward.4} parent=51 // pred_fallthru
        _
      // Predicated region
      $region57: #{residual_forward.4} parent=51 // pred_check
        %p2584 = pneg %p172
      $region58: #{residual_forward.4} parent=51 // pred_check_branch
        %2586 = sbr.rel (%p2584) target = $region60
      $region59: #{residual_forward.4} parent=51 // pred_region
        %p2587 = scmp.lt.s32.totalorder %s23, 1
        %s2588 = scalar_select %p2587, %s23, 1
        %p2589 = scmp.lt.s32.totalorder %s24, 0
        %s2590 = scalar_select %p2589, %s24, 0
        %s2591 = sadd.s32 %s2590, %s2588
        %s2592 = smul.addr %s2591, 2
        %s2593 = scalar_lea.vmem %s5, %s2592
      $region60: #{residual_forward.4} parent=51 // pred_fallthru
        _
    $region52: #{residual_forward.4} parent=5 // pred_fallthru
      _
  $region6: #{residual_forward.4} parent=0 // loop_footer
    %s16 = sadd.s32 1, %s12
  $region7: #{residual_forward.4} parent=0 // loop_footer_branch
    %11 = sbr.rel target = $region3
  $region8: #{residual_forward.4} parent=0 // loop_exit
    _

</llo_original>
